<compile_context>
chip_gen: v7x
topology: tpu7x:2x2x1
jax: 0.10.0
libtpu: 0.0.40
codegen_flags: <defaults>
</compile_context>

<pallas_src>
import jax
import jax.numpy as jnp
from jax import lax
from jax.experimental import pallas as pl
from jax.experimental.pallas import tpu as pltpu

# ---------------- model hyper-parameters (downsized, consistent with the module) ----
HIDDEN = 32        # hidden_size   (PyTorch default was 200)
PROJ = 16          # proj_size     (PyTorch default was 100)
VOCAB = 64         # output_vocab  (PyTorch default was 300)
VOCAB_PAD = 128    # lane-dense output padding (sliced back in the wrapper)
NUM_LAYERS = 3
IN_PAD = 8         # layer-0 input feature (=1) zero-padded to 8 (layout only)


# ---------------- single fused kernel: 3 LSTM layers + head ---------------------
def _build_fused_kernel(T, BB):
    """T = timesteps, BB = batch block (multiple of 8). Both static."""
    H = HIDDEN
    bf16 = jnp.bfloat16

    def kernel(x_ref,
               w0_ref, b0_ref, whz0_ref,
               wiz1_ref, whz1_ref, bl1_ref,
               wiz2_ref, whz2_ref, bl2_ref,
               hw1_ref, hb1_ref, hw2_ref, hb2_ref, hw3_ref, hb3_ref,
               o_ref):
        # Hoist all weight loads out of the unrolled loops.
        w0 = w0_ref[...]                                        # (1, 4H) f32 (VPU path)
        b0 = b0_ref[...]                                        # (1, 4H) f32
        whz = [whz0_ref[...], whz1_ref[...], whz2_ref[...]]     # (H, 4H) bf16 (W_hr folded)
        wiz = [None, wiz1_ref[...], wiz2_ref[...]]              # (H, 4H) bf16 (W_hr folded)
        bl = [None, bl1_ref[...], bl2_ref[...]]                 # (1, 4H) f32

        def cell(pre, z_prev, c_prev, w_rec):
            # One LSTM(+proj) step; the only dependent MXU matmul on the chain.
            g = pre + jnp.dot(z_prev.astype(bf16), w_rec,
                              preferred_element_type=jnp.float32)   # (BB, 4H) = one vreg
            # Two full-width EUP ops instead of four 32-lane ones.
            sg = jax.nn.sigmoid(g)
            th = jnp.tanh(g)
            i = sg[:, 0 * H:1 * H]
            f = sg[:, 1 * H:2 * H]
            gg = th[:, 2 * H:3 * H]
            o = sg[:, 3 * H:4 * H]
            c = f * c_prev + i * gg
            z = o * jnp.tanh(c)          # pre-projection state; W_hr lives in the
            return z, c                  # folded weights of the consumers.

        # Fully unrolled (T=8, L=3 small & static).  Each (layer, t) cell depends
        # only on (layer, t-1) and (layer-1, t) -> dependence chain T+L-1 steps.
        below = None
        for l in range(NUM_LAYERS):
            z = jnp.zeros((BB, H), jnp.float32)
            c = jnp.zeros((BB, H), jnp.float32)
            outs = []
            for t in range(T):
                if l == 0:
                    # rank-1 input (real dim = 1): VPU broadcast, no MXU.
                    x_t = x_ref[t]                               # (BB, IN_PAD)
                    pre = x_t[:, 0:1] * w0 + b0                  # (BB, 4H)
                else:
                    pre = jnp.dot(below[t].astype(bf16), wiz[l],
                                  preferred_element_type=jnp.float32) + bl[l]
                z, c = cell(pre, z, c, whz[l])
                outs.append(z)
            below = outs
            # TODO(synk): inter-layer dropout(p=0.1) omitted — identity in eval mode.

        # Head on the stacked (T*BB, H) slab (off the recurrent critical path).
        y = jnp.concatenate(below, axis=0)                       # (T*BB, H) f32
        h1 = jnp.dot(y.astype(bf16), hw1_ref[...],
                     preferred_element_type=jnp.float32) + hb1_ref[...]
        h1 = h1 * jax.nn.sigmoid(h1)
        h2 = jnp.dot(h1.astype(bf16), hw2_ref[...],
                     preferred_element_type=jnp.float32) + hb2_ref[...]
        h2 = h2 * jax.nn.sigmoid(h2)
        logits = jnp.dot(h2.astype(bf16), hw3_ref[...],
                         preferred_element_type=jnp.float32) + hb3_ref[...]  # (T*BB, 128)
        # Mask padded vocab lanes so they contribute nothing to the softmax.
        lane = lax.broadcasted_iota(jnp.int32, logits.shape, 1)
        logits = jnp.where(lane < VOCAB, logits, jnp.float32(-1e30))
        m = jnp.max(logits, axis=-1, keepdims=True)
        e = jnp.exp(logits - m)
        s = jnp.sum(e, axis=-1, keepdims=True)
        probs = e / s                                            # exact divide (one-shot)
        o_ref[...] = probs.reshape(T, BB, VOCAB_PAD).astype(o_ref.dtype)

    return kernel


# ---------------- deterministic parameter construction (PyTorch-style) ----------
def make_params(key):
    params = {"lstm": [], "head": {}}
    k = 1.0 / jnp.sqrt(jnp.float32(HIDDEN))

    def uni(key, shape, bound):
        return jax.random.uniform(key, shape, jnp.float32, -bound, bound)

    keys = jax.random.split(key, NUM_LAYERS * 5 + 6)
    ki = 0
    for layer in range(NUM_LAYERS):
        d_in = 1 if layer == 0 else PROJ
        # PyTorch shapes: w_ih (4H, Din), w_hh (4H, P), w_hr (P, H), biases (4H,)
        w_ih = uni(keys[ki], (4 * HIDDEN, d_in), k); ki += 1
        w_hh = uni(keys[ki], (4 * HIDDEN, PROJ), k); ki += 1
        w_hr = uni(keys[ki], (PROJ, HIDDEN), k); ki += 1
        b_ih = uni(keys[ki], (4 * HIDDEN,), k); ki += 1
        b_hh = uni(keys[ki], (4 * HIDDEN,), k); ki += 1
        params["lstm"].append({
            "w_ih_t": w_ih.T,                     # (Din, 4H)
            "w_hh_t": w_hh.T,                     # (P, 4H)
            "w_hr_t": w_hr.T,                     # (H, P)
            "b": (b_ih + b_hh)[None, :],          # (1, 4H)
        })

    kb1 = 1.0 / jnp.sqrt(jnp.float32(PROJ))
    kb2 = 1.0 / jnp.sqrt(jnp.float32(HIDDEN))
    params["head"] = {
        "w1": uni(keys[ki + 0], (PROJ, HIDDEN), kb1),   # (in, out)
        "b1": uni(keys[ki + 1], (1, HIDDEN), kb1),
        "w2": uni(keys[ki + 2], (HIDDEN, HIDDEN), kb2),
        "b2": uni(keys[ki + 3], (1, HIDDEN), kb2),
        "w3": uni(keys[ki + 4], (HIDDEN, VOCAB), kb2),
        "b3": uni(keys[ki + 5], (1, VOCAB), kb2),
    }
    return params


# ---------------- fold W_hr into adjacent matmuls & prep kernel weight layout ----
def fold_params(params):
    bf16 = jnp.bfloat16
    ls, hp = params["lstm"], params["head"]
    f = {}
    # Layer 0: real input dim = 1 -> (1, 4H) row vector for the VPU broadcast (f32).
    f["w0"] = ls[0]["w_ih_t"]                                     # (1, 4H)
    f["b0"] = ls[0]["b"]                                          # (1, 4H)
    # Recurrent weights: z_{t-1} @ (W_hr_t @ W_hh_t)
    for l in range(NUM_LAYERS):
        f[f"whz{l}"] = (ls[l]["w_hr_t"] @ ls[l]["w_hh_t"]).astype(bf16)       # (H, 4H)
    # Inter-layer input weights: z^{l-1}_t @ (W_hr_t^{l-1} @ W_ih_t^{l})
    for l in range(1, NUM_LAYERS):
        f[f"wiz{l}"] = (ls[l - 1]["w_hr_t"] @ ls[l]["w_ih_t"]).astype(bf16)   # (H, 4H)
        f[f"bl{l}"] = ls[l]["b"]
    # Head: first Linear absorbs the last layer's W_hr.
    f["hw1"] = (ls[-1]["w_hr_t"] @ hp["w1"]).astype(bf16)                     # (H, HIDDEN)
    f["hb1"] = hp["b1"]
    f["hw2"] = hp["w2"].astype(bf16)
    f["hb2"] = hp["b2"]
    f["hw3"] = jnp.pad(hp["w3"], ((0, 0), (0, VOCAB_PAD - VOCAB))).astype(bf16)
    f["hb3"] = jnp.pad(hp["b3"], ((0, 0), (0, VOCAB_PAD - VOCAB)))
    return f


# ---------------- full forward pass ---------------------------------------------
@jax.jit
def rnn_forward(x, folded):
    # x: (B, T, 1) float32  (batch_first, like PyTorch after `input[:, None]`)
    B, T, F = x.shape
    Bp = max(8, ((B + 7) // 8) * 8)
    BB = Bp if Bp <= 128 else 128              # batch block; fits any VMEM budget
    Bp = ((Bp + BB - 1) // BB) * BB
    xt = jnp.transpose(x, (1, 0, 2))                                  # (T, B, F)
    xt = jnp.pad(xt, ((0, 0), (0, Bp - B), (0, IN_PAD - F)))          # (T, Bp, IN_PAD)

    args = [xt,
            folded["w0"], folded["b0"], folded["whz0"],
            folded["wiz1"], folded["whz1"], folded["bl1"],
            folded["wiz2"], folded["whz2"], folded["bl2"],
            folded["hw1"], folded["hb1"], folded["hw2"], folded["hb2"],
            folded["hw3"], folded["hb3"]]

    def const_spec(a):  # whole-array, constant index map -> stays VMEM-resident
        return pl.BlockSpec(a.shape, lambda b, _n=a.ndim: (0,) * _n)

    in_specs = [pl.BlockSpec((T, BB, IN_PAD), lambda b: (0, b, 0))] + \
               [const_spec(a) for a in args[1:]]

    probs_pad = pl.pallas_call(
        _build_fused_kernel(T, BB),
        out_shape=jax.ShapeDtypeStruct((T, Bp, VOCAB_PAD), jnp.float32),
        grid=(Bp // BB,),
        in_specs=in_specs,
        out_specs=pl.BlockSpec((T, BB, VOCAB_PAD), lambda b: (0, b, 0)),
        compiler_params=pltpu.CompilerParams(
            dimension_semantics=("parallel",)),        # batch grid -> 2nd TC on v7x
    )(*args)

    probs = probs_pad[:, :B, :VOCAB]
    return jnp.transpose(probs, (1, 0, 2))                            # (B, T, VOCAB)


# ---------------- pure-JAX reference (unfolded weights; validates the folding) ---
def rnn_reference(x, params):
    B, T, F = x.shape
    h_seq = x                                                          # (B, T, 1)
    for l in range(NUM_LAYERS):
        p = params["lstm"][l]

        def step(carry, x_t, p=p):
            h, c = carry
            g = x_t @ p["w_ih_t"] + h @ p["w_hh_t"] + p["b"]
            i = jax.nn.sigmoid(g[:, 0 * HIDDEN:1 * HIDDEN])
            f = jax.nn.sigmoid(g[:, 1 * HIDDEN:2 * HIDDEN])
            gg = jnp.tanh(g[:, 2 * HIDDEN:3 * HIDDEN])
            o = jax.nn.sigmoid(g[:, 3 * HIDDEN:4 * HIDDEN])
            c = f * c + i * gg
            h = (o * jnp.tanh(c)) @ p["w_hr_t"]
            return (h, c), h

        init = (jnp.zeros((B, PROJ), jnp.float32), jnp.zeros((B, HIDDEN), jnp.float32))
        _, ys = lax.scan(step, init, jnp.transpose(h_seq, (1, 0, 2)))
        h_seq = jnp.transpose(ys, (1, 0, 2))                           # (B, T, PROJ)
    hp = params["head"]
    z = h_seq.reshape(B * T, PROJ)
    h1 = z @ hp["w1"] + hp["b1"]
    h1 = h1 * jax.nn.sigmoid(h1)
    h2 = h1 @ hp["w2"] + hp["b2"]
    h2 = h2 * jax.nn.sigmoid(h2)
    logits = h2 @ hp["w3"] + hp["b3"]
    probs = jax.nn.softmax(logits, axis=-1)
    return probs.reshape(B, T, VOCAB)


if __name__ == "__main__":
    key = jax.random.PRNGKey(0)
    k_param, k_x = jax.random.split(key)
    params = make_params(k_param)
    folded = fold_params(params)

    B, T = 2, 8
    x = jax.random.normal(k_x, (B, T, 1), jnp.float32)

    out = jax.block_until_ready(rnn_forward(x, folded))

    assert out.shape == (B, T, VOCAB)
    assert bool(jnp.all(jnp.isfinite(out)))
    row_sums = jnp.sum(out, axis=-1)
    assert bool(jnp.allclose(row_sums, 1.0, atol=1e-3))    # exact softmax normalization

    ref = rnn_reference(x, params)                         # f32, unfolded weights
    assert bool(jnp.allclose(out, ref, atol=2e-2, rtol=5e-2))   # bf16 MXU operands
    print("KERNEL_OK")
</pallas_src>

<mosaic_0001>
module attributes {stable_mosaic.version = 11 : i64} {
  func.func @kernel(%arg0: i32, %arg1: memref<8x8x8xf32, #tpu.memory_space<vmem>>, %arg2: memref<1x128xf32, #tpu.memory_space<vmem>>, %arg3: memref<1x128xf32, #tpu.memory_space<vmem>>, %arg4: memref<32x128xbf16, #tpu.memory_space<vmem>>, %arg5: memref<32x128xbf16, #tpu.memory_space<vmem>>, %arg6: memref<32x128xbf16, #tpu.memory_space<vmem>>, %arg7: memref<1x128xf32, #tpu.memory_space<vmem>>, %arg8: memref<32x128xbf16, #tpu.memory_space<vmem>>, %arg9: memref<32x128xbf16, #tpu.memory_space<vmem>>, %arg10: memref<1x128xf32, #tpu.memory_space<vmem>>, %arg11: memref<32x32xbf16, #tpu.memory_space<vmem>>, %arg12: memref<1x32xf32, #tpu.memory_space<vmem>>, %arg13: memref<32x32xbf16, #tpu.memory_space<vmem>>, %arg14: memref<1x32xf32, #tpu.memory_space<vmem>>, %arg15: memref<32x128xbf16, #tpu.memory_space<vmem>>, %arg16: memref<1x128xf32, #tpu.memory_space<vmem>>, %arg17: memref<8x8x128xf32, #tpu.memory_space<vmem>>) attributes {dimension_semantics = [#tpu.dimension_semantics<parallel>], iteration_bounds = array<i64: 1>, scalar_prefetch = 0 : i64, scratch_operands = 0 : i64, tpu.core_type = #tpu.core_type<tc>, window_params = [{transform_indices = @transform_0, window_bounds = array<i64: 8, 8, 8>}, {pipeline_mode = #tpu.pipeline_mode<synchronous>, transform_indices = @transform_1, window_bounds = array<i64: 1, 128>}, {pipeline_mode = #tpu.pipeline_mode<synchronous>, transform_indices = @transform_2, window_bounds = array<i64: 1, 128>}, {pipeline_mode = #tpu.pipeline_mode<synchronous>, transform_indices = @transform_3, window_bounds = array<i64: 32, 128>}, {pipeline_mode = #tpu.pipeline_mode<synchronous>, transform_indices = @transform_4, window_bounds = array<i64: 32, 128>}, {pipeline_mode = #tpu.pipeline_mode<synchronous>, transform_indices = @transform_5, window_bounds = array<i64: 32, 128>}, {pipeline_mode = #tpu.pipeline_mode<synchronous>, transform_indices = @transform_6, window_bounds = array<i64: 1, 128>}, {pipeline_mode = #tpu.pipeline_mode<synchronous>, transform_indices = @transform_7, window_bounds = array<i64: 32, 128>}, {pipeline_mode = #tpu.pipeline_mode<synchronous>, transform_indices = @transform_8, window_bounds = array<i64: 32, 128>}, {pipeline_mode = #tpu.pipeline_mode<synchronous>, transform_indices = @transform_9, window_bounds = array<i64: 1, 128>}, {pipeline_mode = #tpu.pipeline_mode<synchronous>, transform_indices = @transform_10, window_bounds = array<i64: 32, 32>}, {pipeline_mode = #tpu.pipeline_mode<synchronous>, transform_indices = @transform_11, window_bounds = array<i64: 1, 32>}, {pipeline_mode = #tpu.pipeline_mode<synchronous>, transform_indices = @transform_12, window_bounds = array<i64: 32, 32>}, {pipeline_mode = #tpu.pipeline_mode<synchronous>, transform_indices = @transform_13, window_bounds = array<i64: 1, 32>}, {pipeline_mode = #tpu.pipeline_mode<synchronous>, transform_indices = @transform_14, window_bounds = array<i64: 32, 128>}, {pipeline_mode = #tpu.pipeline_mode<synchronous>, transform_indices = @transform_15, window_bounds = array<i64: 1, 128>}, {transform_indices = @transform_16, window_bounds = array<i64: 8, 8, 128>}]} {
    %c0 = arith.constant 0 : index
    %c0_0 = arith.constant 0 : index
    %0 = vector.load %arg2[%c0, %c0_0] : memref<1x128xf32, #tpu.memory_space<vmem>>, vector<1x128xf32>
    %c0_1 = arith.constant 0 : index
    %c0_2 = arith.constant 0 : index
    %1 = vector.load %arg3[%c0_1, %c0_2] : memref<1x128xf32, #tpu.memory_space<vmem>>, vector<1x128xf32>
    %c0_3 = arith.constant 0 : index
    %c0_4 = arith.constant 0 : index
    %2 = vector.load %arg4[%c0_3, %c0_4] : memref<32x128xbf16, #tpu.memory_space<vmem>>, vector<32x128xbf16>
    %c0_5 = arith.constant 0 : index
    %c0_6 = arith.constant 0 : index
    %3 = vector.load %arg6[%c0_5, %c0_6] : memref<32x128xbf16, #tpu.memory_space<vmem>>, vector<32x128xbf16>
    %c0_7 = arith.constant 0 : index
    %c0_8 = arith.constant 0 : index
    %4 = vector.load %arg9[%c0_7, %c0_8] : memref<32x128xbf16, #tpu.memory_space<vmem>>, vector<32x128xbf16>
    %c0_9 = arith.constant 0 : index
    %c0_10 = arith.constant 0 : index
    %5 = vector.load %arg5[%c0_9, %c0_10] : memref<32x128xbf16, #tpu.memory_space<vmem>>, vector<32x128xbf16>
    %c0_11 = arith.constant 0 : index
    %c0_12 = arith.constant 0 : index
    %6 = vector.load %arg8[%c0_11, %c0_12] : memref<32x128xbf16, #tpu.memory_space<vmem>>, vector<32x128xbf16>
    %c0_13 = arith.constant 0 : index
    %c0_14 = arith.constant 0 : index
    %7 = vector.load %arg7[%c0_13, %c0_14] : memref<1x128xf32, #tpu.memory_space<vmem>>, vector<1x128xf32>
    %c0_15 = arith.constant 0 : index
    %c0_16 = arith.constant 0 : index
    %8 = vector.load %arg10[%c0_15, %c0_16] : memref<1x128xf32, #tpu.memory_space<vmem>>, vector<1x128xf32>
    %cst = arith.constant 0.000000e+00 : f32
    %9 = vector.broadcast %cst : f32 to vector<8x32xf32>
    %cst_17 = arith.constant 0.000000e+00 : f32
    %10 = vector.broadcast %cst_17 : f32 to vector<8x32xf32>
    %c0_18 = arith.constant 0 : index
    %c0_19 = arith.constant 0 : index
    %c0_20 = arith.constant 0 : index
    %11 = vector.load %arg1[%c0_18, %c0_19, %c0_20] : memref<8x8x8xf32, #tpu.memory_space<vmem>>, vector<1x8x8xf32>
    %12 = vector.shape_cast %11 : vector<1x8x8xf32> to vector<8x8xf32>
    %13 = vector.extract_strided_slice %12 {offsets = [0, 0], sizes = [8, 1], strides = [1, 1]} : vector<8x8xf32> to vector<8x1xf32>
    %14 = vector.broadcast %13 : vector<8x1xf32> to vector<8x128xf32>
    %15 = vector.broadcast %0 : vector<1x128xf32> to vector<8x128xf32>
    %16 = arith.mulf %14, %15 : vector<8x128xf32>
    %17 = vector.broadcast %1 : vector<1x128xf32> to vector<8x128xf32>
    %18 = arith.addf %16, %17 : vector<8x128xf32>
    %19 = arith.truncf %9 : vector<8x32xf32> to vector<8x32xbf16>
    %cst_21 = arith.constant dense<0.000000e+00> : vector<8x128xf32>
    %20 = tpu.matmul %19, %2, %cst_21 {dimension_numbers = #tpu.dot_dimension_numbers<[1], [0], [0], [1], [0, 0, 1, 1], [], []>} : vector<8x32xbf16>, vector<32x128xbf16>, vector<8x128xf32> -> vector<8x128xf32>
    %21 = arith.addf %18, %20 : vector<8x128xf32>
    %22 = arith.negf %21 : vector<8x128xf32>
    %23 = math.exp %22 : vector<8x128xf32>
    %cst_22 = arith.constant 1.000000e+00 : f32
    %24 = vector.broadcast %cst_22 : f32 to vector<8x128xf32>
    %25 = arith.addf %24, %23 : vector<8x128xf32>
    %26 = arith.divf %24, %25 : vector<8x128xf32>
    %27 = math.tanh %21 : vector<8x128xf32>
    %28 = vector.extract_strided_slice %26 {offsets = [0, 0], sizes = [8, 32], strides = [1, 1]} : vector<8x128xf32> to vector<8x32xf32>
    %29 = vector.extract_strided_slice %26 {offsets = [0, 32], sizes = [8, 32], strides = [1, 1]} : vector<8x128xf32> to vector<8x32xf32>
    %30 = vector.extract_strided_slice %27 {offsets = [0, 64], sizes = [8, 32], strides = [1, 1]} : vector<8x128xf32> to vector<8x32xf32>
    %31 = vector.extract_strided_slice %26 {offsets = [0, 96], sizes = [8, 32], strides = [1, 1]} : vector<8x128xf32> to vector<8x32xf32>
    %32 = arith.mulf %29, %10 : vector<8x32xf32>
    %33 = arith.mulf %28, %30 : vector<8x32xf32>
    %34 = arith.addf %32, %33 : vector<8x32xf32>
    %35 = math.tanh %34 : vector<8x32xf32>
    %36 = arith.mulf %31, %35 : vector<8x32xf32>
    %c1 = arith.constant 1 : index
    %c0_23 = arith.constant 0 : index
    %c0_24 = arith.constant 0 : index
    %37 = vector.load %arg1[%c1, %c0_23, %c0_24] : memref<8x8x8xf32, #tpu.memory_space<vmem>>, vector<1x8x8xf32>
    %38 = vector.shape_cast %37 : vector<1x8x8xf32> to vector<8x8xf32>
    %39 = vector.extract_strided_slice %38 {offsets = [0, 0], sizes = [8, 1], strides = [1, 1]} : vector<8x8xf32> to vector<8x1xf32>
    %40 = vector.broadcast %39 : vector<8x1xf32> to vector<8x128xf32>
    %41 = vector.broadcast %0 : vector<1x128xf32> to vector<8x128xf32>
    %42 = arith.mulf %40, %41 : vector<8x128xf32>
    %43 = vector.broadcast %1 : vector<1x128xf32> to vector<8x128xf32>
    %44 = arith.addf %42, %43 : vector<8x128xf32>
    %45 = arith.truncf %36 : vector<8x32xf32> to vector<8x32xbf16>
    %cst_25 = arith.constant dense<0.000000e+00> : vector<8x128xf32>
    %46 = tpu.matmul %45, %2, %cst_25 {dimension_numbers = #tpu.dot_dimension_numbers<[1], [0], [0], [1], [0, 0, 1, 1], [], []>} : vector<8x32xbf16>, vector<32x128xbf16>, vector<8x128xf32> -> vector<8x128xf32>
    %47 = arith.addf %44, %46 : vector<8x128xf32>
    %48 = arith.negf %47 : vector<8x128xf32>
    %49 = math.exp %48 : vector<8x128xf32>
    %cst_26 = arith.constant 1.000000e+00 : f32
    %50 = vector.broadcast %cst_26 : f32 to vector<8x128xf32>
    %51 = arith.addf %50, %49 : vector<8x128xf32>
    %52 = arith.divf %50, %51 : vector<8x128xf32>
    %53 = math.tanh %47 : vector<8x128xf32>
    %54 = vector.extract_strided_slice %52 {offsets = [0, 0], sizes = [8, 32], strides = [1, 1]} : vector<8x128xf32> to vector<8x32xf32>
    %55 = vector.extract_strided_slice %52 {offsets = [0, 32], sizes = [8, 32], strides = [1, 1]} : vector<8x128xf32> to vector<8x32xf32>
    %56 = vector.extract_strided_slice %53 {offsets = [0, 64], sizes = [8, 32], strides = [1, 1]} : vector<8x128xf32> to vector<8x32xf32>
    %57 = vector.extract_strided_slice %52 {offsets = [0, 96], sizes = [8, 32], strides = [1, 1]} : vector<8x128xf32> to vector<8x32xf32>
    %58 = arith.mulf %55, %34 : vector<8x32xf32>
    %59 = arith.mulf %54, %56 : vector<8x32xf32>
    %60 = arith.addf %58, %59 : vector<8x32xf32>
    %61 = math.tanh %60 : vector<8x32xf32>
    %62 = arith.mulf %57, %61 : vector<8x32xf32>
    %c2 = arith.constant 2 : index
    %c0_27 = arith.constant 0 : index
    %c0_28 = arith.constant 0 : index
    %63 = vector.load %arg1[%c2, %c0_27, %c0_28] : memref<8x8x8xf32, #tpu.memory_space<vmem>>, vector<1x8x8xf32>
    %64 = vector.shape_cast %63 : vector<1x8x8xf32> to vector<8x8xf32>
    %65 = vector.extract_strided_slice %64 {offsets = [0, 0], sizes = [8, 1], strides = [1, 1]} : vector<8x8xf32> to vector<8x1xf32>
    %66 = vector.broadcast %65 : vector<8x1xf32> to vector<8x128xf32>
    %67 = vector.broadcast %0 : vector<1x128xf32> to vector<8x128xf32>
    %68 = arith.mulf %66, %67 : vector<8x128xf32>
    %69 = vector.broadcast %1 : vector<1x128xf32> to vector<8x128xf32>
    %70 = arith.addf %68, %69 : vector<8x128xf32>
    %71 = arith.truncf %62 : vector<8x32xf32> to vector<8x32xbf16>
    %cst_29 = arith.constant dense<0.000000e+00> : vector<8x128xf32>
    %72 = tpu.matmul %71, %2, %cst_29 {dimension_numbers = #tpu.dot_dimension_numbers<[1], [0], [0], [1], [0, 0, 1, 1], [], []>} : vector<8x32xbf16>, vector<32x128xbf16>, vector<8x128xf32> -> vector<8x128xf32>
    %73 = arith.addf %70, %72 : vector<8x128xf32>
    %74 = arith.negf %73 : vector<8x128xf32>
    %75 = math.exp %74 : vector<8x128xf32>
    %cst_30 = arith.constant 1.000000e+00 : f32
    %76 = vector.broadcast %cst_30 : f32 to vector<8x128xf32>
    %77 = arith.addf %76, %75 : vector<8x128xf32>
    %78 = arith.divf %76, %77 : vector<8x128xf32>
    %79 = math.tanh %73 : vector<8x128xf32>
    %80 = vector.extract_strided_slice %78 {offsets = [0, 0], sizes = [8, 32], strides = [1, 1]} : vector<8x128xf32> to vector<8x32xf32>
    %81 = vector.extract_strided_slice %78 {offsets = [0, 32], sizes = [8, 32], strides = [1, 1]} : vector<8x128xf32> to vector<8x32xf32>
    %82 = vector.extract_strided_slice %79 {offsets = [0, 64], sizes = [8, 32], strides = [1, 1]} : vector<8x128xf32> to vector<8x32xf32>
    %83 = vector.extract_strided_slice %78 {offsets = [0, 96], sizes = [8, 32], strides = [1, 1]} : vector<8x128xf32> to vector<8x32xf32>
    %84 = arith.mulf %81, %60 : vector<8x32xf32>
    %85 = arith.mulf %80, %82 : vector<8x32xf32>
    %86 = arith.addf %84, %85 : vector<8x32xf32>
    %87 = math.tanh %86 : vector<8x32xf32>
    %88 = arith.mulf %83, %87 : vector<8x32xf32>
    %c3 = arith.constant 3 : index
    %c0_31 = arith.constant 0 : index
    %c0_32 = arith.constant 0 : index
    %89 = vector.load %arg1[%c3, %c0_31, %c0_32] : memref<8x8x8xf32, #tpu.memory_space<vmem>>, vector<1x8x8xf32>
    %90 = vector.shape_cast %89 : vector<1x8x8xf32> to vector<8x8xf32>
    %91 = vector.extract_strided_slice %90 {offsets = [0, 0], sizes = [8, 1], strides = [1, 1]} : vector<8x8xf32> to vector<8x1xf32>
    %92 = vector.broadcast %91 : vector<8x1xf32> to vector<8x128xf32>
    %93 = vector.broadcast %0 : vector<1x128xf32> to vector<8x128xf32>
    %94 = arith.mulf %92, %93 : vector<8x128xf32>
    %95 = vector.broadcast %1 : vector<1x128xf32> to vector<8x128xf32>
    %96 = arith.addf %94, %95 : vector<8x128xf32>
    %97 = arith.truncf %88 : vector<8x32xf32> to vector<8x32xbf16>
    %cst_33 = arith.constant dense<0.000000e+00> : vector<8x128xf32>
    %98 = tpu.matmul %97, %2, %cst_33 {dimension_numbers = #tpu.dot_dimension_numbers<[1], [0], [0], [1], [0, 0, 1, 1], [], []>} : vector<8x32xbf16>, vector<32x128xbf16>, vector<8x128xf32> -> vector<8x128xf32>
    %99 = arith.addf %96, %98 : vector<8x128xf32>
    %100 = arith.negf %99 : vector<8x128xf32>
    %101 = math.exp %100 : vector<8x128xf32>
    %cst_34 = arith.constant 1.000000e+00 : f32
    %102 = vector.broadcast %cst_34 : f32 to vector<8x128xf32>
    %103 = arith.addf %102, %101 : vector<8x128xf32>
    %104 = arith.divf %102, %103 : vector<8x128xf32>
    %105 = math.tanh %99 : vector<8x128xf32>
    %106 = vector.extract_strided_slice %104 {offsets = [0, 0], sizes = [8, 32], strides = [1, 1]} : vector<8x128xf32> to vector<8x32xf32>
    %107 = vector.extract_strided_slice %104 {offsets = [0, 32], sizes = [8, 32], strides = [1, 1]} : vector<8x128xf32> to vector<8x32xf32>
    %108 = vector.extract_strided_slice %105 {offsets = [0, 64], sizes = [8, 32], strides = [1, 1]} : vector<8x128xf32> to vector<8x32xf32>
    %109 = vector.extract_strided_slice %104 {offsets = [0, 96], sizes = [8, 32], strides = [1, 1]} : vector<8x128xf32> to vector<8x32xf32>
    %110 = arith.mulf %107, %86 : vector<8x32xf32>
    %111 = arith.mulf %106, %108 : vector<8x32xf32>
    %112 = arith.addf %110, %111 : vector<8x32xf32>
    %113 = math.tanh %112 : vector<8x32xf32>
    %114 = arith.mulf %109, %113 : vector<8x32xf32>
    %c4 = arith.constant 4 : index
    %c0_35 = arith.constant 0 : index
    %c0_36 = arith.constant 0 : index
    %115 = vector.load %arg1[%c4, %c0_35, %c0_36] : memref<8x8x8xf32, #tpu.memory_space<vmem>>, vector<1x8x8xf32>
    %116 = vector.shape_cast %115 : vector<1x8x8xf32> to vector<8x8xf32>
    %117 = vector.extract_strided_slice %116 {offsets = [0, 0], sizes = [8, 1], strides = [1, 1]} : vector<8x8xf32> to vector<8x1xf32>
    %118 = vector.broadcast %117 : vector<8x1xf32> to vector<8x128xf32>
    %119 = vector.broadcast %0 : vector<1x128xf32> to vector<8x128xf32>
    %120 = arith.mulf %118, %119 : vector<8x128xf32>
    %121 = vector.broadcast %1 : vector<1x128xf32> to vector<8x128xf32>
    %122 = arith.addf %120, %121 : vector<8x128xf32>
    %123 = arith.truncf %114 : vector<8x32xf32> to vector<8x32xbf16>
    %cst_37 = arith.constant dense<0.000000e+00> : vector<8x128xf32>
    %124 = tpu.matmul %123, %2, %cst_37 {dimension_numbers = #tpu.dot_dimension_numbers<[1], [0], [0], [1], [0, 0, 1, 1], [], []>} : vector<8x32xbf16>, vector<32x128xbf16>, vector<8x128xf32> -> vector<8x128xf32>
    %125 = arith.addf %122, %124 : vector<8x128xf32>
    %126 = arith.negf %125 : vector<8x128xf32>
    %127 = math.exp %126 : vector<8x128xf32>
    %cst_38 = arith.constant 1.000000e+00 : f32
    %128 = vector.broadcast %cst_38 : f32 to vector<8x128xf32>
    %129 = arith.addf %128, %127 : vector<8x128xf32>
    %130 = arith.divf %128, %129 : vector<8x128xf32>
    %131 = math.tanh %125 : vector<8x128xf32>
    %132 = vector.extract_strided_slice %130 {offsets = [0, 0], sizes = [8, 32], strides = [1, 1]} : vector<8x128xf32> to vector<8x32xf32>
    %133 = vector.extract_strided_slice %130 {offsets = [0, 32], sizes = [8, 32], strides = [1, 1]} : vector<8x128xf32> to vector<8x32xf32>
    %134 = vector.extract_strided_slice %131 {offsets = [0, 64], sizes = [8, 32], strides = [1, 1]} : vector<8x128xf32> to vector<8x32xf32>
    %135 = vector.extract_strided_slice %130 {offsets = [0, 96], sizes = [8, 32], strides = [1, 1]} : vector<8x128xf32> to vector<8x32xf32>
    %136 = arith.mulf %133, %112 : vector<8x32xf32>
    %137 = arith.mulf %132, %134 : vector<8x32xf32>
    %138 = arith.addf %136, %137 : vector<8x32xf32>
    %139 = math.tanh %138 : vector<8x32xf32>
    %140 = arith.mulf %135, %139 : vector<8x32xf32>
    %c5 = arith.constant 5 : index
    %c0_39 = arith.constant 0 : index
    %c0_40 = arith.constant 0 : index
    %141 = vector.load %arg1[%c5, %c0_39, %c0_40] : memref<8x8x8xf32, #tpu.memory_space<vmem>>, vector<1x8x8xf32>
    %142 = vector.shape_cast %141 : vector<1x8x8xf32> to vector<8x8xf32>
    %143 = vector.extract_strided_slice %142 {offsets = [0, 0], sizes = [8, 1], strides = [1, 1]} : vector<8x8xf32> to vector<8x1xf32>
    %144 = vector.broadcast %143 : vector<8x1xf32> to vector<8x128xf32>
    %145 = vector.broadcast %0 : vector<1x128xf32> to vector<8x128xf32>
    %146 = arith.mulf %144, %145 : vector<8x128xf32>
    %147 = vector.broadcast %1 : vector<1x128xf32> to vector<8x128xf32>
    %148 = arith.addf %146, %147 : vector<8x128xf32>
    %149 = arith.truncf %140 : vector<8x32xf32> to vector<8x32xbf16>
    %cst_41 = arith.constant dense<0.000000e+00> : vector<8x128xf32>
    %150 = tpu.matmul %149, %2, %cst_41 {dimension_numbers = #tpu.dot_dimension_numbers<[1], [0], [0], [1], [0, 0, 1, 1], [], []>} : vector<8x32xbf16>, vector<32x128xbf16>, vector<8x128xf32> -> vector<8x128xf32>
    %151 = arith.addf %148, %150 : vector<8x128xf32>
    %152 = arith.negf %151 : vector<8x128xf32>
    %153 = math.exp %152 : vector<8x128xf32>
    %cst_42 = arith.constant 1.000000e+00 : f32
    %154 = vector.broadcast %cst_42 : f32 to vector<8x128xf32>
    %155 = arith.addf %154, %153 : vector<8x128xf32>
    %156 = arith.divf %154, %155 : vector<8x128xf32>
    %157 = math.tanh %151 : vector<8x128xf32>
    %158 = vector.extract_strided_slice %156 {offsets = [0, 0], sizes = [8, 32], strides = [1, 1]} : vector<8x128xf32> to vector<8x32xf32>
    %159 = vector.extract_strided_slice %156 {offsets = [0, 32], sizes = [8, 32], strides = [1, 1]} : vector<8x128xf32> to vector<8x32xf32>
    %160 = vector.extract_strided_slice %157 {offsets = [0, 64], sizes = [8, 32], strides = [1, 1]} : vector<8x128xf32> to vector<8x32xf32>
    %161 = vector.extract_strided_slice %156 {offsets = [0, 96], sizes = [8, 32], strides = [1, 1]} : vector<8x128xf32> to vector<8x32xf32>
    %162 = arith.mulf %159, %138 : vector<8x32xf32>
    %163 = arith.mulf %158, %160 : vector<8x32xf32>
    %164 = arith.addf %162, %163 : vector<8x32xf32>
    %165 = math.tanh %164 : vector<8x32xf32>
    %166 = arith.mulf %161, %165 : vector<8x32xf32>
    %c6 = arith.constant 6 : index
    %c0_43 = arith.constant 0 : index
    %c0_44 = arith.constant 0 : index
    %167 = vector.load %arg1[%c6, %c0_43, %c0_44] : memref<8x8x8xf32, #tpu.memory_space<vmem>>, vector<1x8x8xf32>
    %168 = vector.shape_cast %167 : vector<1x8x8xf32> to vector<8x8xf32>
    %169 = vector.extract_strided_slice %168 {offsets = [0, 0], sizes = [8, 1], strides = [1, 1]} : vector<8x8xf32> to vector<8x1xf32>
    %170 = vector.broadcast %169 : vector<8x1xf32> to vector<8x128xf32>
    %171 = vector.broadcast %0 : vector<1x128xf32> to vector<8x128xf32>
    %172 = arith.mulf %170, %171 : vector<8x128xf32>
    %173 = vector.broadcast %1 : vector<1x128xf32> to vector<8x128xf32>
    %174 = arith.addf %172, %173 : vector<8x128xf32>
    %175 = arith.truncf %166 : vector<8x32xf32> to vector<8x32xbf16>
    %cst_45 = arith.constant dense<0.000000e+00> : vector<8x128xf32>
    %176 = tpu.matmul %175, %2, %cst_45 {dimension_numbers = #tpu.dot_dimension_numbers<[1], [0], [0], [1], [0, 0, 1, 1], [], []>} : vector<8x32xbf16>, vector<32x128xbf16>, vector<8x128xf32> -> vector<8x128xf32>
    %177 = arith.addf %174, %176 : vector<8x128xf32>
    %178 = arith.negf %177 : vector<8x128xf32>
    %179 = math.exp %178 : vector<8x128xf32>
    %cst_46 = arith.constant 1.000000e+00 : f32
    %180 = vector.broadcast %cst_46 : f32 to vector<8x128xf32>
    %181 = arith.addf %180, %179 : vector<8x128xf32>
    %182 = arith.divf %180, %181 : vector<8x128xf32>
    %183 = math.tanh %177 : vector<8x128xf32>
    %184 = vector.extract_strided_slice %182 {offsets = [0, 0], sizes = [8, 32], strides = [1, 1]} : vector<8x128xf32> to vector<8x32xf32>
    %185 = vector.extract_strided_slice %182 {offsets = [0, 32], sizes = [8, 32], strides = [1, 1]} : vector<8x128xf32> to vector<8x32xf32>
    %186 = vector.extract_strided_slice %183 {offsets = [0, 64], sizes = [8, 32], strides = [1, 1]} : vector<8x128xf32> to vector<8x32xf32>
    %187 = vector.extract_strided_slice %182 {offsets = [0, 96], sizes = [8, 32], strides = [1, 1]} : vector<8x128xf32> to vector<8x32xf32>
    %188 = arith.mulf %185, %164 : vector<8x32xf32>
    %189 = arith.mulf %184, %186 : vector<8x32xf32>
    %190 = arith.addf %188, %189 : vector<8x32xf32>
    %191 = math.tanh %190 : vector<8x32xf32>
    %192 = arith.mulf %187, %191 : vector<8x32xf32>
    %c7 = arith.constant 7 : index
    %c0_47 = arith.constant 0 : index
    %c0_48 = arith.constant 0 : index
    %193 = vector.load %arg1[%c7, %c0_47, %c0_48] : memref<8x8x8xf32, #tpu.memory_space<vmem>>, vector<1x8x8xf32>
    %194 = vector.shape_cast %193 : vector<1x8x8xf32> to vector<8x8xf32>
    %195 = vector.extract_strided_slice %194 {offsets = [0, 0], sizes = [8, 1], strides = [1, 1]} : vector<8x8xf32> to vector<8x1xf32>
    %196 = vector.broadcast %195 : vector<8x1xf32> to vector<8x128xf32>
    %197 = vector.broadcast %0 : vector<1x128xf32> to vector<8x128xf32>
    %198 = arith.mulf %196, %197 : vector<8x128xf32>
    %199 = vector.broadcast %1 : vector<1x128xf32> to vector<8x128xf32>
    %200 = arith.addf %198, %199 : vector<8x128xf32>
    %201 = arith.truncf %192 : vector<8x32xf32> to vector<8x32xbf16>
    %cst_49 = arith.constant dense<0.000000e+00> : vector<8x128xf32>
    %202 = tpu.matmul %201, %2, %cst_49 {dimension_numbers = #tpu.dot_dimension_numbers<[1], [0], [0], [1], [0, 0, 1, 1], [], []>} : vector<8x32xbf16>, vector<32x128xbf16>, vector<8x128xf32> -> vector<8x128xf32>
    %203 = arith.addf %200, %202 : vector<8x128xf32>
    %204 = arith.negf %203 : vector<8x128xf32>
    %205 = math.exp %204 : vector<8x128xf32>
    %cst_50 = arith.constant 1.000000e+00 : f32
    %206 = vector.broadcast %cst_50 : f32 to vector<8x128xf32>
    %207 = arith.addf %206, %205 : vector<8x128xf32>
    %208 = arith.divf %206, %207 : vector<8x128xf32>
    %209 = math.tanh %203 : vector<8x128xf32>
    %210 = vector.extract_strided_slice %208 {offsets = [0, 0], sizes = [8, 32], strides = [1, 1]} : vector<8x128xf32> to vector<8x32xf32>
    %211 = vector.extract_strided_slice %208 {offsets = [0, 32], sizes = [8, 32], strides = [1, 1]} : vector<8x128xf32> to vector<8x32xf32>
    %212 = vector.extract_strided_slice %209 {offsets = [0, 64], sizes = [8, 32], strides = [1, 1]} : vector<8x128xf32> to vector<8x32xf32>
    %213 = vector.extract_strided_slice %208 {offsets = [0, 96], sizes = [8, 32], strides = [1, 1]} : vector<8x128xf32> to vector<8x32xf32>
    %214 = arith.mulf %211, %190 : vector<8x32xf32>
    %215 = arith.mulf %210, %212 : vector<8x32xf32>
    %216 = arith.addf %214, %215 : vector<8x32xf32>
    %217 = math.tanh %216 : vector<8x32xf32>
    %218 = arith.mulf %213, %217 : vector<8x32xf32>
    %cst_51 = arith.constant 0.000000e+00 : f32
    %219 = vector.broadcast %cst_51 : f32 to vector<8x32xf32>
    %cst_52 = arith.constant 0.000000e+00 : f32
    %220 = vector.broadcast %cst_52 : f32 to vector<8x32xf32>
    %221 = arith.truncf %36 : vector<8x32xf32> to vector<8x32xbf16>
    %cst_53 = arith.constant dense<0.000000e+00> : vector<8x128xf32>
    %222 = tpu.matmul %221, %5, %cst_53 {dimension_numbers = #tpu.dot_dimension_numbers<[1], [0], [0], [1], [0, 0, 1, 1], [], []>} : vector<8x32xbf16>, vector<32x128xbf16>, vector<8x128xf32> -> vector<8x128xf32>
    %223 = vector.broadcast %7 : vector<1x128xf32> to vector<8x128xf32>
    %224 = arith.addf %222, %223 : vector<8x128xf32>
    %225 = arith.truncf %219 : vector<8x32xf32> to vector<8x32xbf16>
    %cst_54 = arith.constant dense<0.000000e+00> : vector<8x128xf32>
    %226 = tpu.matmul %225, %3, %cst_54 {dimension_numbers = #tpu.dot_dimension_numbers<[1], [0], [0], [1], [0, 0, 1, 1], [], []>} : vector<8x32xbf16>, vector<32x128xbf16>, vector<8x128xf32> -> vector<8x128xf32>
    %227 = arith.addf %224, %226 : vector<8x128xf32>
    %228 = arith.negf %227 : vector<8x128xf32>
    %229 = math.exp %228 : vector<8x128xf32>
    %cst_55 = arith.constant 1.000000e+00 : f32
    %230 = vector.broadcast %cst_55 : f32 to vector<8x128xf32>
    %231 = arith.addf %230, %229 : vector<8x128xf32>
    %232 = arith.divf %230, %231 : vector<8x128xf32>
    %233 = math.tanh %227 : vector<8x128xf32>
    %234 = vector.extract_strided_slice %232 {offsets = [0, 0], sizes = [8, 32], strides = [1, 1]} : vector<8x128xf32> to vector<8x32xf32>
    %235 = vector.extract_strided_slice %232 {offsets = [0, 32], sizes = [8, 32], strides = [1, 1]} : vector<8x128xf32> to vector<8x32xf32>
    %236 = vector.extract_strided_slice %233 {offsets = [0, 64], sizes = [8, 32], strides = [1, 1]} : vector<8x128xf32> to vector<8x32xf32>
    %237 = vector.extract_strided_slice %232 {offsets = [0, 96], sizes = [8, 32], strides = [1, 1]} : vector<8x128xf32> to vector<8x32xf32>
    %238 = arith.mulf %235, %220 : vector<8x32xf32>
    %239 = arith.mulf %234, %236 : vector<8x32xf32>
    %240 = arith.addf %238, %239 : vector<8x32xf32>
    %241 = math.tanh %240 : vector<8x32xf32>
    %242 = arith.mulf %237, %241 : vector<8x32xf32>
    %243 = arith.truncf %62 : vector<8x32xf32> to vector<8x32xbf16>
    %cst_56 = arith.constant dense<0.000000e+00> : vector<8x128xf32>
    %244 = tpu.matmul %243, %5, %cst_56 {dimension_numbers = #tpu.dot_dimension_numbers<[1], [0], [0], [1], [0, 0, 1, 1], [], []>} : vector<8x32xbf16>, vector<32x128xbf16>, vector<8x128xf32> -> vector<8x128xf32>
    %245 = vector.broadcast %7 : vector<1x128xf32> to vector<8x128xf32>
    %246 = arith.addf %244, %245 : vector<8x128xf32>
    %247 = arith.truncf %242 : vector<8x32xf32> to vector<8x32xbf16>
    %cst_57 = arith.constant dense<0.000000e+00> : vector<8x128xf32>
    %248 = tpu.matmul %247, %3, %cst_57 {dimension_numbers = #tpu.dot_dimension_numbers<[1], [0], [0], [1], [0, 0, 1, 1], [], []>} : vector<8x32xbf16>, vector<32x128xbf16>, vector<8x128xf32> -> vector<8x128xf32>
    %249 = arith.addf %246, %248 : vector<8x128xf32>
    %250 = arith.negf %249 : vector<8x128xf32>
    %251 = math.exp %250 : vector<8x128xf32>
    %cst_58 = arith.constant 1.000000e+00 : f32
    %252 = vector.broadcast %cst_58 : f32 to vector<8x128xf32>
    %253 = arith.addf %252, %251 : vector<8x128xf32>
    %254 = arith.divf %252, %253 : vector<8x128xf32>
    %255 = math.tanh %249 : vector<8x128xf32>
    %256 = vector.extract_strided_slice %254 {offsets = [0, 0], sizes = [8, 32], strides = [1, 1]} : vector<8x128xf32> to vector<8x32xf32>
    %257 = vector.extract_strided_slice %254 {offsets = [0, 32], sizes = [8, 32], strides = [1, 1]} : vector<8x128xf32> to vector<8x32xf32>
    %258 = vector.extract_strided_slice %255 {offsets = [0, 64], sizes = [8, 32], strides = [1, 1]} : vector<8x128xf32> to vector<8x32xf32>
    %259 = vector.extract_strided_slice %254 {offsets = [0, 96], sizes = [8, 32], strides = [1, 1]} : vector<8x128xf32> to vector<8x32xf32>
    %260 = arith.mulf %257, %240 : vector<8x32xf32>
    %261 = arith.mulf %256, %258 : vector<8x32xf32>
    %262 = arith.addf %260, %261 : vector<8x32xf32>
    %263 = math.tanh %262 : vector<8x32xf32>
    %264 = arith.mulf %259, %263 : vector<8x32xf32>
    %265 = arith.truncf %88 : vector<8x32xf32> to vector<8x32xbf16>
    %cst_59 = arith.constant dense<0.000000e+00> : vector<8x128xf32>
    %266 = tpu.matmul %265, %5, %cst_59 {dimension_numbers = #tpu.dot_dimension_numbers<[1], [0], [0], [1], [0, 0, 1, 1], [], []>} : vector<8x32xbf16>, vector<32x128xbf16>, vector<8x128xf32> -> vector<8x128xf32>
    %267 = vector.broadcast %7 : vector<1x128xf32> to vector<8x128xf32>
    %268 = arith.addf %266, %267 : vector<8x128xf32>
    %269 = arith.truncf %264 : vector<8x32xf32> to vector<8x32xbf16>
    %cst_60 = arith.constant dense<0.000000e+00> : vector<8x128xf32>
    %270 = tpu.matmul %269, %3, %cst_60 {dimension_numbers = #tpu.dot_dimension_numbers<[1], [0], [0], [1], [0, 0, 1, 1], [], []>} : vector<8x32xbf16>, vector<32x128xbf16>, vector<8x128xf32> -> vector<8x128xf32>
    %271 = arith.addf %268, %270 : vector<8x128xf32>
    %272 = arith.negf %271 : vector<8x128xf32>
    %273 = math.exp %272 : vector<8x128xf32>
    %cst_61 = arith.constant 1.000000e+00 : f32
    %274 = vector.broadcast %cst_61 : f32 to vector<8x128xf32>
    %275 = arith.addf %274, %273 : vector<8x128xf32>
    %276 = arith.divf %274, %275 : vector<8x128xf32>
    %277 = math.tanh %271 : vector<8x128xf32>
    %278 = vector.extract_strided_slice %276 {offsets = [0, 0], sizes = [8, 32], strides = [1, 1]} : vector<8x128xf32> to vector<8x32xf32>
    %279 = vector.extract_strided_slice %276 {offsets = [0, 32], sizes = [8, 32], strides = [1, 1]} : vector<8x128xf32> to vector<8x32xf32>
    %280 = vector.extract_strided_slice %277 {offsets = [0, 64], sizes = [8, 32], strides = [1, 1]} : vector<8x128xf32> to vector<8x32xf32>
    %281 = vector.extract_strided_slice %276 {offsets = [0, 96], sizes = [8, 32], strides = [1, 1]} : vector<8x128xf32> to vector<8x32xf32>
    %282 = arith.mulf %279, %262 : vector<8x32xf32>
    %283 = arith.mulf %278, %280 : vector<8x32xf32>
    %284 = arith.addf %282, %283 : vector<8x32xf32>
    %285 = math.tanh %284 : vector<8x32xf32>
    %286 = arith.mulf %281, %285 : vector<8x32xf32>
    %287 = arith.truncf %114 : vector<8x32xf32> to vector<8x32xbf16>
    %cst_62 = arith.constant dense<0.000000e+00> : vector<8x128xf32>
    %288 = tpu.matmul %287, %5, %cst_62 {dimension_numbers = #tpu.dot_dimension_numbers<[1], [0], [0], [1], [0, 0, 1, 1], [], []>} : vector<8x32xbf16>, vector<32x128xbf16>, vector<8x128xf32> -> vector<8x128xf32>
    %289 = vector.broadcast %7 : vector<1x128xf32> to vector<8x128xf32>
    %290 = arith.addf %288, %289 : vector<8x128xf32>
    %291 = arith.truncf %286 : vector<8x32xf32> to vector<8x32xbf16>
    %cst_63 = arith.constant dense<0.000000e+00> : vector<8x128xf32>
    %292 = tpu.matmul %291, %3, %cst_63 {dimension_numbers = #tpu.dot_dimension_numbers<[1], [0], [0], [1], [0, 0, 1, 1], [], []>} : vector<8x32xbf16>, vector<32x128xbf16>, vector<8x128xf32> -> vector<8x128xf32>
    %293 = arith.addf %290, %292 : vector<8x128xf32>
    %294 = arith.negf %293 : vector<8x128xf32>
    %295 = math.exp %294 : vector<8x128xf32>
    %cst_64 = arith.constant 1.000000e+00 : f32
    %296 = vector.broadcast %cst_64 : f32 to vector<8x128xf32>
    %297 = arith.addf %296, %295 : vector<8x128xf32>
    %298 = arith.divf %296, %297 : vector<8x128xf32>
    %299 = math.tanh %293 : vector<8x128xf32>
    %300 = vector.extract_strided_slice %298 {offsets = [0, 0], sizes = [8, 32], strides = [1, 1]} : vector<8x128xf32> to vector<8x32xf32>
    %301 = vector.extract_strided_slice %298 {offsets = [0, 32], sizes = [8, 32], strides = [1, 1]} : vector<8x128xf32> to vector<8x32xf32>
    %302 = vector.extract_strided_slice %299 {offsets = [0, 64], sizes = [8, 32], strides = [1, 1]} : vector<8x128xf32> to vector<8x32xf32>
    %303 = vector.extract_strided_slice %298 {offsets = [0, 96], sizes = [8, 32], strides = [1, 1]} : vector<8x128xf32> to vector<8x32xf32>
    %304 = arith.mulf %301, %284 : vector<8x32xf32>
    %305 = arith.mulf %300, %302 : vector<8x32xf32>
    %306 = arith.addf %304, %305 : vector<8x32xf32>
    %307 = math.tanh %306 : vector<8x32xf32>
    %308 = arith.mulf %303, %307 : vector<8x32xf32>
    %309 = arith.truncf %140 : vector<8x32xf32> to vector<8x32xbf16>
    %cst_65 = arith.constant dense<0.000000e+00> : vector<8x128xf32>
    %310 = tpu.matmul %309, %5, %cst_65 {dimension_numbers = #tpu.dot_dimension_numbers<[1], [0], [0], [1], [0, 0, 1, 1], [], []>} : vector<8x32xbf16>, vector<32x128xbf16>, vector<8x128xf32> -> vector<8x128xf32>
    %311 = vector.broadcast %7 : vector<1x128xf32> to vector<8x128xf32>
    %312 = arith.addf %310, %311 : vector<8x128xf32>
    %313 = arith.truncf %308 : vector<8x32xf32> to vector<8x32xbf16>
    %cst_66 = arith.constant dense<0.000000e+00> : vector<8x128xf32>
    %314 = tpu.matmul %313, %3, %cst_66 {dimension_numbers = #tpu.dot_dimension_numbers<[1], [0], [0], [1], [0, 0, 1, 1], [], []>} : vector<8x32xbf16>, vector<32x128xbf16>, vector<8x128xf32> -> vector<8x128xf32>
    %315 = arith.addf %312, %314 : vector<8x128xf32>
    %316 = arith.negf %315 : vector<8x128xf32>
    %317 = math.exp %316 : vector<8x128xf32>
    %cst_67 = arith.constant 1.000000e+00 : f32
    %318 = vector.broadcast %cst_67 : f32 to vector<8x128xf32>
    %319 = arith.addf %318, %317 : vector<8x128xf32>
    %320 = arith.divf %318, %319 : vector<8x128xf32>
    %321 = math.tanh %315 : vector<8x128xf32>
    %322 = vector.extract_strided_slice %320 {offsets = [0, 0], sizes = [8, 32], strides = [1, 1]} : vector<8x128xf32> to vector<8x32xf32>
    %323 = vector.extract_strided_slice %320 {offsets = [0, 32], sizes = [8, 32], strides = [1, 1]} : vector<8x128xf32> to vector<8x32xf32>
    %324 = vector.extract_strided_slice %321 {offsets = [0, 64], sizes = [8, 32], strides = [1, 1]} : vector<8x128xf32> to vector<8x32xf32>
    %325 = vector.extract_strided_slice %320 {offsets = [0, 96], sizes = [8, 32], strides = [1, 1]} : vector<8x128xf32> to vector<8x32xf32>
    %326 = arith.mulf %323, %306 : vector<8x32xf32>
    %327 = arith.mulf %322, %324 : vector<8x32xf32>
    %328 = arith.addf %326, %327 : vector<8x32xf32>
    %329 = math.tanh %328 : vector<8x32xf32>
    %330 = arith.mulf %325, %329 : vector<8x32xf32>
    %331 = arith.truncf %166 : vector<8x32xf32> to vector<8x32xbf16>
    %cst_68 = arith.constant dense<0.000000e+00> : vector<8x128xf32>
    %332 = tpu.matmul %331, %5, %cst_68 {dimension_numbers = #tpu.dot_dimension_numbers<[1], [0], [0], [1], [0, 0, 1, 1], [], []>} : vector<8x32xbf16>, vector<32x128xbf16>, vector<8x128xf32> -> vector<8x128xf32>
    %333 = vector.broadcast %7 : vector<1x128xf32> to vector<8x128xf32>
    %334 = arith.addf %332, %333 : vector<8x128xf32>
    %335 = arith.truncf %330 : vector<8x32xf32> to vector<8x32xbf16>
    %cst_69 = arith.constant dense<0.000000e+00> : vector<8x128xf32>
    %336 = tpu.matmul %335, %3, %cst_69 {dimension_numbers = #tpu.dot_dimension_numbers<[1], [0], [0], [1], [0, 0, 1, 1], [], []>} : vector<8x32xbf16>, vector<32x128xbf16>, vector<8x128xf32> -> vector<8x128xf32>
    %337 = arith.addf %334, %336 : vector<8x128xf32>
    %338 = arith.negf %337 : vector<8x128xf32>
    %339 = math.exp %338 : vector<8x128xf32>
    %cst_70 = arith.constant 1.000000e+00 : f32
    %340 = vector.broadcast %cst_70 : f32 to vector<8x128xf32>
    %341 = arith.addf %340, %339 : vector<8x128xf32>
    %342 = arith.divf %340, %341 : vector<8x128xf32>
    %343 = math.tanh %337 : vector<8x128xf32>
    %344 = vector.extract_strided_slice %342 {offsets = [0, 0], sizes = [8, 32], strides = [1, 1]} : vector<8x128xf32> to vector<8x32xf32>
    %345 = vector.extract_strided_slice %342 {offsets = [0, 32], sizes = [8, 32], strides = [1, 1]} : vector<8x128xf32> to vector<8x32xf32>
    %346 = vector.extract_strided_slice %343 {offsets = [0, 64], sizes = [8, 32], strides = [1, 1]} : vector<8x128xf32> to vector<8x32xf32>
    %347 = vector.extract_strided_slice %342 {offsets = [0, 96], sizes = [8, 32], strides = [1, 1]} : vector<8x128xf32> to vector<8x32xf32>
    %348 = arith.mulf %345, %328 : vector<8x32xf32>
    %349 = arith.mulf %344, %346 : vector<8x32xf32>
    %350 = arith.addf %348, %349 : vector<8x32xf32>
    %351 = math.tanh %350 : vector<8x32xf32>
    %352 = arith.mulf %347, %351 : vector<8x32xf32>
    %353 = arith.truncf %192 : vector<8x32xf32> to vector<8x32xbf16>
    %cst_71 = arith.constant dense<0.000000e+00> : vector<8x128xf32>
    %354 = tpu.matmul %353, %5, %cst_71 {dimension_numbers = #tpu.dot_dimension_numbers<[1], [0], [0], [1], [0, 0, 1, 1], [], []>} : vector<8x32xbf16>, vector<32x128xbf16>, vector<8x128xf32> -> vector<8x128xf32>
    %355 = vector.broadcast %7 : vector<1x128xf32> to vector<8x128xf32>
    %356 = arith.addf %354, %355 : vector<8x128xf32>
    %357 = arith.truncf %352 : vector<8x32xf32> to vector<8x32xbf16>
    %cst_72 = arith.constant dense<0.000000e+00> : vector<8x128xf32>
    %358 = tpu.matmul %357, %3, %cst_72 {dimension_numbers = #tpu.dot_dimension_numbers<[1], [0], [0], [1], [0, 0, 1, 1], [], []>} : vector<8x32xbf16>, vector<32x128xbf16>, vector<8x128xf32> -> vector<8x128xf32>
    %359 = arith.addf %356, %358 : vector<8x128xf32>
    %360 = arith.negf %359 : vector<8x128xf32>
    %361 = math.exp %360 : vector<8x128xf32>
    %cst_73 = arith.constant 1.000000e+00 : f32
    %362 = vector.broadcast %cst_73 : f32 to vector<8x128xf32>
    %363 = arith.addf %362, %361 : vector<8x128xf32>
    %364 = arith.divf %362, %363 : vector<8x128xf32>
    %365 = math.tanh %359 : vector<8x128xf32>
    %366 = vector.extract_strided_slice %364 {offsets = [0, 0], sizes = [8, 32], strides = [1, 1]} : vector<8x128xf32> to vector<8x32xf32>
    %367 = vector.extract_strided_slice %364 {offsets = [0, 32], sizes = [8, 32], strides = [1, 1]} : vector<8x128xf32> to vector<8x32xf32>
    %368 = vector.extract_strided_slice %365 {offsets = [0, 64], sizes = [8, 32], strides = [1, 1]} : vector<8x128xf32> to vector<8x32xf32>
    %369 = vector.extract_strided_slice %364 {offsets = [0, 96], sizes = [8, 32], strides = [1, 1]} : vector<8x128xf32> to vector<8x32xf32>
    %370 = arith.mulf %367, %350 : vector<8x32xf32>
    %371 = arith.mulf %366, %368 : vector<8x32xf32>
    %372 = arith.addf %370, %371 : vector<8x32xf32>
    %373 = math.tanh %372 : vector<8x32xf32>
    %374 = arith.mulf %369, %373 : vector<8x32xf32>
    %375 = arith.truncf %218 : vector<8x32xf32> to vector<8x32xbf16>
    %cst_74 = arith.constant dense<0.000000e+00> : vector<8x128xf32>
    %376 = tpu.matmul %375, %5, %cst_74 {dimension_numbers = #tpu.dot_dimension_numbers<[1], [0], [0], [1], [0, 0, 1, 1], [], []>} : vector<8x32xbf16>, vector<32x128xbf16>, vector<8x128xf32> -> vector<8x128xf32>
    %377 = vector.broadcast %7 : vector<1x128xf32> to vector<8x128xf32>
    %378 = arith.addf %376, %377 : vector<8x128xf32>
    %379 = arith.truncf %374 : vector<8x32xf32> to vector<8x32xbf16>
    %cst_75 = arith.constant dense<0.000000e+00> : vector<8x128xf32>
    %380 = tpu.matmul %379, %3, %cst_75 {dimension_numbers = #tpu.dot_dimension_numbers<[1], [0], [0], [1], [0, 0, 1, 1], [], []>} : vector<8x32xbf16>, vector<32x128xbf16>, vector<8x128xf32> -> vector<8x128xf32>
    %381 = arith.addf %378, %380 : vector<8x128xf32>
    %382 = arith.negf %381 : vector<8x128xf32>
    %383 = math.exp %382 : vector<8x128xf32>
    %cst_76 = arith.constant 1.000000e+00 : f32
    %384 = vector.broadcast %cst_76 : f32 to vector<8x128xf32>
    %385 = arith.addf %384, %383 : vector<8x128xf32>
    %386 = arith.divf %384, %385 : vector<8x128xf32>
    %387 = math.tanh %381 : vector<8x128xf32>
    %388 = vector.extract_strided_slice %386 {offsets = [0, 0], sizes = [8, 32], strides = [1, 1]} : vector<8x128xf32> to vector<8x32xf32>
    %389 = vector.extract_strided_slice %386 {offsets = [0, 32], sizes = [8, 32], strides = [1, 1]} : vector<8x128xf32> to vector<8x32xf32>
    %390 = vector.extract_strided_slice %387 {offsets = [0, 64], sizes = [8, 32], strides = [1, 1]} : vector<8x128xf32> to vector<8x32xf32>
    %391 = vector.extract_strided_slice %386 {offsets = [0, 96], sizes = [8, 32], strides = [1, 1]} : vector<8x128xf32> to vector<8x32xf32>
    %392 = arith.mulf %389, %372 : vector<8x32xf32>
    %393 = arith.mulf %388, %390 : vector<8x32xf32>
    %394 = arith.addf %392, %393 : vector<8x32xf32>
    %395 = math.tanh %394 : vector<8x32xf32>
    %396 = arith.mulf %391, %395 : vector<8x32xf32>
    %cst_77 = arith.constant 0.000000e+00 : f32
    %397 = vector.broadcast %cst_77 : f32 to vector<8x32xf32>
    %cst_78 = arith.constant 0.000000e+00 : f32
    %398 = vector.broadcast %cst_78 : f32 to vector<8x32xf32>
    %399 = arith.truncf %242 : vector<8x32xf32> to vector<8x32xbf16>
    %cst_79 = arith.constant dense<0.000000e+00> : vector<8x128xf32>
    %400 = tpu.matmul %399, %6, %cst_79 {dimension_numbers = #tpu.dot_dimension_numbers<[1], [0], [0], [1], [0, 0, 1, 1], [], []>} : vector<8x32xbf16>, vector<32x128xbf16>, vector<8x128xf32> -> vector<8x128xf32>
    %401 = vector.broadcast %8 : vector<1x128xf32> to vector<8x128xf32>
    %402 = arith.addf %400, %401 : vector<8x128xf32>
    %403 = arith.truncf %397 : vector<8x32xf32> to vector<8x32xbf16>
    %cst_80 = arith.constant dense<0.000000e+00> : vector<8x128xf32>
    %404 = tpu.matmul %403, %4, %cst_80 {dimension_numbers = #tpu.dot_dimension_numbers<[1], [0], [0], [1], [0, 0, 1, 1], [], []>} : vector<8x32xbf16>, vector<32x128xbf16>, vector<8x128xf32> -> vector<8x128xf32>
    %405 = arith.addf %402, %404 : vector<8x128xf32>
    %406 = arith.negf %405 : vector<8x128xf32>
    %407 = math.exp %406 : vector<8x128xf32>
    %cst_81 = arith.constant 1.000000e+00 : f32
    %408 = vector.broadcast %cst_81 : f32 to vector<8x128xf32>
    %409 = arith.addf %408, %407 : vector<8x128xf32>
    %410 = arith.divf %408, %409 : vector<8x128xf32>
    %411 = math.tanh %405 : vector<8x128xf32>
    %412 = vector.extract_strided_slice %410 {offsets = [0, 0], sizes = [8, 32], strides = [1, 1]} : vector<8x128xf32> to vector<8x32xf32>
    %413 = vector.extract_strided_slice %410 {offsets = [0, 32], sizes = [8, 32], strides = [1, 1]} : vector<8x128xf32> to vector<8x32xf32>
    %414 = vector.extract_strided_slice %411 {offsets = [0, 64], sizes = [8, 32], strides = [1, 1]} : vector<8x128xf32> to vector<8x32xf32>
    %415 = vector.extract_strided_slice %410 {offsets = [0, 96], sizes = [8, 32], strides = [1, 1]} : vector<8x128xf32> to vector<8x32xf32>
    %416 = arith.mulf %413, %398 : vector<8x32xf32>
    %417 = arith.mulf %412, %414 : vector<8x32xf32>
    %418 = arith.addf %416, %417 : vector<8x32xf32>
    %419 = math.tanh %418 : vector<8x32xf32>
    %420 = arith.mulf %415, %419 : vector<8x32xf32>
    %421 = arith.truncf %264 : vector<8x32xf32> to vector<8x32xbf16>
    %cst_82 = arith.constant dense<0.000000e+00> : vector<8x128xf32>
    %422 = tpu.matmul %421, %6, %cst_82 {dimension_numbers = #tpu.dot_dimension_numbers<[1], [0], [0], [1], [0, 0, 1, 1], [], []>} : vector<8x32xbf16>, vector<32x128xbf16>, vector<8x128xf32> -> vector<8x128xf32>
    %423 = vector.broadcast %8 : vector<1x128xf32> to vector<8x128xf32>
    %424 = arith.addf %422, %423 : vector<8x128xf32>
    %425 = arith.truncf %420 : vector<8x32xf32> to vector<8x32xbf16>
    %cst_83 = arith.constant dense<0.000000e+00> : vector<8x128xf32>
    %426 = tpu.matmul %425, %4, %cst_83 {dimension_numbers = #tpu.dot_dimension_numbers<[1], [0], [0], [1], [0, 0, 1, 1], [], []>} : vector<8x32xbf16>, vector<32x128xbf16>, vector<8x128xf32> -> vector<8x128xf32>
    %427 = arith.addf %424, %426 : vector<8x128xf32>
    %428 = arith.negf %427 : vector<8x128xf32>
    %429 = math.exp %428 : vector<8x128xf32>
    %cst_84 = arith.constant 1.000000e+00 : f32
    %430 = vector.broadcast %cst_84 : f32 to vector<8x128xf32>
    %431 = arith.addf %430, %429 : vector<8x128xf32>
    %432 = arith.divf %430, %431 : vector<8x128xf32>
    %433 = math.tanh %427 : vector<8x128xf32>
    %434 = vector.extract_strided_slice %432 {offsets = [0, 0], sizes = [8, 32], strides = [1, 1]} : vector<8x128xf32> to vector<8x32xf32>
    %435 = vector.extract_strided_slice %432 {offsets = [0, 32], sizes = [8, 32], strides = [1, 1]} : vector<8x128xf32> to vector<8x32xf32>
    %436 = vector.extract_strided_slice %433 {offsets = [0, 64], sizes = [8, 32], strides = [1, 1]} : vector<8x128xf32> to vector<8x32xf32>
    %437 = vector.extract_strided_slice %432 {offsets = [0, 96], sizes = [8, 32], strides = [1, 1]} : vector<8x128xf32> to vector<8x32xf32>
    %438 = arith.mulf %435, %418 : vector<8x32xf32>
    %439 = arith.mulf %434, %436 : vector<8x32xf32>
    %440 = arith.addf %438, %439 : vector<8x32xf32>
    %441 = math.tanh %440 : vector<8x32xf32>
    %442 = arith.mulf %437, %441 : vector<8x32xf32>
    %443 = arith.truncf %286 : vector<8x32xf32> to vector<8x32xbf16>
    %cst_85 = arith.constant dense<0.000000e+00> : vector<8x128xf32>
    %444 = tpu.matmul %443, %6, %cst_85 {dimension_numbers = #tpu.dot_dimension_numbers<[1], [0], [0], [1], [0, 0, 1, 1], [], []>} : vector<8x32xbf16>, vector<32x128xbf16>, vector<8x128xf32> -> vector<8x128xf32>
    %445 = vector.broadcast %8 : vector<1x128xf32> to vector<8x128xf32>
    %446 = arith.addf %444, %445 : vector<8x128xf32>
    %447 = arith.truncf %442 : vector<8x32xf32> to vector<8x32xbf16>
    %cst_86 = arith.constant dense<0.000000e+00> : vector<8x128xf32>
    %448 = tpu.matmul %447, %4, %cst_86 {dimension_numbers = #tpu.dot_dimension_numbers<[1], [0], [0], [1], [0, 0, 1, 1], [], []>} : vector<8x32xbf16>, vector<32x128xbf16>, vector<8x128xf32> -> vector<8x128xf32>
    %449 = arith.addf %446, %448 : vector<8x128xf32>
    %450 = arith.negf %449 : vector<8x128xf32>
    %451 = math.exp %450 : vector<8x128xf32>
    %cst_87 = arith.constant 1.000000e+00 : f32
    %452 = vector.broadcast %cst_87 : f32 to vector<8x128xf32>
    %453 = arith.addf %452, %451 : vector<8x128xf32>
    %454 = arith.divf %452, %453 : vector<8x128xf32>
    %455 = math.tanh %449 : vector<8x128xf32>
    %456 = vector.extract_strided_slice %454 {offsets = [0, 0], sizes = [8, 32], strides = [1, 1]} : vector<8x128xf32> to vector<8x32xf32>
    %457 = vector.extract_strided_slice %454 {offsets = [0, 32], sizes = [8, 32], strides = [1, 1]} : vector<8x128xf32> to vector<8x32xf32>
    %458 = vector.extract_strided_slice %455 {offsets = [0, 64], sizes = [8, 32], strides = [1, 1]} : vector<8x128xf32> to vector<8x32xf32>
    %459 = vector.extract_strided_slice %454 {offsets = [0, 96], sizes = [8, 32], strides = [1, 1]} : vector<8x128xf32> to vector<8x32xf32>
    %460 = arith.mulf %457, %440 : vector<8x32xf32>
    %461 = arith.mulf %456, %458 : vector<8x32xf32>
    %462 = arith.addf %460, %461 : vector<8x32xf32>
    %463 = math.tanh %462 : vector<8x32xf32>
    %464 = arith.mulf %459, %463 : vector<8x32xf32>
    %465 = arith.truncf %308 : vector<8x32xf32> to vector<8x32xbf16>
    %cst_88 = arith.constant dense<0.000000e+00> : vector<8x128xf32>
    %466 = tpu.matmul %465, %6, %cst_88 {dimension_numbers = #tpu.dot_dimension_numbers<[1], [0], [0], [1], [0, 0, 1, 1], [], []>} : vector<8x32xbf16>, vector<32x128xbf16>, vector<8x128xf32> -> vector<8x128xf32>
    %467 = vector.broadcast %8 : vector<1x128xf32> to vector<8x128xf32>
    %468 = arith.addf %466, %467 : vector<8x128xf32>
    %469 = arith.truncf %464 : vector<8x32xf32> to vector<8x32xbf16>
    %cst_89 = arith.constant dense<0.000000e+00> : vector<8x128xf32>
    %470 = tpu.matmul %469, %4, %cst_89 {dimension_numbers = #tpu.dot_dimension_numbers<[1], [0], [0], [1], [0, 0, 1, 1], [], []>} : vector<8x32xbf16>, vector<32x128xbf16>, vector<8x128xf32> -> vector<8x128xf32>
    %471 = arith.addf %468, %470 : vector<8x128xf32>
    %472 = arith.negf %471 : vector<8x128xf32>
    %473 = math.exp %472 : vector<8x128xf32>
    %cst_90 = arith.constant 1.000000e+00 : f32
    %474 = vector.broadcast %cst_90 : f32 to vector<8x128xf32>
    %475 = arith.addf %474, %473 : vector<8x128xf32>
    %476 = arith.divf %474, %475 : vector<8x128xf32>
    %477 = math.tanh %471 : vector<8x128xf32>
    %478 = vector.extract_strided_slice %476 {offsets = [0, 0], sizes = [8, 32], strides = [1, 1]} : vector<8x128xf32> to vector<8x32xf32>
    %479 = vector.extract_strided_slice %476 {offsets = [0, 32], sizes = [8, 32], strides = [1, 1]} : vector<8x128xf32> to vector<8x32xf32>
    %480 = vector.extract_strided_slice %477 {offsets = [0, 64], sizes = [8, 32], strides = [1, 1]} : vector<8x128xf32> to vector<8x32xf32>
    %481 = vector.extract_strided_slice %476 {offsets = [0, 96], sizes = [8, 32], strides = [1, 1]} : vector<8x128xf32> to vector<8x32xf32>
    %482 = arith.mulf %479, %462 : vector<8x32xf32>
    %483 = arith.mulf %478, %480 : vector<8x32xf32>
    %484 = arith.addf %482, %483 : vector<8x32xf32>
    %485 = math.tanh %484 : vector<8x32xf32>
    %486 = arith.mulf %481, %485 : vector<8x32xf32>
    %487 = arith.truncf %330 : vector<8x32xf32> to vector<8x32xbf16>
    %cst_91 = arith.constant dense<0.000000e+00> : vector<8x128xf32>
    %488 = tpu.matmul %487, %6, %cst_91 {dimension_numbers = #tpu.dot_dimension_numbers<[1], [0], [0], [1], [0, 0, 1, 1], [], []>} : vector<8x32xbf16>, vector<32x128xbf16>, vector<8x128xf32> -> vector<8x128xf32>
    %489 = vector.broadcast %8 : vector<1x128xf32> to vector<8x128xf32>
    %490 = arith.addf %488, %489 : vector<8x128xf32>
    %491 = arith.truncf %486 : vector<8x32xf32> to vector<8x32xbf16>
    %cst_92 = arith.constant dense<0.000000e+00> : vector<8x128xf32>
    %492 = tpu.matmul %491, %4, %cst_92 {dimension_numbers = #tpu.dot_dimension_numbers<[1], [0], [0], [1], [0, 0, 1, 1], [], []>} : vector<8x32xbf16>, vector<32x128xbf16>, vector<8x128xf32> -> vector<8x128xf32>
    %493 = arith.addf %490, %492 : vector<8x128xf32>
    %494 = arith.negf %493 : vector<8x128xf32>
    %495 = math.exp %494 : vector<8x128xf32>
    %cst_93 = arith.constant 1.000000e+00 : f32
    %496 = vector.broadcast %cst_93 : f32 to vector<8x128xf32>
    %497 = arith.addf %496, %495 : vector<8x128xf32>
    %498 = arith.divf %496, %497 : vector<8x128xf32>
    %499 = math.tanh %493 : vector<8x128xf32>
    %500 = vector.extract_strided_slice %498 {offsets = [0, 0], sizes = [8, 32], strides = [1, 1]} : vector<8x128xf32> to vector<8x32xf32>
    %501 = vector.extract_strided_slice %498 {offsets = [0, 32], sizes = [8, 32], strides = [1, 1]} : vector<8x128xf32> to vector<8x32xf32>
    %502 = vector.extract_strided_slice %499 {offsets = [0, 64], sizes = [8, 32], strides = [1, 1]} : vector<8x128xf32> to vector<8x32xf32>
    %503 = vector.extract_strided_slice %498 {offsets = [0, 96], sizes = [8, 32], strides = [1, 1]} : vector<8x128xf32> to vector<8x32xf32>
    %504 = arith.mulf %501, %484 : vector<8x32xf32>
    %505 = arith.mulf %500, %502 : vector<8x32xf32>
    %506 = arith.addf %504, %505 : vector<8x32xf32>
    %507 = math.tanh %506 : vector<8x32xf32>
    %508 = arith.mulf %503, %507 : vector<8x32xf32>
    %509 = arith.truncf %352 : vector<8x32xf32> to vector<8x32xbf16>
    %cst_94 = arith.constant dense<0.000000e+00> : vector<8x128xf32>
    %510 = tpu.matmul %509, %6, %cst_94 {dimension_numbers = #tpu.dot_dimension_numbers<[1], [0], [0], [1], [0, 0, 1, 1], [], []>} : vector<8x32xbf16>, vector<32x128xbf16>, vector<8x128xf32> -> vector<8x128xf32>
    %511 = vector.broadcast %8 : vector<1x128xf32> to vector<8x128xf32>
    %512 = arith.addf %510, %511 : vector<8x128xf32>
    %513 = arith.truncf %508 : vector<8x32xf32> to vector<8x32xbf16>
    %cst_95 = arith.constant dense<0.000000e+00> : vector<8x128xf32>
    %514 = tpu.matmul %513, %4, %cst_95 {dimension_numbers = #tpu.dot_dimension_numbers<[1], [0], [0], [1], [0, 0, 1, 1], [], []>} : vector<8x32xbf16>, vector<32x128xbf16>, vector<8x128xf32> -> vector<8x128xf32>
    %515 = arith.addf %512, %514 : vector<8x128xf32>
    %516 = arith.negf %515 : vector<8x128xf32>
    %517 = math.exp %516 : vector<8x128xf32>
    %cst_96 = arith.constant 1.000000e+00 : f32
    %518 = vector.broadcast %cst_96 : f32 to vector<8x128xf32>
    %519 = arith.addf %518, %517 : vector<8x128xf32>
    %520 = arith.divf %518, %519 : vector<8x128xf32>
    %521 = math.tanh %515 : vector<8x128xf32>
    %522 = vector.extract_strided_slice %520 {offsets = [0, 0], sizes = [8, 32], strides = [1, 1]} : vector<8x128xf32> to vector<8x32xf32>
    %523 = vector.extract_strided_slice %520 {offsets = [0, 32], sizes = [8, 32], strides = [1, 1]} : vector<8x128xf32> to vector<8x32xf32>
    %524 = vector.extract_strided_slice %521 {offsets = [0, 64], sizes = [8, 32], strides = [1, 1]} : vector<8x128xf32> to vector<8x32xf32>
    %525 = vector.extract_strided_slice %520 {offsets = [0, 96], sizes = [8, 32], strides = [1, 1]} : vector<8x128xf32> to vector<8x32xf32>
    %526 = arith.mulf %523, %506 : vector<8x32xf32>
    %527 = arith.mulf %522, %524 : vector<8x32xf32>
    %528 = arith.addf %526, %527 : vector<8x32xf32>
    %529 = math.tanh %528 : vector<8x32xf32>
    %530 = arith.mulf %525, %529 : vector<8x32xf32>
    %531 = arith.truncf %374 : vector<8x32xf32> to vector<8x32xbf16>
    %cst_97 = arith.constant dense<0.000000e+00> : vector<8x128xf32>
    %532 = tpu.matmul %531, %6, %cst_97 {dimension_numbers = #tpu.dot_dimension_numbers<[1], [0], [0], [1], [0, 0, 1, 1], [], []>} : vector<8x32xbf16>, vector<32x128xbf16>, vector<8x128xf32> -> vector<8x128xf32>
    %533 = vector.broadcast %8 : vector<1x128xf32> to vector<8x128xf32>
    %534 = arith.addf %532, %533 : vector<8x128xf32>
    %535 = arith.truncf %530 : vector<8x32xf32> to vector<8x32xbf16>
    %cst_98 = arith.constant dense<0.000000e+00> : vector<8x128xf32>
    %536 = tpu.matmul %535, %4, %cst_98 {dimension_numbers = #tpu.dot_dimension_numbers<[1], [0], [0], [1], [0, 0, 1, 1], [], []>} : vector<8x32xbf16>, vector<32x128xbf16>, vector<8x128xf32> -> vector<8x128xf32>
    %537 = arith.addf %534, %536 : vector<8x128xf32>
    %538 = arith.negf %537 : vector<8x128xf32>
    %539 = math.exp %538 : vector<8x128xf32>
    %cst_99 = arith.constant 1.000000e+00 : f32
    %540 = vector.broadcast %cst_99 : f32 to vector<8x128xf32>
    %541 = arith.addf %540, %539 : vector<8x128xf32>
    %542 = arith.divf %540, %541 : vector<8x128xf32>
    %543 = math.tanh %537 : vector<8x128xf32>
    %544 = vector.extract_strided_slice %542 {offsets = [0, 0], sizes = [8, 32], strides = [1, 1]} : vector<8x128xf32> to vector<8x32xf32>
    %545 = vector.extract_strided_slice %542 {offsets = [0, 32], sizes = [8, 32], strides = [1, 1]} : vector<8x128xf32> to vector<8x32xf32>
    %546 = vector.extract_strided_slice %543 {offsets = [0, 64], sizes = [8, 32], strides = [1, 1]} : vector<8x128xf32> to vector<8x32xf32>
    %547 = vector.extract_strided_slice %542 {offsets = [0, 96], sizes = [8, 32], strides = [1, 1]} : vector<8x128xf32> to vector<8x32xf32>
    %548 = arith.mulf %545, %528 : vector<8x32xf32>
    %549 = arith.mulf %544, %546 : vector<8x32xf32>
    %550 = arith.addf %548, %549 : vector<8x32xf32>
    %551 = math.tanh %550 : vector<8x32xf32>
    %552 = arith.mulf %547, %551 : vector<8x32xf32>
    %553 = arith.truncf %396 : vector<8x32xf32> to vector<8x32xbf16>
    %cst_100 = arith.constant dense<0.000000e+00> : vector<8x128xf32>
    %554 = tpu.matmul %553, %6, %cst_100 {dimension_numbers = #tpu.dot_dimension_numbers<[1], [0], [0], [1], [0, 0, 1, 1], [], []>} : vector<8x32xbf16>, vector<32x128xbf16>, vector<8x128xf32> -> vector<8x128xf32>
    %555 = vector.broadcast %8 : vector<1x128xf32> to vector<8x128xf32>
    %556 = arith.addf %554, %555 : vector<8x128xf32>
    %557 = arith.truncf %552 : vector<8x32xf32> to vector<8x32xbf16>
    %cst_101 = arith.constant dense<0.000000e+00> : vector<8x128xf32>
    %558 = tpu.matmul %557, %4, %cst_101 {dimension_numbers = #tpu.dot_dimension_numbers<[1], [0], [0], [1], [0, 0, 1, 1], [], []>} : vector<8x32xbf16>, vector<32x128xbf16>, vector<8x128xf32> -> vector<8x128xf32>
    %559 = arith.addf %556, %558 : vector<8x128xf32>
    %560 = arith.negf %559 : vector<8x128xf32>
    %561 = math.exp %560 : vector<8x128xf32>
    %cst_102 = arith.constant 1.000000e+00 : f32
    %562 = vector.broadcast %cst_102 : f32 to vector<8x128xf32>
    %563 = arith.addf %562, %561 : vector<8x128xf32>
    %564 = arith.divf %562, %563 : vector<8x128xf32>
    %565 = math.tanh %559 : vector<8x128xf32>
    %566 = vector.extract_strided_slice %564 {offsets = [0, 0], sizes = [8, 32], strides = [1, 1]} : vector<8x128xf32> to vector<8x32xf32>
    %567 = vector.extract_strided_slice %564 {offsets = [0, 32], sizes = [8, 32], strides = [1, 1]} : vector<8x128xf32> to vector<8x32xf32>
    %568 = vector.extract_strided_slice %565 {offsets = [0, 64], sizes = [8, 32], strides = [1, 1]} : vector<8x128xf32> to vector<8x32xf32>
    %569 = vector.extract_strided_slice %564 {offsets = [0, 96], sizes = [8, 32], strides = [1, 1]} : vector<8x128xf32> to vector<8x32xf32>
    %570 = arith.mulf %567, %550 : vector<8x32xf32>
    %571 = arith.mulf %566, %568 : vector<8x32xf32>
    %572 = arith.addf %570, %571 : vector<8x32xf32>
    %573 = math.tanh %572 : vector<8x32xf32>
    %574 = arith.mulf %569, %573 : vector<8x32xf32>
    %575 = tpu.concatenate %420, %442, %464, %486, %508, %530, %552, %574 in 0 : vector<8x32xf32>, vector<8x32xf32>, vector<8x32xf32>, vector<8x32xf32>, vector<8x32xf32>, vector<8x32xf32>, vector<8x32xf32>, vector<8x32xf32> -> vector<64x32xf32>
    %576 = arith.truncf %575 : vector<64x32xf32> to vector<64x32xbf16>
    %c0_103 = arith.constant 0 : index
    %c0_104 = arith.constant 0 : index
    %577 = vector.load %arg11[%c0_103, %c0_104] : memref<32x32xbf16, #tpu.memory_space<vmem>>, vector<32x32xbf16>
    %cst_105 = arith.constant dense<0.000000e+00> : vector<64x32xf32>
    %578 = tpu.matmul %576, %577, %cst_105 {dimension_numbers = #tpu.dot_dimension_numbers<[1], [0], [0], [1], [0, 0, 1, 1], [], []>} : vector<64x32xbf16>, vector<32x32xbf16>, vector<64x32xf32> -> vector<64x32xf32>
    %c0_106 = arith.constant 0 : index
    %c0_107 = arith.constant 0 : index
    %579 = vector.load %arg12[%c0_106, %c0_107] : memref<1x32xf32, #tpu.memory_space<vmem>>, vector<1x32xf32>
    %580 = vector.broadcast %579 : vector<1x32xf32> to vector<64x32xf32>
    %581 = arith.addf %578, %580 : vector<64x32xf32>
    %582 = arith.negf %581 : vector<64x32xf32>
    %583 = math.exp %582 : vector<64x32xf32>
    %cst_108 = arith.constant 1.000000e+00 : f32
    %584 = vector.broadcast %cst_108 : f32 to vector<64x32xf32>
    %585 = arith.addf %584, %583 : vector<64x32xf32>
    %586 = arith.divf %584, %585 : vector<64x32xf32>
    %587 = arith.mulf %581, %586 : vector<64x32xf32>
    %588 = arith.truncf %587 : vector<64x32xf32> to vector<64x32xbf16>
    %c0_109 = arith.constant 0 : index
    %c0_110 = arith.constant 0 : index
    %589 = vector.load %arg13[%c0_109, %c0_110] : memref<32x32xbf16, #tpu.memory_space<vmem>>, vector<32x32xbf16>
    %cst_111 = arith.constant dense<0.000000e+00> : vector<64x32xf32>
    %590 = tpu.matmul %588, %589, %cst_111 {dimension_numbers = #tpu.dot_dimension_numbers<[1], [0], [0], [1], [0, 0, 1, 1], [], []>} : vector<64x32xbf16>, vector<32x32xbf16>, vector<64x32xf32> -> vector<64x32xf32>
    %c0_112 = arith.constant 0 : index
    %c0_113 = arith.constant 0 : index
    %591 = vector.load %arg14[%c0_112, %c0_113] : memref<1x32xf32, #tpu.memory_space<vmem>>, vector<1x32xf32>
    %592 = vector.broadcast %591 : vector<1x32xf32> to vector<64x32xf32>
    %593 = arith.addf %590, %592 : vector<64x32xf32>
    %594 = arith.negf %593 : vector<64x32xf32>
    %595 = math.exp %594 : vector<64x32xf32>
    %cst_114 = arith.constant 1.000000e+00 : f32
    %596 = vector.broadcast %cst_114 : f32 to vector<64x32xf32>
    %597 = arith.addf %596, %595 : vector<64x32xf32>
    %598 = arith.divf %596, %597 : vector<64x32xf32>
    %599 = arith.mulf %593, %598 : vector<64x32xf32>
    %600 = arith.truncf %599 : vector<64x32xf32> to vector<64x32xbf16>
    %c0_115 = arith.constant 0 : index
    %c0_116 = arith.constant 0 : index
    %601 = vector.load %arg15[%c0_115, %c0_116] : memref<32x128xbf16, #tpu.memory_space<vmem>>, vector<32x128xbf16>
    %cst_117 = arith.constant dense<0.000000e+00> : vector<64x128xf32>
    %602 = tpu.matmul %600, %601, %cst_117 {dimension_numbers = #tpu.dot_dimension_numbers<[1], [0], [0], [1], [0, 0, 1, 1], [], []>} : vector<64x32xbf16>, vector<32x128xbf16>, vector<64x128xf32> -> vector<64x128xf32>
    %c0_118 = arith.constant 0 : index
    %c0_119 = arith.constant 0 : index
    %603 = vector.load %arg16[%c0_118, %c0_119] : memref<1x128xf32, #tpu.memory_space<vmem>>, vector<1x128xf32>
    %604 = vector.broadcast %603 : vector<1x128xf32> to vector<64x128xf32>
    %605 = arith.addf %602, %604 : vector<64x128xf32>
    %606 = tpu.iota {dimensions = array<i32: 1>} : vector<64x128xi32>
    %c64_i32 = arith.constant 64 : i32
    %607 = vector.broadcast %c64_i32 : i32 to vector<64x128xi32>
    %608 = arith.cmpi slt, %606, %607 : vector<64x128xi32>
    %cst_120 = arith.constant -1.000000e+30 : f32
    %609 = vector.broadcast %cst_120 : f32 to vector<64x128xf32>
    %610 = arith.select %608, %605, %609 : vector<64x128xi1>, vector<64x128xf32>
    %cst_121 = arith.constant dense<0xFF800000> : vector<64xf32>
    %611 = vector.multi_reduction <maximumf>, %610, %cst_121 [1] : vector<64x128xf32> to vector<64xf32>
    %612 = vector.shape_cast %611 : vector<64xf32> to vector<64x1xf32>
    %613 = vector.broadcast %612 : vector<64x1xf32> to vector<64x128xf32>
    %614 = arith.subf %610, %613 : vector<64x128xf32>
    %615 = math.exp %614 : vector<64x128xf32>
    %cst_122 = arith.constant dense<0.000000e+00> : vector<64xf32>
    %616 = vector.multi_reduction <add>, %615, %cst_122 [1] : vector<64x128xf32> to vector<64xf32>
    %617 = vector.shape_cast %616 : vector<64xf32> to vector<64x1xf32>
    %618 = vector.broadcast %617 : vector<64x1xf32> to vector<64x128xf32>
    %619 = arith.divf %615, %618 : vector<64x128xf32>
    %620 = vector.shape_cast %619 : vector<64x128xf32> to vector<8x8x128xf32>
    %c0_123 = arith.constant 0 : index
    %c0_124 = arith.constant 0 : index
    %c0_125 = arith.constant 0 : index
    %621 = vector.load %arg17[%c0_123, %c0_124, %c0_125] : memref<8x8x128xf32, #tpu.memory_space<vmem>>, vector<8x8x128xf32>
    tpu.vector_store %arg17[%c0_123, %c0_124, %c0_125], %620 {strides = array<i32>} : memref<8x8x128xf32, #tpu.memory_space<vmem>>, vector<8x8x128xf32>,
    return
  }
  func.func @transform_0(%arg0: i32) -> (i32, i32, i32) {
    %c0_i32 = arith.constant 0 : i32
    %c0_i32_0 = arith.constant 0 : i32
    %c0_i32_1 = arith.constant 0 : i32
    return %c0_i32, %arg0, %c0_i32_0 : i32, i32, i32
  }
  func.func @transform_1(%arg0: i32) -> (i32, i32) {
    %c0_i32 = arith.constant 0 : i32
    %c0_i32_0 = arith.constant 0 : i32
    %c0_i32_1 = arith.constant 0 : i32
    return %c0_i32, %c0_i32_0 : i32, i32
  }
  func.func @transform_2(%arg0: i32) -> (i32, i32) {
    %c0_i32 = arith.constant 0 : i32
    %c0_i32_0 = arith.constant 0 : i32
    %c0_i32_1 = arith.constant 0 : i32
    return %c0_i32, %c0_i32_0 : i32, i32
  }
  func.func @transform_3(%arg0: i32) -> (i32, i32) {
    %c0_i32 = arith.constant 0 : i32
    %c0_i32_0 = arith.constant 0 : i32
    %c0_i32_1 = arith.constant 0 : i32
    return %c0_i32, %c0_i32_0 : i32, i32
  }
  func.func @transform_4(%arg0: i32) -> (i32, i32) {
    %c0_i32 = arith.constant 0 : i32
    %c0_i32_0 = arith.constant 0 : i32
    %c0_i32_1 = arith.constant 0 : i32
    return %c0_i32, %c0_i32_0 : i32, i32
  }
  func.func @transform_5(%arg0: i32) -> (i32, i32) {
    %c0_i32 = arith.constant 0 : i32
    %c0_i32_0 = arith.constant 0 : i32
    %c0_i32_1 = arith.constant 0 : i32
    return %c0_i32, %c0_i32_0 : i32, i32
  }
  func.func @transform_6(%arg0: i32) -> (i32, i32) {
    %c0_i32 = arith.constant 0 : i32
    %c0_i32_0 = arith.constant 0 : i32
    %c0_i32_1 = arith.constant 0 : i32
    return %c0_i32, %c0_i32_0 : i32, i32
  }
  func.func @transform_7(%arg0: i32) -> (i32, i32) {
    %c0_i32 = arith.constant 0 : i32
    %c0_i32_0 = arith.constant 0 : i32
    %c0_i32_1 = arith.constant 0 : i32
    return %c0_i32, %c0_i32_0 : i32, i32
  }
  func.func @transform_8(%arg0: i32) -> (i32, i32) {
    %c0_i32 = arith.constant 0 : i32
    %c0_i32_0 = arith.constant 0 : i32
    %c0_i32_1 = arith.constant 0 : i32
    return %c0_i32, %c0_i32_0 : i32, i32
  }
  func.func @transform_9(%arg0: i32) -> (i32, i32) {
    %c0_i32 = arith.constant 0 : i32
    %c0_i32_0 = arith.constant 0 : i32
    %c0_i32_1 = arith.constant 0 : i32
    return %c0_i32, %c0_i32_0 : i32, i32
  }
  func.func @transform_10(%arg0: i32) -> (i32, i32) {
    %c0_i32 = arith.constant 0 : i32
    %c0_i32_0 = arith.constant 0 : i32
    %c0_i32_1 = arith.constant 0 : i32
    return %c0_i32, %c0_i32_0 : i32, i32
  }
  func.func @transform_11(%arg0: i32) -> (i32, i32) {
    %c0_i32 = arith.constant 0 : i32
    %c0_i32_0 = arith.constant 0 : i32
    %c0_i32_1 = arith.constant 0 : i32
    return %c0_i32, %c0_i32_0 : i32, i32
  }
  func.func @transform_12(%arg0: i32) -> (i32, i32) {
    %c0_i32 = arith.constant 0 : i32
    %c0_i32_0 = arith.constant 0 : i32
    %c0_i32_1 = arith.constant 0 : i32
    return %c0_i32, %c0_i32_0 : i32, i32
  }
  func.func @transform_13(%arg0: i32) -> (i32, i32) {
    %c0_i32 = arith.constant 0 : i32
    %c0_i32_0 = arith.constant 0 : i32
    %c0_i32_1 = arith.constant 0 : i32
    return %c0_i32, %c0_i32_0 : i32, i32
  }
  func.func @transform_14(%arg0: i32) -> (i32, i32) {
    %c0_i32 = arith.constant 0 : i32
    %c0_i32_0 = arith.constant 0 : i32
    %c0_i32_1 = arith.constant 0 : i32
    return %c0_i32, %c0_i32_0 : i32, i32
  }
  func.func @transform_15(%arg0: i32) -> (i32, i32) {
    %c0_i32 = arith.constant 0 : i32
    %c0_i32_0 = arith.constant 0 : i32
    %c0_i32_1 = arith.constant 0 : i32
    return %c0_i32, %c0_i32_0 : i32, i32
  }
  func.func @transform_16(%arg0: i32) -> (i32, i32, i32) {
    %c0_i32 = arith.constant 0 : i32
    %c0_i32_0 = arith.constant 0 : i32
    %c0_i32_1 = arith.constant 0 : i32
    return %c0_i32, %arg0, %c0_i32_0 : i32, i32, i32
  }
}

</mosaic_0001>

<llo_original>
// kernel: rnn_forward.1
$region0: #{rnn_forward.1}
  #allocation0 [shape = 'u32[]', space=smem, size = 0x4, offset = 0x4, fixed_abs, tag = 'smem constant byte address 0x4 - core index']
  #allocation1 [shape = 'u32[144,128]{1,0:T(1,128)}', space=vmem, size = 0x12000, scoped, tag = 'internal scratch']
  %s0 = inlined_call_operand.vmem [shape: f32[8,8,8], index: 0, kind: input, shape index: {}]
  %s1 = inlined_call_operand.vmem [shape: f32[1,128], index: 1, kind: input, shape index: {}]
  %s2 = inlined_call_operand.hbm [shape: f32[1,128], index: 2, kind: input, shape index: {}]
  %s3 = inlined_call_operand.vmem [shape: bf16[32,128], index: 3, kind: input, shape index: {}]
  %s4 = inlined_call_operand.vmem [shape: bf16[32,128], index: 4, kind: input, shape index: {}]
  %s5 = inlined_call_operand.vmem [shape: bf16[32,128], index: 5, kind: input, shape index: {}]
  %s6 = inlined_call_operand.hbm [shape: f32[1,128], index: 6, kind: input, shape index: {}]
  %s7 = inlined_call_operand.vmem [shape: bf16[32,128], index: 7, kind: input, shape index: {}]
  %s8 = inlined_call_operand.vmem [shape: bf16[32,128], index: 8, kind: input, shape index: {}]
  %s9 = inlined_call_operand.hbm [shape: f32[1,128], index: 9, kind: input, shape index: {}]
  %s10 = inlined_call_operand.vmem [shape: bf16[32,32], index: 10, kind: input, shape index: {}]
  %s11 = inlined_call_operand.hbm [shape: f32[1,32], index: 11, kind: input, shape index: {}]
  %s12 = inlined_call_operand.vmem [shape: bf16[32,32], index: 12, kind: input, shape index: {}]
  %s13 = inlined_call_operand.hbm [shape: f32[1,32], index: 13, kind: input, shape index: {}]
  %s14 = inlined_call_operand.vmem [shape: bf16[32,128], index: 14, kind: input, shape index: {}]
  %s15 = inlined_call_operand.hbm [shape: f32[1,128], index: 15, kind: input, shape index: {}]
  %s16 = inlined_call_operand.vmem [shape: f32[8,8,128], index: 16, kind: output, shape index: {}]
  %s17 = sld [smem:[#allocation0]]
  $region98: #{rnn_forward.1} parent=0
    _
  %s19 = ssub.s32 1, %s17
  %s20 = scalar_select 0, %s19, %s17
  $region1: #{rnn_forward.1} parent=0
    #allocation2 [shape = 'u8[512]{0}', space=vmem, size = 0x400, scoped, tag = 'input window, operand 2, single buffered']
    #allocation3 [shape = 's32[1]{0}', space=sflag, size = 0x4, scoped, tag = 'scoped memory for rnn_forward.1']
    #allocation4 [shape = 'u8[512]{0}', space=vmem, size = 0x400, scoped, tag = 'input window, operand 6, single buffered']
    #allocation5 [shape = 's32[1]{0}', space=sflag, size = 0x4, scoped, tag = 'scoped memory for rnn_forward.1']
    #allocation6 [shape = 'u8[512]{0}', space=vmem, size = 0x400, scoped, tag = 'input window, operand 9, single buffered']
    #allocation7 [shape = 'u8[512]{0}', space=vmem, size = 0x400, scoped, tag = 'input window, operand 11, single buffered']
    #allocation8 [shape = 's32[1]{0}', space=sflag, size = 0x4, scoped, tag = 'scoped memory for rnn_forward.1']
    #allocation9 [shape = 'u8[512]{0}', space=vmem, size = 0x400, scoped, tag = 'input window, operand 13, single buffered']
    #allocation10 [shape = 'u8[512]{0}', space=vmem, size = 0x400, scoped, tag = 'input window, operand 15, single buffered']
    #allocation11 [shape = 's32[1]{0}', space=sflag, size = 0x4, scoped, tag = 'scoped memory for rnn_forward.1']
    %21 = vsyncpa [#allocation3], 0
    %22 = vsyncpa [#allocation5], 0
    %23 = vsyncpa [#allocation8], 0
    %24 = vsyncpa [#allocation11], 0
    // Predicated region
    $region2: #{rnn_forward.1} parent=1 // pred_check
      _
    $region3: #{rnn_forward.1} parent=1 // pred_check_branch
      %26 = sbr.rel (0) target = $region5
    $region4: #{rnn_forward.1} parent=1 // pred_region
      _
    $region5: #{rnn_forward.1} parent=1 // pred_fallthru
      _
    // Predicated region
    $region6: #{rnn_forward.1} parent=1 // pred_check
      _
    $region7: #{rnn_forward.1} parent=1 // pred_check_branch
      %28 = sbr.rel (0) target = $region9
    $region8: #{rnn_forward.1} parent=1 // pred_region
      _
    $region9: #{rnn_forward.1} parent=1 // pred_fallthru
      _
    // Predicated region
    $region10: #{rnn_forward.1} parent=1 // pred_check
      _
    $region11: #{rnn_forward.1} parent=1 // pred_check_branch
      %30 = sbr.rel (0) target = $region13
    $region12: #{rnn_forward.1} parent=1 // pred_region
      %s32 = ssub.s32 16, 16
      %33 = vsyncadd [#allocation3], %s32
      %s35 = sshll.u32 [#allocation2], 4
      %s36 = int_to_ptr.vmem [resolvable:$true] %s35
      %38 = dma.hbm_to_vmem [thread:$0]  %s2, 16, %s36, [#allocation3]
    $region13: #{rnn_forward.1} parent=1 // pred_fallthru
      _
    // Predicated region
    $region14: #{rnn_forward.1} parent=1 // pred_check
      _
    $region15: #{rnn_forward.1} parent=1 // pred_check_branch
      %40 = sbr.rel (0) target = $region17
    $region16: #{rnn_forward.1} parent=1 // pred_region
      _
    $region17: #{rnn_forward.1} parent=1 // pred_fallthru
      _
    // Predicated region
    $region18: #{rnn_forward.1} parent=1 // pred_check
      _
    $region19: #{rnn_forward.1} parent=1 // pred_check_branch
      %42 = sbr.rel (0) target = $region21
    $region20: #{rnn_forward.1} parent=1 // pred_region
      _
    $region21: #{rnn_forward.1} parent=1 // pred_fallthru
      _
    // Predicated region
    $region22: #{rnn_forward.1} parent=1 // pred_check
      _
    $region23: #{rnn_forward.1} parent=1 // pred_check_branch
      %44 = sbr.rel (0) target = $region25
    $region24: #{rnn_forward.1} parent=1 // pred_region
      _
    $region25: #{rnn_forward.1} parent=1 // pred_fallthru
      _
    // Predicated region
    $region26: #{rnn_forward.1} parent=1 // pred_check
      _
    $region27: #{rnn_forward.1} parent=1 // pred_check_branch
      %46 = sbr.rel (0) target = $region29
    $region28: #{rnn_forward.1} parent=1 // pred_region
      %s48 = ssub.s32 16, 16
      %49 = vsyncadd [#allocation5], %s48
      %s51 = sshll.u32 [#allocation4], 4
      %s52 = int_to_ptr.vmem [resolvable:$true] %s51
      %54 = dma.hbm_to_vmem [thread:$0]  %s6, 16, %s52, [#allocation5]
    $region29: #{rnn_forward.1} parent=1 // pred_fallthru
      _
    // Predicated region
    $region30: #{rnn_forward.1} parent=1 // pred_check
      _
    $region31: #{rnn_forward.1} parent=1 // pred_check_branch
      %56 = sbr.rel (0) target = $region33
    $region32: #{rnn_forward.1} parent=1 // pred_region
      _
    $region33: #{rnn_forward.1} parent=1 // pred_fallthru
      _
    // Predicated region
    $region34: #{rnn_forward.1} parent=1 // pred_check
      _
    $region35: #{rnn_forward.1} parent=1 // pred_check_branch
      %58 = sbr.rel (0) target = $region37
    $region36: #{rnn_forward.1} parent=1 // pred_region
      _
    $region37: #{rnn_forward.1} parent=1 // pred_fallthru
      _
    // Predicated region
    $region38: #{rnn_forward.1} parent=1 // pred_check
      _
    $region39: #{rnn_forward.1} parent=1 // pred_check_branch
      %60 = sbr.rel (0) target = $region41
    $region40: #{rnn_forward.1} parent=1 // pred_region
      %s62 = ssub.s32 16, 16
      %63 = vsyncadd [#allocation5], %s62
      %s65 = sshll.u32 [#allocation6], 4
      %s66 = int_to_ptr.vmem [resolvable:$true] %s65
      %68 = dma.hbm_to_vmem [thread:$0]  %s9, 16, %s66, [#allocation5]
    $region41: #{rnn_forward.1} parent=1 // pred_fallthru
      _
    // Predicated region
    $region42: #{rnn_forward.1} parent=1 // pred_check
      _
    $region43: #{rnn_forward.1} parent=1 // pred_check_branch
      %70 = sbr.rel (0) target = $region45
    $region44: #{rnn_forward.1} parent=1 // pred_region
      _
    $region45: #{rnn_forward.1} parent=1 // pred_fallthru
      _
    // Predicated region
    $region46: #{rnn_forward.1} parent=1 // pred_check
      _
    $region47: #{rnn_forward.1} parent=1 // pred_check_branch
      %72 = sbr.rel (0) target = $region49
    $region48: #{rnn_forward.1} parent=1 // pred_region
      %s74 = ssub.s32 16, 16
      %75 = vsyncadd [#allocation8], %s74
      %s77 = sshll.u32 [#allocation7], 4
      %s78 = int_to_ptr.vmem [resolvable:$true] %s77
      %80 = dma.hbm_to_vmem [thread:$0]  %s11, 16, %s78, [#allocation8]
    $region49: #{rnn_forward.1} parent=1 // pred_fallthru
      _
    // Predicated region
    $region50: #{rnn_forward.1} parent=1 // pred_check
      _
    $region51: #{rnn_forward.1} parent=1 // pred_check_branch
      %82 = sbr.rel (0) target = $region53
    $region52: #{rnn_forward.1} parent=1 // pred_region
      _
    $region53: #{rnn_forward.1} parent=1 // pred_fallthru
      _
    // Predicated region
    $region54: #{rnn_forward.1} parent=1 // pred_check
      _
    $region55: #{rnn_forward.1} parent=1 // pred_check_branch
      %84 = sbr.rel (0) target = $region57
    $region56: #{rnn_forward.1} parent=1 // pred_region
      %s86 = ssub.s32 16, 16
      %87 = vsyncadd [#allocation8], %s86
      %s89 = sshll.u32 [#allocation9], 4
      %s90 = int_to_ptr.vmem [resolvable:$true] %s89
      %92 = dma.hbm_to_vmem [thread:$0]  %s13, 16, %s90, [#allocation8]
    $region57: #{rnn_forward.1} parent=1 // pred_fallthru
      _
    // Predicated region
    $region58: #{rnn_forward.1} parent=1 // pred_check
      _
    $region59: #{rnn_forward.1} parent=1 // pred_check_branch
      %94 = sbr.rel (0) target = $region61
    $region60: #{rnn_forward.1} parent=1 // pred_region
      _
    $region61: #{rnn_forward.1} parent=1 // pred_fallthru
      _
    // Predicated region
    $region62: #{rnn_forward.1} parent=1 // pred_check
      _
    $region63: #{rnn_forward.1} parent=1 // pred_check_branch
      %96 = sbr.rel (0) target = $region65
    $region64: #{rnn_forward.1} parent=1 // pred_region
      %s98 = ssub.s32 16, 16
      %99 = vsyncadd [#allocation11], %s98
      %s101 = sshll.u32 [#allocation10], 4
      %s102 = int_to_ptr.vmem [resolvable:$true] %s101
      %104 = dma.hbm_to_vmem [thread:$0]  %s15, 16, %s102, [#allocation11]
    $region65: #{rnn_forward.1} parent=1 // pred_fallthru
      _
    // Predicated region
    $region66: #{rnn_forward.1} parent=1 // pred_check
      _
    $region67: #{rnn_forward.1} parent=1 // pred_check_branch
      %106 = sbr.rel (0) target = $region69
    $region68: #{rnn_forward.1} parent=1 // pred_region
      %107 = dma.done [#allocation3], 16
    $region69: #{rnn_forward.1} parent=1 // pred_fallthru
      _
    // Predicated region
    $region70: #{rnn_forward.1} parent=1 // pred_check
      _
    $region71: #{rnn_forward.1} parent=1 // pred_check_branch
      %109 = sbr.rel (0) target = $region73
    $region72: #{rnn_forward.1} parent=1 // pred_region
      %110 = dma.done [#allocation5], 16
    $region73: #{rnn_forward.1} parent=1 // pred_fallthru
      _
    // Predicated region
    $region74: #{rnn_forward.1} parent=1 // pred_check
      _
    $region75: #{rnn_forward.1} parent=1 // pred_check_branch
      %112 = sbr.rel (0) target = $region77
    $region76: #{rnn_forward.1} parent=1 // pred_region
      %113 = dma.done [#allocation5], 16
    $region77: #{rnn_forward.1} parent=1 // pred_fallthru
      _
    // Predicated region
    $region78: #{rnn_forward.1} parent=1 // pred_check
      _
    $region79: #{rnn_forward.1} parent=1 // pred_check_branch
      %115 = sbr.rel (0) target = $region81
    $region80: #{rnn_forward.1} parent=1 // pred_region
      %116 = dma.done [#allocation8], 16
    $region81: #{rnn_forward.1} parent=1 // pred_fallthru
      _
    // Predicated region
    $region82: #{rnn_forward.1} parent=1 // pred_check
      _
    $region83: #{rnn_forward.1} parent=1 // pred_check_branch
      %118 = sbr.rel (0) target = $region85
    $region84: #{rnn_forward.1} parent=1 // pred_region
      %119 = dma.done [#allocation8], 16
    $region85: #{rnn_forward.1} parent=1 // pred_fallthru
      _
    // Predicated region
    $region86: #{rnn_forward.1} parent=1 // pred_check
      _
    $region87: #{rnn_forward.1} parent=1 // pred_check_branch
      %121 = sbr.rel (0) target = $region89
    $region88: #{rnn_forward.1} parent=1 // pred_region
      %122 = dma.done [#allocation11], 16
    $region89: #{rnn_forward.1} parent=1 // pred_fallthru
      _
    %v124 = vld [vmem:[%s1] sm:$0x1]
    %v125 = vld [vmem:[#allocation2] sm:$0x1]
    %v126 = vld [vmem:[%s3] sm:$0xf]
    %v127 = vld [vmem:[%s3 + $0x4] sm:$0xf]
    %v128 = vld [vmem:[%s3 + $0x8] sm:$0xf]
    %v129 = vld [vmem:[%s3 + $0xc] sm:$0xf]
    %v130 = vld [vmem:[%s5] sm:$0xf]
    %v131 = vld [vmem:[%s5 + $0x4] sm:$0xf]
    %v132 = vld [vmem:[%s5 + $0x8] sm:$0xf]
    %v133 = vld [vmem:[%s5 + $0xc] sm:$0xf]
    %v134 = vld [vmem:[%s8] sm:$0xf]
    %v135 = vld [vmem:[%s8 + $0x4] sm:$0xf]
    %v136 = vld [vmem:[%s8 + $0x8] sm:$0xf]
    %v137 = vld [vmem:[%s8 + $0xc] sm:$0xf]
    %v138 = vld [vmem:[%s4] sm:$0xf]
    %v139 = vld [vmem:[%s4 + $0x4] sm:$0xf]
    %v140 = vld [vmem:[%s4 + $0x8] sm:$0xf]
    %v141 = vld [vmem:[%s4 + $0xc] sm:$0xf]
    %v142 = vld [vmem:[%s7] sm:$0xf]
    %v143 = vld [vmem:[%s7 + $0x4] sm:$0xf]
    %v144 = vld [vmem:[%s7 + $0x8] sm:$0xf]
    %v145 = vld [vmem:[%s7 + $0xc] sm:$0xf]
    %v146 = vld [vmem:[#allocation4] sm:$0x1]
    %v147 = vld [vmem:[#allocation6] sm:$0x1]
    %v148 = vld [vmem:[%s0] sm:$0xff]
    %150 = vset.pattern.permute.xlu0 0
    %151 = vperm.xlu0 %150, %v148
    %v152 = vpop.permute.xlu0 %151
    %v155 = vlaneseq
    %v156 = vshrl.u32 %v155, 7
    %v157 = vsub.s32 0, %v156
    %v158 = vrot.slane %v124, %v157
    %v160 = vmul.f32 %v152, %v158
    %v162 = vlaneseq
    %v163 = vshrl.u32 %v162, 7
    %v164 = vsub.s32 0, %v163
    %v165 = vrot.slane %v125, %v164
    %v167 = vadd.f32 %v160, %v165
    %v172 = vunpack.c.l.b16 %v126
    %v173 = vunpack.c.l.b16 %v127
    %v174 = vunpack.c.l.b16 %v128
    %v175 = vunpack.c.l.b16 %v129
    %v176 = vpack.c.b16 %v173, %v172
    %v177 = vpack.c.b16 %v175, %v174
    %vm180 = vcmask 261120
    %v182 = vsel %vm180, 0, 0
    %184 = vmatprep.subr.bf16.mxu0 0
    %185 = vmatpush1.bf16.msra.mxu0 %v176
    %186 = vmatprep.subr.bf16.mxu0 0
    %187 = vmatpush1.bf16.msra.mxu0 %v177
    %188 = vmatprep.subr.bf16.mxu0 0
    %189 = vmatpush1.bf16.msra.mxu0 0
    %190 = vmatprep.subr.bf16.mxu0 0
    %191 = vmatpush1.bf16.msra.mxu0 0
    %192 = vmatprep.subr.bf16.mxu0 0
    %193 = vmatpush1.bf16.msra.mxu0 0
    %194 = vmatprep.subr.bf16.mxu0 0
    %195 = vmatpush1.bf16.msra.mxu0 0
    %196 = vmatprep.subr.bf16.mxu0 0
    %197 = vmatpush1.bf16.msra.mxu0 0
    %198 = vmatprep.subr.bf16.mxu0 0
    %199 = vmatpush1.bf16.msra.mxu0 0
    %200 = vmatprep.subr.bf16.mxu0 0
    %201 = vmatpush1.bf16.msra.mxu0 0
    %202 = vmatprep.subr.bf16.mxu0 0
    %203 = vmatpush1.bf16.msra.mxu0 0
    %204 = vmatprep.subr.bf16.mxu0 0
    %205 = vmatpush1.bf16.msra.mxu0 0
    %206 = vmatprep.subr.bf16.mxu0 0
    %207 = vmatpush1.bf16.msra.mxu0 0
    %208 = vmatprep.subr.bf16.mxu0 0
    %209 = vmatpush1.bf16.msra.mxu0 0
    %210 = vmatprep.subr.bf16.mxu0 0
    %211 = vmatpush1.bf16.msra.mxu0 0
    %212 = vmatprep.subr.bf16.mxu0 0
    %213 = vmatpush1.bf16.msra.mxu0 0
    %214 = vmatprep.subr.bf16.mxu0 0
    %215 = vmatpush1.bf16.msra.mxu0 0
    %216 = vmatprep.mubr.bf16.mxu0 0
    %217 = vmatmul.mubr.bf16.gmra.mrb[0].mxu0 %v182
    %v218 = vpop.f32.mrb[0].mxu0
    %v219 = vadd.f32 0.0, %v218
    %v220 = vpop.f32.mrb[0].mxu0
    %v221 = vpop.f32.mrb[0].mxu0
    %v222 = vpop.f32.mrb[0].mxu0
    %223 = vdwg.mxu0
    %v224 = vadd.f32 %v167, %v219
    %v225 = vxor.u32 %v224, 2147483648
    %v226 = vmul.f32 %v225, 1.442695
    %v227 = vpow.pop %v226
    %v228 = vadd.f32 %v227, 1.0
    %v229 = vrcp.pop %v228
    %v230 = vmul.f32 1.0, %v229
    %v231 = vtanh.pop %v224
    %v232 = vmul.f32 %v230, 0.0
    %234 = vrot.lane.b32.xlu0 %v231, 64
    %v235 = vpop.permute.xlu0 %234
    %v237 = vmul.f32 %v230, %v235
    %239 = vrot.lane.b32.xlu0 %v237, 32
    %v240 = vpop.permute.xlu0 %239
    %v242 = vadd.f32 %v232, %v240
    %v243 = vtanh.pop %v242
    %245 = vrot.lane.b32.xlu0 %v243, 64
    %v246 = vpop.permute.xlu0 %245
    %v248 = vmul.f32 %v230, %v246
    %s249 = scalar_lea.vmem %s0, 8
    %v250 = vld [vmem:[%s249] sm:$0xff]
    %252 = vset.pattern.permute.xlu0 0
    %253 = vperm.xlu0 %252, %v250
    %v254 = vpop.permute.xlu0 %253
    %v256 = vmul.f32 %v254, %v158
    %v257 = vadd.f32 %v256, %v165
    %v258 = vpack.c.bf16 %v248, %v248
    %260 = vrot.lane.b32.xlu0 %v258, 32
    %v261 = vpop.permute.xlu0 %260
    %v263 = vsel %vm180, %v261, 0
    %265 = vmatprep.subr.bf16.mxu0 0
    %266 = vmatpush1.bf16.msra.mxu0 %v176
    %267 = vmatprep.subr.bf16.mxu0 0
    %268 = vmatpush1.bf16.msra.mxu0 %v177
    %269 = vmatprep.subr.bf16.mxu0 0
    %270 = vmatpush1.bf16.msra.mxu0 0
    %271 = vmatprep.subr.bf16.mxu0 0
    %272 = vmatpush1.bf16.msra.mxu0 0
    %273 = vmatprep.subr.bf16.mxu0 0
    %274 = vmatpush1.bf16.msra.mxu0 0
    %275 = vmatprep.subr.bf16.mxu0 0
    %276 = vmatpush1.bf16.msra.mxu0 0
    %277 = vmatprep.subr.bf16.mxu0 0
    %278 = vmatpush1.bf16.msra.mxu0 0
    %279 = vmatprep.subr.bf16.mxu0 0
    %280 = vmatpush1.bf16.msra.mxu0 0
    %281 = vmatprep.subr.bf16.mxu0 0
    %282 = vmatpush1.bf16.msra.mxu0 0
    %283 = vmatprep.subr.bf16.mxu0 0
    %284 = vmatpush1.bf16.msra.mxu0 0
    %285 = vmatprep.subr.bf16.mxu0 0
    %286 = vmatpush1.bf16.msra.mxu0 0
    %287 = vmatprep.subr.bf16.mxu0 0
    %288 = vmatpush1.bf16.msra.mxu0 0
    %289 = vmatprep.subr.bf16.mxu0 0
    %290 = vmatpush1.bf16.msra.mxu0 0
    %291 = vmatprep.subr.bf16.mxu0 0
    %292 = vmatpush1.bf16.msra.mxu0 0
    %293 = vmatprep.subr.bf16.mxu0 0
    %294 = vmatpush1.bf16.msra.mxu0 0
    %295 = vmatprep.subr.bf16.mxu0 0
    %296 = vmatpush1.bf16.msra.mxu0 0
    %297 = vmatprep.mubr.bf16.mxu0 0
    %298 = vmatmul.mubr.bf16.gmra.mrb[0].mxu0 %v263
    %v299 = vpop.f32.mrb[0].mxu0
    %v300 = vadd.f32 0.0, %v299
    %v301 = vpop.f32.mrb[0].mxu0
    %v302 = vpop.f32.mrb[0].mxu0
    %v303 = vpop.f32.mrb[0].mxu0
    %304 = vdwg.mxu0
    %v305 = vadd.f32 %v257, %v300
    %v306 = vxor.u32 %v305, 2147483648
    %v307 = vmul.f32 %v306, 1.442695
    %v308 = vpow.pop %v307
    %v309 = vadd.f32 %v308, 1.0
    %v310 = vrcp.pop %v309
    %v311 = vmul.f32 1.0, %v310
    %v312 = vtanh.pop %v305
    %v313 = vmul.f32 %v311, %v242
    %315 = vrot.lane.b32.xlu0 %v312, 64
    %v316 = vpop.permute.xlu0 %315
    %v318 = vmul.f32 %v311, %v316
    %320 = vrot.lane.b32.xlu0 %v318, 32
    %v321 = vpop.permute.xlu0 %320
    %v323 = vadd.f32 %v313, %v321
    %v324 = vtanh.pop %v323
    %326 = vrot.lane.b32.xlu0 %v324, 64
    %v327 = vpop.permute.xlu0 %326
    %v329 = vmul.f32 %v311, %v327
    %s330 = scalar_lea.vmem %s0, 16
    %v331 = vld [vmem:[%s330] sm:$0xff]
    %333 = vset.pattern.permute.xlu0 0
    %334 = vperm.xlu0 %333, %v331
    %v335 = vpop.permute.xlu0 %334
    %v337 = vmul.f32 %v335, %v158
    %v338 = vadd.f32 %v337, %v165
    %v339 = vpack.c.bf16 %v329, %v329
    %341 = vrot.lane.b32.xlu0 %v339, 32
    %v342 = vpop.permute.xlu0 %341
    %v344 = vsel %vm180, %v342, 0
    %346 = vmatprep.subr.bf16.mxu0 0
    %347 = vmatpush1.bf16.msra.mxu0 %v176
    %348 = vmatprep.subr.bf16.mxu0 0
    %349 = vmatpush1.bf16.msra.mxu0 %v177
    %350 = vmatprep.subr.bf16.mxu0 0
    %351 = vmatpush1.bf16.msra.mxu0 0
    %352 = vmatprep.subr.bf16.mxu0 0
    %353 = vmatpush1.bf16.msra.mxu0 0
    %354 = vmatprep.subr.bf16.mxu0 0
    %355 = vmatpush1.bf16.msra.mxu0 0
    %356 = vmatprep.subr.bf16.mxu0 0
    %357 = vmatpush1.bf16.msra.mxu0 0
    %358 = vmatprep.subr.bf16.mxu0 0
    %359 = vmatpush1.bf16.msra.mxu0 0
    %360 = vmatprep.subr.bf16.mxu0 0
    %361 = vmatpush1.bf16.msra.mxu0 0
    %362 = vmatprep.subr.bf16.mxu0 0
    %363 = vmatpush1.bf16.msra.mxu0 0
    %364 = vmatprep.subr.bf16.mxu0 0
    %365 = vmatpush1.bf16.msra.mxu0 0
    %366 = vmatprep.subr.bf16.mxu0 0
    %367 = vmatpush1.bf16.msra.mxu0 0
    %368 = vmatprep.subr.bf16.mxu0 0
    %369 = vmatpush1.bf16.msra.mxu0 0
    %370 = vmatprep.subr.bf16.mxu0 0
    %371 = vmatpush1.bf16.msra.mxu0 0
    %372 = vmatprep.subr.bf16.mxu0 0
    %373 = vmatpush1.bf16.msra.mxu0 0
    %374 = vmatprep.subr.bf16.mxu0 0
    %375 = vmatpush1.bf16.msra.mxu0 0
    %376 = vmatprep.subr.bf16.mxu0 0
    %377 = vmatpush1.bf16.msra.mxu0 0
    %378 = vmatprep.mubr.bf16.mxu0 0
    %379 = vmatmul.mubr.bf16.gmra.mrb[0].mxu0 %v344
    %v380 = vpop.f32.mrb[0].mxu0
    %v381 = vadd.f32 0.0, %v380
    %v382 = vpop.f32.mrb[0].mxu0
    %v383 = vpop.f32.mrb[0].mxu0
    %v384 = vpop.f32.mrb[0].mxu0
    %385 = vdwg.mxu0
    %v386 = vadd.f32 %v338, %v381
    %v387 = vxor.u32 %v386, 2147483648
    %v388 = vmul.f32 %v387, 1.442695
    %v389 = vpow.pop %v388
    %v390 = vadd.f32 %v389, 1.0
    %v391 = vrcp.pop %v390
    %v392 = vmul.f32 1.0, %v391
    %v393 = vtanh.pop %v386
    %v394 = vmul.f32 %v392, %v323
    %396 = vrot.lane.b32.xlu0 %v393, 64
    %v397 = vpop.permute.xlu0 %396
    %v399 = vmul.f32 %v392, %v397
    %401 = vrot.lane.b32.xlu0 %v399, 32
    %v402 = vpop.permute.xlu0 %401
    %v404 = vadd.f32 %v394, %v402
    %v405 = vtanh.pop %v404
    %407 = vrot.lane.b32.xlu0 %v405, 64
    %v408 = vpop.permute.xlu0 %407
    %v410 = vmul.f32 %v392, %v408
    %s411 = scalar_lea.vmem %s0, 24
    %v412 = vld [vmem:[%s411] sm:$0xff]
    %414 = vset.pattern.permute.xlu0 0
    %415 = vperm.xlu0 %414, %v412
    %v416 = vpop.permute.xlu0 %415
    %v418 = vmul.f32 %v416, %v158
    %v419 = vadd.f32 %v418, %v165
    %v420 = vpack.c.bf16 %v410, %v410
    %422 = vrot.lane.b32.xlu0 %v420, 32
    %v423 = vpop.permute.xlu0 %422
    %v425 = vsel %vm180, %v423, 0
    %427 = vmatprep.subr.bf16.mxu0 0
    %428 = vmatpush1.bf16.msra.mxu0 %v176
    %429 = vmatprep.subr.bf16.mxu0 0
    %430 = vmatpush1.bf16.msra.mxu0 %v177
    %431 = vmatprep.subr.bf16.mxu0 0
    %432 = vmatpush1.bf16.msra.mxu0 0
    %433 = vmatprep.subr.bf16.mxu0 0
    %434 = vmatpush1.bf16.msra.mxu0 0
    %435 = vmatprep.subr.bf16.mxu0 0
    %436 = vmatpush1.bf16.msra.mxu0 0
    %437 = vmatprep.subr.bf16.mxu0 0
    %438 = vmatpush1.bf16.msra.mxu0 0
    %439 = vmatprep.subr.bf16.mxu0 0
    %440 = vmatpush1.bf16.msra.mxu0 0
    %441 = vmatprep.subr.bf16.mxu0 0
    %442 = vmatpush1.bf16.msra.mxu0 0
    %443 = vmatprep.subr.bf16.mxu0 0
    %444 = vmatpush1.bf16.msra.mxu0 0
    %445 = vmatprep.subr.bf16.mxu0 0
    %446 = vmatpush1.bf16.msra.mxu0 0
    %447 = vmatprep.subr.bf16.mxu0 0
    %448 = vmatpush1.bf16.msra.mxu0 0
    %449 = vmatprep.subr.bf16.mxu0 0
    %450 = vmatpush1.bf16.msra.mxu0 0
    %451 = vmatprep.subr.bf16.mxu0 0
    %452 = vmatpush1.bf16.msra.mxu0 0
    %453 = vmatprep.subr.bf16.mxu0 0
    %454 = vmatpush1.bf16.msra.mxu0 0
    %455 = vmatprep.subr.bf16.mxu0 0
    %456 = vmatpush1.bf16.msra.mxu0 0
    %457 = vmatprep.subr.bf16.mxu0 0
    %458 = vmatpush1.bf16.msra.mxu0 0
    %459 = vmatprep.mubr.bf16.mxu0 0
    %460 = vmatmul.mubr.bf16.gmra.mrb[0].mxu0 %v425
    %v461 = vpop.f32.mrb[0].mxu0
    %v462 = vadd.f32 0.0, %v461
    %v463 = vpop.f32.mrb[0].mxu0
    %v464 = vpop.f32.mrb[0].mxu0
    %v465 = vpop.f32.mrb[0].mxu0
    %466 = vdwg.mxu0
    %v467 = vadd.f32 %v419, %v462
    %v468 = vxor.u32 %v467, 2147483648
    %v469 = vmul.f32 %v468, 1.442695
    %v470 = vpow.pop %v469
    %v471 = vadd.f32 %v470, 1.0
    %v472 = vrcp.pop %v471
    %v473 = vmul.f32 1.0, %v472
    %v474 = vtanh.pop %v467
    %v475 = vmul.f32 %v473, %v404
    %477 = vrot.lane.b32.xlu0 %v474, 64
    %v478 = vpop.permute.xlu0 %477
    %v480 = vmul.f32 %v473, %v478
    %482 = vrot.lane.b32.xlu0 %v480, 32
    %v483 = vpop.permute.xlu0 %482
    %v485 = vadd.f32 %v475, %v483
    %v486 = vtanh.pop %v485
    %488 = vrot.lane.b32.xlu0 %v486, 64
    %v489 = vpop.permute.xlu0 %488
    %v491 = vmul.f32 %v473, %v489
    %s492 = scalar_lea.vmem %s0, 32
    %v493 = vld [vmem:[%s492] sm:$0xff]
    %495 = vset.pattern.permute.xlu0 0
    %496 = vperm.xlu0 %495, %v493
    %v497 = vpop.permute.xlu0 %496
    %v499 = vmul.f32 %v497, %v158
    %v500 = vadd.f32 %v499, %v165
    %v501 = vpack.c.bf16 %v491, %v491
    %503 = vrot.lane.b32.xlu0 %v501, 32
    %v504 = vpop.permute.xlu0 %503
    %v506 = vsel %vm180, %v504, 0
    %508 = vmatprep.subr.bf16.mxu0 0
    %509 = vmatpush1.bf16.msra.mxu0 %v176
    %510 = vmatprep.subr.bf16.mxu0 0
    %511 = vmatpush1.bf16.msra.mxu0 %v177
    %512 = vmatprep.subr.bf16.mxu0 0
    %513 = vmatpush1.bf16.msra.mxu0 0
    %514 = vmatprep.subr.bf16.mxu0 0
    %515 = vmatpush1.bf16.msra.mxu0 0
    %516 = vmatprep.subr.bf16.mxu0 0
    %517 = vmatpush1.bf16.msra.mxu0 0
    %518 = vmatprep.subr.bf16.mxu0 0
    %519 = vmatpush1.bf16.msra.mxu0 0
    %520 = vmatprep.subr.bf16.mxu0 0
    %521 = vmatpush1.bf16.msra.mxu0 0
    %522 = vmatprep.subr.bf16.mxu0 0
    %523 = vmatpush1.bf16.msra.mxu0 0
    %524 = vmatprep.subr.bf16.mxu0 0
    %525 = vmatpush1.bf16.msra.mxu0 0
    %526 = vmatprep.subr.bf16.mxu0 0
    %527 = vmatpush1.bf16.msra.mxu0 0
    %528 = vmatprep.subr.bf16.mxu0 0
    %529 = vmatpush1.bf16.msra.mxu0 0
    %530 = vmatprep.subr.bf16.mxu0 0
    %531 = vmatpush1.bf16.msra.mxu0 0
    %532 = vmatprep.subr.bf16.mxu0 0
    %533 = vmatpush1.bf16.msra.mxu0 0
    %534 = vmatprep.subr.bf16.mxu0 0
    %535 = vmatpush1.bf16.msra.mxu0 0
    %536 = vmatprep.subr.bf16.mxu0 0
    %537 = vmatpush1.bf16.msra.mxu0 0
    %538 = vmatprep.subr.bf16.mxu0 0
    %539 = vmatpush1.bf16.msra.mxu0 0
    %540 = vmatprep.mubr.bf16.mxu0 0
    %541 = vmatmul.mubr.bf16.gmra.mrb[0].mxu0 %v506
    %v542 = vpop.f32.mrb[0].mxu0
    %v543 = vadd.f32 0.0, %v542
    %v544 = vpop.f32.mrb[0].mxu0
    %v545 = vpop.f32.mrb[0].mxu0
    %v546 = vpop.f32.mrb[0].mxu0
    %547 = vdwg.mxu0
    %v548 = vadd.f32 %v500, %v543
    %v549 = vxor.u32 %v548, 2147483648
    %v550 = vmul.f32 %v549, 1.442695
    %v551 = vpow.pop %v550
    %v552 = vadd.f32 %v551, 1.0
    %v553 = vrcp.pop %v552
    %v554 = vmul.f32 1.0, %v553
    %v555 = vtanh.pop %v548
    %v556 = vmul.f32 %v554, %v485
    %558 = vrot.lane.b32.xlu0 %v555, 64
    %v559 = vpop.permute.xlu0 %558
    %v561 = vmul.f32 %v554, %v559
    %563 = vrot.lane.b32.xlu0 %v561, 32
    %v564 = vpop.permute.xlu0 %563
    %v566 = vadd.f32 %v556, %v564
    %v567 = vtanh.pop %v566
    %569 = vrot.lane.b32.xlu0 %v567, 64
    %v570 = vpop.permute.xlu0 %569
    %v572 = vmul.f32 %v554, %v570
    %s573 = scalar_lea.vmem %s0, 40
    %v574 = vld [vmem:[%s573] sm:$0xff]
    %576 = vset.pattern.permute.xlu0 0
    %577 = vperm.xlu0 %576, %v574
    %v578 = vpop.permute.xlu0 %577
    %v580 = vmul.f32 %v578, %v158
    %v581 = vadd.f32 %v580, %v165
    %v582 = vpack.c.bf16 %v572, %v572
    %584 = vrot.lane.b32.xlu0 %v582, 32
    %v585 = vpop.permute.xlu0 %584
    %v587 = vsel %vm180, %v585, 0
    %589 = vmatprep.subr.bf16.mxu0 0
    %590 = vmatpush1.bf16.msra.mxu0 %v176
    %591 = vmatprep.subr.bf16.mxu0 0
    %592 = vmatpush1.bf16.msra.mxu0 %v177
    %593 = vmatprep.subr.bf16.mxu0 0
    %594 = vmatpush1.bf16.msra.mxu0 0
    %595 = vmatprep.subr.bf16.mxu0 0
    %596 = vmatpush1.bf16.msra.mxu0 0
    %597 = vmatprep.subr.bf16.mxu0 0
    %598 = vmatpush1.bf16.msra.mxu0 0
    %599 = vmatprep.subr.bf16.mxu0 0
    %600 = vmatpush1.bf16.msra.mxu0 0
    %601 = vmatprep.subr.bf16.mxu0 0
    %602 = vmatpush1.bf16.msra.mxu0 0
    %603 = vmatprep.subr.bf16.mxu0 0
    %604 = vmatpush1.bf16.msra.mxu0 0
    %605 = vmatprep.subr.bf16.mxu0 0
    %606 = vmatpush1.bf16.msra.mxu0 0
    %607 = vmatprep.subr.bf16.mxu0 0
    %608 = vmatpush1.bf16.msra.mxu0 0
    %609 = vmatprep.subr.bf16.mxu0 0
    %610 = vmatpush1.bf16.msra.mxu0 0
    %611 = vmatprep.subr.bf16.mxu0 0
    %612 = vmatpush1.bf16.msra.mxu0 0
    %613 = vmatprep.subr.bf16.mxu0 0
    %614 = vmatpush1.bf16.msra.mxu0 0
    %615 = vmatprep.subr.bf16.mxu0 0
    %616 = vmatpush1.bf16.msra.mxu0 0
    %617 = vmatprep.subr.bf16.mxu0 0
    %618 = vmatpush1.bf16.msra.mxu0 0
    %619 = vmatprep.subr.bf16.mxu0 0
    %620 = vmatpush1.bf16.msra.mxu0 0
    %621 = vmatprep.mubr.bf16.mxu0 0
    %622 = vmatmul.mubr.bf16.gmra.mrb[0].mxu0 %v587
    %v623 = vpop.f32.mrb[0].mxu0
    %v624 = vadd.f32 0.0, %v623
    %v625 = vpop.f32.mrb[0].mxu0
    %v626 = vpop.f32.mrb[0].mxu0
    %v627 = vpop.f32.mrb[0].mxu0
    %628 = vdwg.mxu0
    %v629 = vadd.f32 %v581, %v624
    %v630 = vxor.u32 %v629, 2147483648
    %v631 = vmul.f32 %v630, 1.442695
    %v632 = vpow.pop %v631
    %v633 = vadd.f32 %v632, 1.0
    %v634 = vrcp.pop %v633
    %v635 = vmul.f32 1.0, %v634
    %v636 = vtanh.pop %v629
    %v637 = vmul.f32 %v635, %v566
    %639 = vrot.lane.b32.xlu0 %v636, 64
    %v640 = vpop.permute.xlu0 %639
    %v642 = vmul.f32 %v635, %v640
    %644 = vrot.lane.b32.xlu0 %v642, 32
    %v645 = vpop.permute.xlu0 %644
    %v647 = vadd.f32 %v637, %v645
    %v648 = vtanh.pop %v647
    %650 = vrot.lane.b32.xlu0 %v648, 64
    %v651 = vpop.permute.xlu0 %650
    %v653 = vmul.f32 %v635, %v651
    %s654 = scalar_lea.vmem %s0, 48
    %v655 = vld [vmem:[%s654] sm:$0xff]
    %657 = vset.pattern.permute.xlu0 0
    %658 = vperm.xlu0 %657, %v655
    %v659 = vpop.permute.xlu0 %658
    %v661 = vmul.f32 %v659, %v158
    %v662 = vadd.f32 %v661, %v165
    %v663 = vpack.c.bf16 %v653, %v653
    %665 = vrot.lane.b32.xlu0 %v663, 32
    %v666 = vpop.permute.xlu0 %665
    %v668 = vsel %vm180, %v666, 0
    %670 = vmatprep.subr.bf16.mxu0 0
    %671 = vmatpush1.bf16.msra.mxu0 %v176
    %672 = vmatprep.subr.bf16.mxu0 0
    %673 = vmatpush1.bf16.msra.mxu0 %v177
    %674 = vmatprep.subr.bf16.mxu0 0
    %675 = vmatpush1.bf16.msra.mxu0 0
    %676 = vmatprep.subr.bf16.mxu0 0
    %677 = vmatpush1.bf16.msra.mxu0 0
    %678 = vmatprep.subr.bf16.mxu0 0
    %679 = vmatpush1.bf16.msra.mxu0 0
    %680 = vmatprep.subr.bf16.mxu0 0
    %681 = vmatpush1.bf16.msra.mxu0 0
    %682 = vmatprep.subr.bf16.mxu0 0
    %683 = vmatpush1.bf16.msra.mxu0 0
    %684 = vmatprep.subr.bf16.mxu0 0
    %685 = vmatpush1.bf16.msra.mxu0 0
    %686 = vmatprep.subr.bf16.mxu0 0
    %687 = vmatpush1.bf16.msra.mxu0 0
    %688 = vmatprep.subr.bf16.mxu0 0
    %689 = vmatpush1.bf16.msra.mxu0 0
    %690 = vmatprep.subr.bf16.mxu0 0
    %691 = vmatpush1.bf16.msra.mxu0 0
    %692 = vmatprep.subr.bf16.mxu0 0
    %693 = vmatpush1.bf16.msra.mxu0 0
    %694 = vmatprep.subr.bf16.mxu0 0
    %695 = vmatpush1.bf16.msra.mxu0 0
    %696 = vmatprep.subr.bf16.mxu0 0
    %697 = vmatpush1.bf16.msra.mxu0 0
    %698 = vmatprep.subr.bf16.mxu0 0
    %699 = vmatpush1.bf16.msra.mxu0 0
    %700 = vmatprep.subr.bf16.mxu0 0
    %701 = vmatpush1.bf16.msra.mxu0 0
    %702 = vmatprep.mubr.bf16.mxu0 0
    %703 = vmatmul.mubr.bf16.gmra.mrb[0].mxu0 %v668
    %v704 = vpop.f32.mrb[0].mxu0
    %v705 = vadd.f32 0.0, %v704
    %v706 = vpop.f32.mrb[0].mxu0
    %v707 = vpop.f32.mrb[0].mxu0
    %v708 = vpop.f32.mrb[0].mxu0
    %709 = vdwg.mxu0
    %v710 = vadd.f32 %v662, %v705
    %v711 = vxor.u32 %v710, 2147483648
    %v712 = vmul.f32 %v711, 1.442695
    %v713 = vpow.pop %v712
    %v714 = vadd.f32 %v713, 1.0
    %v715 = vrcp.pop %v714
    %v716 = vmul.f32 1.0, %v715
    %v717 = vtanh.pop %v710
    %v718 = vmul.f32 %v716, %v647
    %720 = vrot.lane.b32.xlu0 %v717, 64
    %v721 = vpop.permute.xlu0 %720
    %v723 = vmul.f32 %v716, %v721
    %725 = vrot.lane.b32.xlu0 %v723, 32
    %v726 = vpop.permute.xlu0 %725
    %v728 = vadd.f32 %v718, %v726
    %v729 = vtanh.pop %v728
    %731 = vrot.lane.b32.xlu0 %v729, 64
    %v732 = vpop.permute.xlu0 %731
    %v734 = vmul.f32 %v716, %v732
    %s735 = scalar_lea.vmem %s0, 56
    %v736 = vld [vmem:[%s735] sm:$0xff]
    %738 = vset.pattern.permute.xlu0 0
    %739 = vperm.xlu0 %738, %v736
    %v740 = vpop.permute.xlu0 %739
    %v742 = vmul.f32 %v740, %v158
    %v743 = vadd.f32 %v742, %v165
    %v744 = vpack.c.bf16 %v734, %v734
    %746 = vrot.lane.b32.xlu0 %v744, 32
    %v747 = vpop.permute.xlu0 %746
    %v749 = vsel %vm180, %v747, 0
    %751 = vmatprep.subr.bf16.mxu0 0
    %752 = vmatpush1.bf16.msra.mxu0 %v176
    %753 = vmatprep.subr.bf16.mxu0 0
    %754 = vmatpush1.bf16.msra.mxu0 %v177
    %755 = vmatprep.subr.bf16.mxu0 0
    %756 = vmatpush1.bf16.msra.mxu0 0
    %757 = vmatprep.subr.bf16.mxu0 0
    %758 = vmatpush1.bf16.msra.mxu0 0
    %759 = vmatprep.subr.bf16.mxu0 0
    %760 = vmatpush1.bf16.msra.mxu0 0
    %761 = vmatprep.subr.bf16.mxu0 0
    %762 = vmatpush1.bf16.msra.mxu0 0
    %763 = vmatprep.subr.bf16.mxu0 0
    %764 = vmatpush1.bf16.msra.mxu0 0
    %765 = vmatprep.subr.bf16.mxu0 0
    %766 = vmatpush1.bf16.msra.mxu0 0
    %767 = vmatprep.subr.bf16.mxu0 0
    %768 = vmatpush1.bf16.msra.mxu0 0
    %769 = vmatprep.subr.bf16.mxu0 0
    %770 = vmatpush1.bf16.msra.mxu0 0
    %771 = vmatprep.subr.bf16.mxu0 0
    %772 = vmatpush1.bf16.msra.mxu0 0
    %773 = vmatprep.subr.bf16.mxu0 0
    %774 = vmatpush1.bf16.msra.mxu0 0
    %775 = vmatprep.subr.bf16.mxu0 0
    %776 = vmatpush1.bf16.msra.mxu0 0
    %777 = vmatprep.subr.bf16.mxu0 0
    %778 = vmatpush1.bf16.msra.mxu0 0
    %779 = vmatprep.subr.bf16.mxu0 0
    %780 = vmatpush1.bf16.msra.mxu0 0
    %781 = vmatprep.subr.bf16.mxu0 0
    %782 = vmatpush1.bf16.msra.mxu0 0
    %783 = vmatprep.mubr.bf16.mxu0 0
    %784 = vmatmul.mubr.bf16.gmra.mrb[0].mxu0 %v749
    %v785 = vpop.f32.mrb[0].mxu0
    %v786 = vadd.f32 0.0, %v785
    %v787 = vpop.f32.mrb[0].mxu0
    %v788 = vpop.f32.mrb[0].mxu0
    %v789 = vpop.f32.mrb[0].mxu0
    %790 = vdwg.mxu0
    %v791 = vadd.f32 %v743, %v786
    %v792 = vxor.u32 %v791, 2147483648
    %v793 = vmul.f32 %v792, 1.442695
    %v794 = vpow.pop %v793
    %v795 = vadd.f32 %v794, 1.0
    %v796 = vrcp.pop %v795
    %v797 = vmul.f32 1.0, %v796
    %v798 = vtanh.pop %v791
    %v799 = vmul.f32 %v797, %v728
    %801 = vrot.lane.b32.xlu0 %v798, 64
    %v802 = vpop.permute.xlu0 %801
    %v804 = vmul.f32 %v797, %v802
    %806 = vrot.lane.b32.xlu0 %v804, 32
    %v807 = vpop.permute.xlu0 %806
    %v809 = vadd.f32 %v799, %v807
    %v810 = vtanh.pop %v809
    %812 = vrot.lane.b32.xlu0 %v810, 64
    %v813 = vpop.permute.xlu0 %812
    %v815 = vmul.f32 %v797, %v813
    %v817 = vlaneseq
    %v818 = vshrl.u32 %v817, 7
    %v819 = vsub.s32 0, %v818
    %v820 = vrot.slane %v146, %v819
    %v826 = vunpack.c.l.b16 %v138
    %v827 = vunpack.c.l.b16 %v139
    %v828 = vunpack.c.l.b16 %v140
    %v829 = vunpack.c.l.b16 %v141
    %v830 = vpack.c.b16 %v827, %v826
    %v831 = vpack.c.b16 %v829, %v828
    %834 = vmatprep.subr.bf16.mxu0 0
    %835 = vmatpush1.bf16.msra.mxu0 %v830
    %836 = vmatprep.subr.bf16.mxu0 0
    %837 = vmatpush1.bf16.msra.mxu0 %v831
    %838 = vmatprep.subr.bf16.mxu0 0
    %839 = vmatpush1.bf16.msra.mxu0 0
    %840 = vmatprep.subr.bf16.mxu0 0
    %841 = vmatpush1.bf16.msra.mxu0 0
    %842 = vmatprep.subr.bf16.mxu0 0
    %843 = vmatpush1.bf16.msra.mxu0 0
    %844 = vmatprep.subr.bf16.mxu0 0
    %845 = vmatpush1.bf16.msra.mxu0 0
    %846 = vmatprep.subr.bf16.mxu0 0
    %847 = vmatpush1.bf16.msra.mxu0 0
    %848 = vmatprep.subr.bf16.mxu0 0
    %849 = vmatpush1.bf16.msra.mxu0 0
    %850 = vmatprep.subr.bf16.mxu0 0
    %851 = vmatpush1.bf16.msra.mxu0 0
    %852 = vmatprep.subr.bf16.mxu0 0
    %853 = vmatpush1.bf16.msra.mxu0 0
    %854 = vmatprep.subr.bf16.mxu0 0
    %855 = vmatpush1.bf16.msra.mxu0 0
    %856 = vmatprep.subr.bf16.mxu0 0
    %857 = vmatpush1.bf16.msra.mxu0 0
    %858 = vmatprep.subr.bf16.mxu0 0
    %859 = vmatpush1.bf16.msra.mxu0 0
    %860 = vmatprep.subr.bf16.mxu0 0
    %861 = vmatpush1.bf16.msra.mxu0 0
    %862 = vmatprep.subr.bf16.mxu0 0
    %863 = vmatpush1.bf16.msra.mxu0 0
    %864 = vmatprep.subr.bf16.mxu0 0
    %865 = vmatpush1.bf16.msra.mxu0 0
    %866 = vmatprep.mubr.bf16.mxu0 0
    %867 = vmatmul.mubr.bf16.gmra.mrb[0].mxu0 %v263
    %v868 = vpop.f32.mrb[0].mxu0
    %v869 = vadd.f32 %v820, %v868
    %v870 = vpop.f32.mrb[0].mxu0
    %v871 = vpop.f32.mrb[0].mxu0
    %v872 = vpop.f32.mrb[0].mxu0
    %873 = vdwg.mxu0
    %v878 = vunpack.c.l.b16 %v130
    %v879 = vunpack.c.l.b16 %v131
    %v880 = vunpack.c.l.b16 %v132
    %v881 = vunpack.c.l.b16 %v133
    %v882 = vpack.c.b16 %v879, %v878
    %v883 = vpack.c.b16 %v881, %v880
    %886 = vmatprep.subr.bf16.mxu0 0
    %887 = vmatpush1.bf16.msra.mxu0 %v882
    %888 = vmatprep.subr.bf16.mxu0 0
    %889 = vmatpush1.bf16.msra.mxu0 %v883
    %890 = vmatprep.subr.bf16.mxu0 0
    %891 = vmatpush1.bf16.msra.mxu0 0
    %892 = vmatprep.subr.bf16.mxu0 0
    %893 = vmatpush1.bf16.msra.mxu0 0
    %894 = vmatprep.subr.bf16.mxu0 0
    %895 = vmatpush1.bf16.msra.mxu0 0
    %896 = vmatprep.subr.bf16.mxu0 0
    %897 = vmatpush1.bf16.msra.mxu0 0
    %898 = vmatprep.subr.bf16.mxu0 0
    %899 = vmatpush1.bf16.msra.mxu0 0
    %900 = vmatprep.subr.bf16.mxu0 0
    %901 = vmatpush1.bf16.msra.mxu0 0
    %902 = vmatprep.subr.bf16.mxu0 0
    %903 = vmatpush1.bf16.msra.mxu0 0
    %904 = vmatprep.subr.bf16.mxu0 0
    %905 = vmatpush1.bf16.msra.mxu0 0
    %906 = vmatprep.subr.bf16.mxu0 0
    %907 = vmatpush1.bf16.msra.mxu0 0
    %908 = vmatprep.subr.bf16.mxu0 0
    %909 = vmatpush1.bf16.msra.mxu0 0
    %910 = vmatprep.subr.bf16.mxu0 0
    %911 = vmatpush1.bf16.msra.mxu0 0
    %912 = vmatprep.subr.bf16.mxu0 0
    %913 = vmatpush1.bf16.msra.mxu0 0
    %914 = vmatprep.subr.bf16.mxu0 0
    %915 = vmatpush1.bf16.msra.mxu0 0
    %916 = vmatprep.subr.bf16.mxu0 0
    %917 = vmatpush1.bf16.msra.mxu0 0
    %918 = vmatprep.mubr.bf16.mxu0 0
    %919 = vmatmul.mubr.bf16.gmra.mrb[0].mxu0 %v182
    %v920 = vpop.f32.mrb[0].mxu0
    %v921 = vadd.f32 0.0, %v920
    %v922 = vpop.f32.mrb[0].mxu0
    %v923 = vpop.f32.mrb[0].mxu0
    %v924 = vpop.f32.mrb[0].mxu0
    %925 = vdwg.mxu0
    %v926 = vadd.f32 %v869, %v921
    %v927 = vxor.u32 %v926, 2147483648
    %v928 = vmul.f32 %v927, 1.442695
    %v929 = vpow.pop %v928
    %v930 = vadd.f32 %v929, 1.0
    %v931 = vrcp.pop %v930
    %v932 = vmul.f32 1.0, %v931
    %v933 = vtanh.pop %v926
    %v934 = vmul.f32 %v932, 0.0
    %936 = vrot.lane.b32.xlu0 %v933, 64
    %v937 = vpop.permute.xlu0 %936
    %v939 = vmul.f32 %v932, %v937
    %941 = vrot.lane.b32.xlu0 %v939, 32
    %v942 = vpop.permute.xlu0 %941
    %v944 = vadd.f32 %v934, %v942
    %v945 = vtanh.pop %v944
    %947 = vrot.lane.b32.xlu0 %v945, 64
    %v948 = vpop.permute.xlu0 %947
    %v950 = vmul.f32 %v932, %v948
    %951 = vmatprep.subr.bf16.mxu0 0
    %952 = vmatpush1.bf16.msra.mxu0 %v830
    %953 = vmatprep.subr.bf16.mxu0 0
    %954 = vmatpush1.bf16.msra.mxu0 %v831
    %955 = vmatprep.subr.bf16.mxu0 0
    %956 = vmatpush1.bf16.msra.mxu0 0
    %957 = vmatprep.subr.bf16.mxu0 0
    %958 = vmatpush1.bf16.msra.mxu0 0
    %959 = vmatprep.subr.bf16.mxu0 0
    %960 = vmatpush1.bf16.msra.mxu0 0
    %961 = vmatprep.subr.bf16.mxu0 0
    %962 = vmatpush1.bf16.msra.mxu0 0
    %963 = vmatprep.subr.bf16.mxu0 0
    %964 = vmatpush1.bf16.msra.mxu0 0
    %965 = vmatprep.subr.bf16.mxu0 0
    %966 = vmatpush1.bf16.msra.mxu0 0
    %967 = vmatprep.subr.bf16.mxu0 0
    %968 = vmatpush1.bf16.msra.mxu0 0
    %969 = vmatprep.subr.bf16.mxu0 0
    %970 = vmatpush1.bf16.msra.mxu0 0
    %971 = vmatprep.subr.bf16.mxu0 0
    %972 = vmatpush1.bf16.msra.mxu0 0
    %973 = vmatprep.subr.bf16.mxu0 0
    %974 = vmatpush1.bf16.msra.mxu0 0
    %975 = vmatprep.subr.bf16.mxu0 0
    %976 = vmatpush1.bf16.msra.mxu0 0
    %977 = vmatprep.subr.bf16.mxu0 0
    %978 = vmatpush1.bf16.msra.mxu0 0
    %979 = vmatprep.subr.bf16.mxu0 0
    %980 = vmatpush1.bf16.msra.mxu0 0
    %981 = vmatprep.subr.bf16.mxu0 0
    %982 = vmatpush1.bf16.msra.mxu0 0
    %983 = vmatprep.mubr.bf16.mxu0 0
    %984 = vmatmul.mubr.bf16.gmra.mrb[0].mxu0 %v344
    %v985 = vpop.f32.mrb[0].mxu0
    %v986 = vadd.f32 %v820, %v985
    %v987 = vpop.f32.mrb[0].mxu0
    %v988 = vpop.f32.mrb[0].mxu0
    %v989 = vpop.f32.mrb[0].mxu0
    %990 = vdwg.mxu0
    %v991 = vpack.c.bf16 %v950, %v950
    %993 = vrot.lane.b32.xlu0 %v991, 32
    %v994 = vpop.permute.xlu0 %993
    %v996 = vsel %vm180, %v994, 0
    %998 = vmatprep.subr.bf16.mxu0 0
    %999 = vmatpush1.bf16.msra.mxu0 %v882
    %1000 = vmatprep.subr.bf16.mxu0 0
    %1001 = vmatpush1.bf16.msra.mxu0 %v883
    %1002 = vmatprep.subr.bf16.mxu0 0
    %1003 = vmatpush1.bf16.msra.mxu0 0
    %1004 = vmatprep.subr.bf16.mxu0 0
    %1005 = vmatpush1.bf16.msra.mxu0 0
    %1006 = vmatprep.subr.bf16.mxu0 0
    %1007 = vmatpush1.bf16.msra.mxu0 0
    %1008 = vmatprep.subr.bf16.mxu0 0
    %1009 = vmatpush1.bf16.msra.mxu0 0
    %1010 = vmatprep.subr.bf16.mxu0 0
    %1011 = vmatpush1.bf16.msra.mxu0 0
    %1012 = vmatprep.subr.bf16.mxu0 0
    %1013 = vmatpush1.bf16.msra.mxu0 0
    %1014 = vmatprep.subr.bf16.mxu0 0
    %1015 = vmatpush1.bf16.msra.mxu0 0
    %1016 = vmatprep.subr.bf16.mxu0 0
    %1017 = vmatpush1.bf16.msra.mxu0 0
    %1018 = vmatprep.subr.bf16.mxu0 0
    %1019 = vmatpush1.bf16.msra.mxu0 0
    %1020 = vmatprep.subr.bf16.mxu0 0
    %1021 = vmatpush1.bf16.msra.mxu0 0
    %1022 = vmatprep.subr.bf16.mxu0 0
    %1023 = vmatpush1.bf16.msra.mxu0 0
    %1024 = vmatprep.subr.bf16.mxu0 0
    %1025 = vmatpush1.bf16.msra.mxu0 0
    %1026 = vmatprep.subr.bf16.mxu0 0
    %1027 = vmatpush1.bf16.msra.mxu0 0
    %1028 = vmatprep.subr.bf16.mxu0 0
    %1029 = vmatpush1.bf16.msra.mxu0 0
    %1030 = vmatprep.mubr.bf16.mxu0 0
    %1031 = vmatmul.mubr.bf16.gmra.mrb[0].mxu0 %v996
    %v1032 = vpop.f32.mrb[0].mxu0
    %v1033 = vadd.f32 0.0, %v1032
    %v1034 = vpop.f32.mrb[0].mxu0
    %v1035 = vpop.f32.mrb[0].mxu0
    %v1036 = vpop.f32.mrb[0].mxu0
    %1037 = vdwg.mxu0
    %v1038 = vadd.f32 %v986, %v1033
    %v1039 = vxor.u32 %v1038, 2147483648
    %v1040 = vmul.f32 %v1039, 1.442695
    %v1041 = vpow.pop %v1040
    %v1042 = vadd.f32 %v1041, 1.0
    %v1043 = vrcp.pop %v1042
    %v1044 = vmul.f32 1.0, %v1043
    %v1045 = vtanh.pop %v1038
    %v1046 = vmul.f32 %v1044, %v944
    %1048 = vrot.lane.b32.xlu0 %v1045, 64
    %v1049 = vpop.permute.xlu0 %1048
    %v1051 = vmul.f32 %v1044, %v1049
    %1053 = vrot.lane.b32.xlu0 %v1051, 32
    %v1054 = vpop.permute.xlu0 %1053
    %v1056 = vadd.f32 %v1046, %v1054
    %v1057 = vtanh.pop %v1056
    %1059 = vrot.lane.b32.xlu0 %v1057, 64
    %v1060 = vpop.permute.xlu0 %1059
    %v1062 = vmul.f32 %v1044, %v1060
    %1063 = vmatprep.subr.bf16.mxu0 0
    %1064 = vmatpush1.bf16.msra.mxu0 %v830
    %1065 = vmatprep.subr.bf16.mxu0 0
    %1066 = vmatpush1.bf16.msra.mxu0 %v831
    %1067 = vmatprep.subr.bf16.mxu0 0
    %1068 = vmatpush1.bf16.msra.mxu0 0
    %1069 = vmatprep.subr.bf16.mxu0 0
    %1070 = vmatpush1.bf16.msra.mxu0 0
    %1071 = vmatprep.subr.bf16.mxu0 0
    %1072 = vmatpush1.bf16.msra.mxu0 0
    %1073 = vmatprep.subr.bf16.mxu0 0
    %1074 = vmatpush1.bf16.msra.mxu0 0
    %1075 = vmatprep.subr.bf16.mxu0 0
    %1076 = vmatpush1.bf16.msra.mxu0 0
    %1077 = vmatprep.subr.bf16.mxu0 0
    %1078 = vmatpush1.bf16.msra.mxu0 0
    %1079 = vmatprep.subr.bf16.mxu0 0
    %1080 = vmatpush1.bf16.msra.mxu0 0
    %1081 = vmatprep.subr.bf16.mxu0 0
    %1082 = vmatpush1.bf16.msra.mxu0 0
    %1083 = vmatprep.subr.bf16.mxu0 0
    %1084 = vmatpush1.bf16.msra.mxu0 0
    %1085 = vmatprep.subr.bf16.mxu0 0
    %1086 = vmatpush1.bf16.msra.mxu0 0
    %1087 = vmatprep.subr.bf16.mxu0 0
    %1088 = vmatpush1.bf16.msra.mxu0 0
    %1089 = vmatprep.subr.bf16.mxu0 0
    %1090 = vmatpush1.bf16.msra.mxu0 0
    %1091 = vmatprep.subr.bf16.mxu0 0
    %1092 = vmatpush1.bf16.msra.mxu0 0
    %1093 = vmatprep.subr.bf16.mxu0 0
    %1094 = vmatpush1.bf16.msra.mxu0 0
    %1095 = vmatprep.mubr.bf16.mxu0 0
    %1096 = vmatmul.mubr.bf16.gmra.mrb[0].mxu0 %v425
    %v1097 = vpop.f32.mrb[0].mxu0
    %v1098 = vadd.f32 %v820, %v1097
    %v1099 = vpop.f32.mrb[0].mxu0
    %v1100 = vpop.f32.mrb[0].mxu0
    %v1101 = vpop.f32.mrb[0].mxu0
    %1102 = vdwg.mxu0
    %v1103 = vpack.c.bf16 %v1062, %v1062
    %1105 = vrot.lane.b32.xlu0 %v1103, 32
    %v1106 = vpop.permute.xlu0 %1105
    %v1108 = vsel %vm180, %v1106, 0
    %1110 = vmatprep.subr.bf16.mxu0 0
    %1111 = vmatpush1.bf16.msra.mxu0 %v882
    %1112 = vmatprep.subr.bf16.mxu0 0
    %1113 = vmatpush1.bf16.msra.mxu0 %v883
    %1114 = vmatprep.subr.bf16.mxu0 0
    %1115 = vmatpush1.bf16.msra.mxu0 0
    %1116 = vmatprep.subr.bf16.mxu0 0
    %1117 = vmatpush1.bf16.msra.mxu0 0
    %1118 = vmatprep.subr.bf16.mxu0 0
    %1119 = vmatpush1.bf16.msra.mxu0 0
    %1120 = vmatprep.subr.bf16.mxu0 0
    %1121 = vmatpush1.bf16.msra.mxu0 0
    %1122 = vmatprep.subr.bf16.mxu0 0
    %1123 = vmatpush1.bf16.msra.mxu0 0
    %1124 = vmatprep.subr.bf16.mxu0 0
    %1125 = vmatpush1.bf16.msra.mxu0 0
    %1126 = vmatprep.subr.bf16.mxu0 0
    %1127 = vmatpush1.bf16.msra.mxu0 0
    %1128 = vmatprep.subr.bf16.mxu0 0
    %1129 = vmatpush1.bf16.msra.mxu0 0
    %1130 = vmatprep.subr.bf16.mxu0 0
    %1131 = vmatpush1.bf16.msra.mxu0 0
    %1132 = vmatprep.subr.bf16.mxu0 0
    %1133 = vmatpush1.bf16.msra.mxu0 0
    %1134 = vmatprep.subr.bf16.mxu0 0
    %1135 = vmatpush1.bf16.msra.mxu0 0
    %1136 = vmatprep.subr.bf16.mxu0 0
    %1137 = vmatpush1.bf16.msra.mxu0 0
    %1138 = vmatprep.subr.bf16.mxu0 0
    %1139 = vmatpush1.bf16.msra.mxu0 0
    %1140 = vmatprep.subr.bf16.mxu0 0
    %1141 = vmatpush1.bf16.msra.mxu0 0
    %1142 = vmatprep.mubr.bf16.mxu0 0
    %1143 = vmatmul.mubr.bf16.gmra.mrb[0].mxu0 %v1108
    %v1144 = vpop.f32.mrb[0].mxu0
    %v1145 = vadd.f32 0.0, %v1144
    %v1146 = vpop.f32.mrb[0].mxu0
    %v1147 = vpop.f32.mrb[0].mxu0
    %v1148 = vpop.f32.mrb[0].mxu0
    %1149 = vdwg.mxu0
    %v1150 = vadd.f32 %v1098, %v1145
    %v1151 = vxor.u32 %v1150, 2147483648
    %v1152 = vmul.f32 %v1151, 1.442695
    %v1153 = vpow.pop %v1152
    %v1154 = vadd.f32 %v1153, 1.0
    %v1155 = vrcp.pop %v1154
    %v1156 = vmul.f32 1.0, %v1155
    %v1157 = vtanh.pop %v1150
    %v1158 = vmul.f32 %v1156, %v1056
    %1160 = vrot.lane.b32.xlu0 %v1157, 64
    %v1161 = vpop.permute.xlu0 %1160
    %v1163 = vmul.f32 %v1156, %v1161
    %1165 = vrot.lane.b32.xlu0 %v1163, 32
    %v1166 = vpop.permute.xlu0 %1165
    %v1168 = vadd.f32 %v1158, %v1166
    %v1169 = vtanh.pop %v1168
    %1171 = vrot.lane.b32.xlu0 %v1169, 64
    %v1172 = vpop.permute.xlu0 %1171
    %v1174 = vmul.f32 %v1156, %v1172
    %1175 = vmatprep.subr.bf16.mxu0 0
    %1176 = vmatpush1.bf16.msra.mxu0 %v830
    %1177 = vmatprep.subr.bf16.mxu0 0
    %1178 = vmatpush1.bf16.msra.mxu0 %v831
    %1179 = vmatprep.subr.bf16.mxu0 0
    %1180 = vmatpush1.bf16.msra.mxu0 0
    %1181 = vmatprep.subr.bf16.mxu0 0
    %1182 = vmatpush1.bf16.msra.mxu0 0
    %1183 = vmatprep.subr.bf16.mxu0 0
    %1184 = vmatpush1.bf16.msra.mxu0 0
    %1185 = vmatprep.subr.bf16.mxu0 0
    %1186 = vmatpush1.bf16.msra.mxu0 0
    %1187 = vmatprep.subr.bf16.mxu0 0
    %1188 = vmatpush1.bf16.msra.mxu0 0
    %1189 = vmatprep.subr.bf16.mxu0 0
    %1190 = vmatpush1.bf16.msra.mxu0 0
    %1191 = vmatprep.subr.bf16.mxu0 0
    %1192 = vmatpush1.bf16.msra.mxu0 0
    %1193 = vmatprep.subr.bf16.mxu0 0
    %1194 = vmatpush1.bf16.msra.mxu0 0
    %1195 = vmatprep.subr.bf16.mxu0 0
    %1196 = vmatpush1.bf16.msra.mxu0 0
    %1197 = vmatprep.subr.bf16.mxu0 0
    %1198 = vmatpush1.bf16.msra.mxu0 0
    %1199 = vmatprep.subr.bf16.mxu0 0
    %1200 = vmatpush1.bf16.msra.mxu0 0
    %1201 = vmatprep.subr.bf16.mxu0 0
    %1202 = vmatpush1.bf16.msra.mxu0 0
    %1203 = vmatprep.subr.bf16.mxu0 0
    %1204 = vmatpush1.bf16.msra.mxu0 0
    %1205 = vmatprep.subr.bf16.mxu0 0
    %1206 = vmatpush1.bf16.msra.mxu0 0
    %1207 = vmatprep.mubr.bf16.mxu0 0
    %1208 = vmatmul.mubr.bf16.gmra.mrb[0].mxu0 %v506
    %v1209 = vpop.f32.mrb[0].mxu0
    %v1210 = vadd.f32 %v820, %v1209
    %v1211 = vpop.f32.mrb[0].mxu0
    %v1212 = vpop.f32.mrb[0].mxu0
    %v1213 = vpop.f32.mrb[0].mxu0
    %1214 = vdwg.mxu0
    %v1215 = vpack.c.bf16 %v1174, %v1174
    %1217 = vrot.lane.b32.xlu0 %v1215, 32
    %v1218 = vpop.permute.xlu0 %1217
    %v1220 = vsel %vm180, %v1218, 0
    %1222 = vmatprep.subr.bf16.mxu0 0
    %1223 = vmatpush1.bf16.msra.mxu0 %v882
    %1224 = vmatprep.subr.bf16.mxu0 0
    %1225 = vmatpush1.bf16.msra.mxu0 %v883
    %1226 = vmatprep.subr.bf16.mxu0 0
    %1227 = vmatpush1.bf16.msra.mxu0 0
    %1228 = vmatprep.subr.bf16.mxu0 0
    %1229 = vmatpush1.bf16.msra.mxu0 0
    %1230 = vmatprep.subr.bf16.mxu0 0
    %1231 = vmatpush1.bf16.msra.mxu0 0
    %1232 = vmatprep.subr.bf16.mxu0 0
    %1233 = vmatpush1.bf16.msra.mxu0 0
    %1234 = vmatprep.subr.bf16.mxu0 0
    %1235 = vmatpush1.bf16.msra.mxu0 0
    %1236 = vmatprep.subr.bf16.mxu0 0
    %1237 = vmatpush1.bf16.msra.mxu0 0
    %1238 = vmatprep.subr.bf16.mxu0 0
    %1239 = vmatpush1.bf16.msra.mxu0 0
    %1240 = vmatprep.subr.bf16.mxu0 0
    %1241 = vmatpush1.bf16.msra.mxu0 0
    %1242 = vmatprep.subr.bf16.mxu0 0
    %1243 = vmatpush1.bf16.msra.mxu0 0
    %1244 = vmatprep.subr.bf16.mxu0 0
    %1245 = vmatpush1.bf16.msra.mxu0 0
    %1246 = vmatprep.subr.bf16.mxu0 0
    %1247 = vmatpush1.bf16.msra.mxu0 0
    %1248 = vmatprep.subr.bf16.mxu0 0
    %1249 = vmatpush1.bf16.msra.mxu0 0
    %1250 = vmatprep.subr.bf16.mxu0 0
    %1251 = vmatpush1.bf16.msra.mxu0 0
    %1252 = vmatprep.subr.bf16.mxu0 0
    %1253 = vmatpush1.bf16.msra.mxu0 0
    %1254 = vmatprep.mubr.bf16.mxu0 0
    %1255 = vmatmul.mubr.bf16.gmra.mrb[0].mxu0 %v1220
    %v1256 = vpop.f32.mrb[0].mxu0
    %v1257 = vadd.f32 0.0, %v1256
    %v1258 = vpop.f32.mrb[0].mxu0
    %v1259 = vpop.f32.mrb[0].mxu0
    %v1260 = vpop.f32.mrb[0].mxu0
    %1261 = vdwg.mxu0
    %v1262 = vadd.f32 %v1210, %v1257
    %v1263 = vxor.u32 %v1262, 2147483648
    %v1264 = vmul.f32 %v1263, 1.442695
    %v1265 = vpow.pop %v1264
    %v1266 = vadd.f32 %v1265, 1.0
    %v1267 = vrcp.pop %v1266
    %v1268 = vmul.f32 1.0, %v1267
    %v1269 = vtanh.pop %v1262
    %v1270 = vmul.f32 %v1268, %v1168
    %1272 = vrot.lane.b32.xlu0 %v1269, 64
    %v1273 = vpop.permute.xlu0 %1272
    %v1275 = vmul.f32 %v1268, %v1273
    %1277 = vrot.lane.b32.xlu0 %v1275, 32
    %v1278 = vpop.permute.xlu0 %1277
    %v1280 = vadd.f32 %v1270, %v1278
    %v1281 = vtanh.pop %v1280
    %1283 = vrot.lane.b32.xlu0 %v1281, 64
    %v1284 = vpop.permute.xlu0 %1283
    %v1286 = vmul.f32 %v1268, %v1284
    %1287 = vmatprep.subr.bf16.mxu0 0
    %1288 = vmatpush1.bf16.msra.mxu0 %v830
    %1289 = vmatprep.subr.bf16.mxu0 0
    %1290 = vmatpush1.bf16.msra.mxu0 %v831
    %1291 = vmatprep.subr.bf16.mxu0 0
    %1292 = vmatpush1.bf16.msra.mxu0 0
    %1293 = vmatprep.subr.bf16.mxu0 0
    %1294 = vmatpush1.bf16.msra.mxu0 0
    %1295 = vmatprep.subr.bf16.mxu0 0
    %1296 = vmatpush1.bf16.msra.mxu0 0
    %1297 = vmatprep.subr.bf16.mxu0 0
    %1298 = vmatpush1.bf16.msra.mxu0 0
    %1299 = vmatprep.subr.bf16.mxu0 0
    %1300 = vmatpush1.bf16.msra.mxu0 0
    %1301 = vmatprep.subr.bf16.mxu0 0
    %1302 = vmatpush1.bf16.msra.mxu0 0
    %1303 = vmatprep.subr.bf16.mxu0 0
    %1304 = vmatpush1.bf16.msra.mxu0 0
    %1305 = vmatprep.subr.bf16.mxu0 0
    %1306 = vmatpush1.bf16.msra.mxu0 0
    %1307 = vmatprep.subr.bf16.mxu0 0
    %1308 = vmatpush1.bf16.msra.mxu0 0
    %1309 = vmatprep.subr.bf16.mxu0 0
    %1310 = vmatpush1.bf16.msra.mxu0 0
    %1311 = vmatprep.subr.bf16.mxu0 0
    %1312 = vmatpush1.bf16.msra.mxu0 0
    %1313 = vmatprep.subr.bf16.mxu0 0
    %1314 = vmatpush1.bf16.msra.mxu0 0
    %1315 = vmatprep.subr.bf16.mxu0 0
    %1316 = vmatpush1.bf16.msra.mxu0 0
    %1317 = vmatprep.subr.bf16.mxu0 0
    %1318 = vmatpush1.bf16.msra.mxu0 0
    %1319 = vmatprep.mubr.bf16.mxu0 0
    %1320 = vmatmul.mubr.bf16.gmra.mrb[0].mxu0 %v587
    %v1321 = vpop.f32.mrb[0].mxu0
    %v1322 = vadd.f32 %v820, %v1321
    %v1323 = vpop.f32.mrb[0].mxu0
    %v1324 = vpop.f32.mrb[0].mxu0
    %v1325 = vpop.f32.mrb[0].mxu0
    %1326 = vdwg.mxu0
    %v1327 = vpack.c.bf16 %v1286, %v1286
    %1329 = vrot.lane.b32.xlu0 %v1327, 32
    %v1330 = vpop.permute.xlu0 %1329
    %v1332 = vsel %vm180, %v1330, 0
    %1334 = vmatprep.subr.bf16.mxu0 0
    %1335 = vmatpush1.bf16.msra.mxu0 %v882
    %1336 = vmatprep.subr.bf16.mxu0 0
    %1337 = vmatpush1.bf16.msra.mxu0 %v883
    %1338 = vmatprep.subr.bf16.mxu0 0
    %1339 = vmatpush1.bf16.msra.mxu0 0
    %1340 = vmatprep.subr.bf16.mxu0 0
    %1341 = vmatpush1.bf16.msra.mxu0 0
    %1342 = vmatprep.subr.bf16.mxu0 0
    %1343 = vmatpush1.bf16.msra.mxu0 0
    %1344 = vmatprep.subr.bf16.mxu0 0
    %1345 = vmatpush1.bf16.msra.mxu0 0
    %1346 = vmatprep.subr.bf16.mxu0 0
    %1347 = vmatpush1.bf16.msra.mxu0 0
    %1348 = vmatprep.subr.bf16.mxu0 0
    %1349 = vmatpush1.bf16.msra.mxu0 0
    %1350 = vmatprep.subr.bf16.mxu0 0
    %1351 = vmatpush1.bf16.msra.mxu0 0
    %1352 = vmatprep.subr.bf16.mxu0 0
    %1353 = vmatpush1.bf16.msra.mxu0 0
    %1354 = vmatprep.subr.bf16.mxu0 0
    %1355 = vmatpush1.bf16.msra.mxu0 0
    %1356 = vmatprep.subr.bf16.mxu0 0
    %1357 = vmatpush1.bf16.msra.mxu0 0
    %1358 = vmatprep.subr.bf16.mxu0 0
    %1359 = vmatpush1.bf16.msra.mxu0 0
    %1360 = vmatprep.subr.bf16.mxu0 0
    %1361 = vmatpush1.bf16.msra.mxu0 0
    %1362 = vmatprep.subr.bf16.mxu0 0
    %1363 = vmatpush1.bf16.msra.mxu0 0
    %1364 = vmatprep.subr.bf16.mxu0 0
    %1365 = vmatpush1.bf16.msra.mxu0 0
    %1366 = vmatprep.mubr.bf16.mxu0 0
    %1367 = vmatmul.mubr.bf16.gmra.mrb[0].mxu0 %v1332
    %v1368 = vpop.f32.mrb[0].mxu0
    %v1369 = vadd.f32 0.0, %v1368
    %v1370 = vpop.f32.mrb[0].mxu0
    %v1371 = vpop.f32.mrb[0].mxu0
    %v1372 = vpop.f32.mrb[0].mxu0
    %1373 = vdwg.mxu0
    %v1374 = vadd.f32 %v1322, %v1369
    %v1375 = vxor.u32 %v1374, 2147483648
    %v1376 = vmul.f32 %v1375, 1.442695
    %v1377 = vpow.pop %v1376
    %v1378 = vadd.f32 %v1377, 1.0
    %v1379 = vrcp.pop %v1378
    %v1380 = vmul.f32 1.0, %v1379
    %v1381 = vtanh.pop %v1374
    %v1382 = vmul.f32 %v1380, %v1280
    %1384 = vrot.lane.b32.xlu0 %v1381, 64
    %v1385 = vpop.permute.xlu0 %1384
    %v1387 = vmul.f32 %v1380, %v1385
    %1389 = vrot.lane.b32.xlu0 %v1387, 32
    %v1390 = vpop.permute.xlu0 %1389
    %v1392 = vadd.f32 %v1382, %v1390
    %v1393 = vtanh.pop %v1392
    %1395 = vrot.lane.b32.xlu0 %v1393, 64
    %v1396 = vpop.permute.xlu0 %1395
    %v1398 = vmul.f32 %v1380, %v1396
    %1399 = vmatprep.subr.bf16.mxu0 0
    %1400 = vmatpush1.bf16.msra.mxu0 %v830
    %1401 = vmatprep.subr.bf16.mxu0 0
    %1402 = vmatpush1.bf16.msra.mxu0 %v831
    %1403 = vmatprep.subr.bf16.mxu0 0
    %1404 = vmatpush1.bf16.msra.mxu0 0
    %1405 = vmatprep.subr.bf16.mxu0 0
    %1406 = vmatpush1.bf16.msra.mxu0 0
    %1407 = vmatprep.subr.bf16.mxu0 0
    %1408 = vmatpush1.bf16.msra.mxu0 0
    %1409 = vmatprep.subr.bf16.mxu0 0
    %1410 = vmatpush1.bf16.msra.mxu0 0
    %1411 = vmatprep.subr.bf16.mxu0 0
    %1412 = vmatpush1.bf16.msra.mxu0 0
    %1413 = vmatprep.subr.bf16.mxu0 0
    %1414 = vmatpush1.bf16.msra.mxu0 0
    %1415 = vmatprep.subr.bf16.mxu0 0
    %1416 = vmatpush1.bf16.msra.mxu0 0
    %1417 = vmatprep.subr.bf16.mxu0 0
    %1418 = vmatpush1.bf16.msra.mxu0 0
    %1419 = vmatprep.subr.bf16.mxu0 0
    %1420 = vmatpush1.bf16.msra.mxu0 0
    %1421 = vmatprep.subr.bf16.mxu0 0
    %1422 = vmatpush1.bf16.msra.mxu0 0
    %1423 = vmatprep.subr.bf16.mxu0 0
    %1424 = vmatpush1.bf16.msra.mxu0 0
    %1425 = vmatprep.subr.bf16.mxu0 0
    %1426 = vmatpush1.bf16.msra.mxu0 0
    %1427 = vmatprep.subr.bf16.mxu0 0
    %1428 = vmatpush1.bf16.msra.mxu0 0
    %1429 = vmatprep.subr.bf16.mxu0 0
    %1430 = vmatpush1.bf16.msra.mxu0 0
    %1431 = vmatprep.mubr.bf16.mxu0 0
    %1432 = vmatmul.mubr.bf16.gmra.mrb[0].mxu0 %v668
    %v1433 = vpop.f32.mrb[0].mxu0
    %v1434 = vadd.f32 %v820, %v1433
    %v1435 = vpop.f32.mrb[0].mxu0
    %v1436 = vpop.f32.mrb[0].mxu0
    %v1437 = vpop.f32.mrb[0].mxu0
    %1438 = vdwg.mxu0
    %v1439 = vpack.c.bf16 %v1398, %v1398
    %1441 = vrot.lane.b32.xlu0 %v1439, 32
    %v1442 = vpop.permute.xlu0 %1441
    %v1444 = vsel %vm180, %v1442, 0
    %1446 = vmatprep.subr.bf16.mxu0 0
    %1447 = vmatpush1.bf16.msra.mxu0 %v882
    %1448 = vmatprep.subr.bf16.mxu0 0
    %1449 = vmatpush1.bf16.msra.mxu0 %v883
    %1450 = vmatprep.subr.bf16.mxu0 0
    %1451 = vmatpush1.bf16.msra.mxu0 0
    %1452 = vmatprep.subr.bf16.mxu0 0
    %1453 = vmatpush1.bf16.msra.mxu0 0
    %1454 = vmatprep.subr.bf16.mxu0 0
    %1455 = vmatpush1.bf16.msra.mxu0 0
    %1456 = vmatprep.subr.bf16.mxu0 0
    %1457 = vmatpush1.bf16.msra.mxu0 0
    %1458 = vmatprep.subr.bf16.mxu0 0
    %1459 = vmatpush1.bf16.msra.mxu0 0
    %1460 = vmatprep.subr.bf16.mxu0 0
    %1461 = vmatpush1.bf16.msra.mxu0 0
    %1462 = vmatprep.subr.bf16.mxu0 0
    %1463 = vmatpush1.bf16.msra.mxu0 0
    %1464 = vmatprep.subr.bf16.mxu0 0
    %1465 = vmatpush1.bf16.msra.mxu0 0
    %1466 = vmatprep.subr.bf16.mxu0 0
    %1467 = vmatpush1.bf16.msra.mxu0 0
    %1468 = vmatprep.subr.bf16.mxu0 0
    %1469 = vmatpush1.bf16.msra.mxu0 0
    %1470 = vmatprep.subr.bf16.mxu0 0
    %1471 = vmatpush1.bf16.msra.mxu0 0
    %1472 = vmatprep.subr.bf16.mxu0 0
    %1473 = vmatpush1.bf16.msra.mxu0 0
    %1474 = vmatprep.subr.bf16.mxu0 0
    %1475 = vmatpush1.bf16.msra.mxu0 0
    %1476 = vmatprep.subr.bf16.mxu0 0
    %1477 = vmatpush1.bf16.msra.mxu0 0
    %1478 = vmatprep.mubr.bf16.mxu0 0
    %1479 = vmatmul.mubr.bf16.gmra.mrb[0].mxu0 %v1444
    %v1480 = vpop.f32.mrb[0].mxu0
    %v1481 = vadd.f32 0.0, %v1480
    %v1482 = vpop.f32.mrb[0].mxu0
    %v1483 = vpop.f32.mrb[0].mxu0
    %v1484 = vpop.f32.mrb[0].mxu0
    %1485 = vdwg.mxu0
    %v1486 = vadd.f32 %v1434, %v1481
    %v1487 = vxor.u32 %v1486, 2147483648
    %v1488 = vmul.f32 %v1487, 1.442695
    %v1489 = vpow.pop %v1488
    %v1490 = vadd.f32 %v1489, 1.0
    %v1491 = vrcp.pop %v1490
    %v1492 = vmul.f32 1.0, %v1491
    %v1493 = vtanh.pop %v1486
    %v1494 = vmul.f32 %v1492, %v1392
    %1496 = vrot.lane.b32.xlu0 %v1493, 64
    %v1497 = vpop.permute.xlu0 %1496
    %v1499 = vmul.f32 %v1492, %v1497
    %1501 = vrot.lane.b32.xlu0 %v1499, 32
    %v1502 = vpop.permute.xlu0 %1501
    %v1504 = vadd.f32 %v1494, %v1502
    %v1505 = vtanh.pop %v1504
    %1507 = vrot.lane.b32.xlu0 %v1505, 64
    %v1508 = vpop.permute.xlu0 %1507
    %v1510 = vmul.f32 %v1492, %v1508
    %1511 = vmatprep.subr.bf16.mxu0 0
    %1512 = vmatpush1.bf16.msra.mxu0 %v830
    %1513 = vmatprep.subr.bf16.mxu0 0
    %1514 = vmatpush1.bf16.msra.mxu0 %v831
    %1515 = vmatprep.subr.bf16.mxu0 0
    %1516 = vmatpush1.bf16.msra.mxu0 0
    %1517 = vmatprep.subr.bf16.mxu0 0
    %1518 = vmatpush1.bf16.msra.mxu0 0
    %1519 = vmatprep.subr.bf16.mxu0 0
    %1520 = vmatpush1.bf16.msra.mxu0 0
    %1521 = vmatprep.subr.bf16.mxu0 0
    %1522 = vmatpush1.bf16.msra.mxu0 0
    %1523 = vmatprep.subr.bf16.mxu0 0
    %1524 = vmatpush1.bf16.msra.mxu0 0
    %1525 = vmatprep.subr.bf16.mxu0 0
    %1526 = vmatpush1.bf16.msra.mxu0 0
    %1527 = vmatprep.subr.bf16.mxu0 0
    %1528 = vmatpush1.bf16.msra.mxu0 0
    %1529 = vmatprep.subr.bf16.mxu0 0
    %1530 = vmatpush1.bf16.msra.mxu0 0
    %1531 = vmatprep.subr.bf16.mxu0 0
    %1532 = vmatpush1.bf16.msra.mxu0 0
    %1533 = vmatprep.subr.bf16.mxu0 0
    %1534 = vmatpush1.bf16.msra.mxu0 0
    %1535 = vmatprep.subr.bf16.mxu0 0
    %1536 = vmatpush1.bf16.msra.mxu0 0
    %1537 = vmatprep.subr.bf16.mxu0 0
    %1538 = vmatpush1.bf16.msra.mxu0 0
    %1539 = vmatprep.subr.bf16.mxu0 0
    %1540 = vmatpush1.bf16.msra.mxu0 0
    %1541 = vmatprep.subr.bf16.mxu0 0
    %1542 = vmatpush1.bf16.msra.mxu0 0
    %1543 = vmatprep.mubr.bf16.mxu0 0
    %1544 = vmatmul.mubr.bf16.gmra.mrb[0].mxu0 %v749
    %v1545 = vpop.f32.mrb[0].mxu0
    %v1546 = vadd.f32 %v820, %v1545
    %v1547 = vpop.f32.mrb[0].mxu0
    %v1548 = vpop.f32.mrb[0].mxu0
    %v1549 = vpop.f32.mrb[0].mxu0
    %1550 = vdwg.mxu0
    %v1551 = vpack.c.bf16 %v1510, %v1510
    %1553 = vrot.lane.b32.xlu0 %v1551, 32
    %v1554 = vpop.permute.xlu0 %1553
    %v1556 = vsel %vm180, %v1554, 0
    %1558 = vmatprep.subr.bf16.mxu0 0
    %1559 = vmatpush1.bf16.msra.mxu0 %v882
    %1560 = vmatprep.subr.bf16.mxu0 0
    %1561 = vmatpush1.bf16.msra.mxu0 %v883
    %1562 = vmatprep.subr.bf16.mxu0 0
    %1563 = vmatpush1.bf16.msra.mxu0 0
    %1564 = vmatprep.subr.bf16.mxu0 0
    %1565 = vmatpush1.bf16.msra.mxu0 0
    %1566 = vmatprep.subr.bf16.mxu0 0
    %1567 = vmatpush1.bf16.msra.mxu0 0
    %1568 = vmatprep.subr.bf16.mxu0 0
    %1569 = vmatpush1.bf16.msra.mxu0 0
    %1570 = vmatprep.subr.bf16.mxu0 0
    %1571 = vmatpush1.bf16.msra.mxu0 0
    %1572 = vmatprep.subr.bf16.mxu0 0
    %1573 = vmatpush1.bf16.msra.mxu0 0
    %1574 = vmatprep.subr.bf16.mxu0 0
    %1575 = vmatpush1.bf16.msra.mxu0 0
    %1576 = vmatprep.subr.bf16.mxu0 0
    %1577 = vmatpush1.bf16.msra.mxu0 0
    %1578 = vmatprep.subr.bf16.mxu0 0
    %1579 = vmatpush1.bf16.msra.mxu0 0
    %1580 = vmatprep.subr.bf16.mxu0 0
    %1581 = vmatpush1.bf16.msra.mxu0 0
    %1582 = vmatprep.subr.bf16.mxu0 0
    %1583 = vmatpush1.bf16.msra.mxu0 0
    %1584 = vmatprep.subr.bf16.mxu0 0
    %1585 = vmatpush1.bf16.msra.mxu0 0
    %1586 = vmatprep.subr.bf16.mxu0 0
    %1587 = vmatpush1.bf16.msra.mxu0 0
    %1588 = vmatprep.subr.bf16.mxu0 0
    %1589 = vmatpush1.bf16.msra.mxu0 0
    %1590 = vmatprep.mubr.bf16.mxu0 0
    %1591 = vmatmul.mubr.bf16.gmra.mrb[0].mxu0 %v1556
    %v1592 = vpop.f32.mrb[0].mxu0
    %v1593 = vadd.f32 0.0, %v1592
    %v1594 = vpop.f32.mrb[0].mxu0
    %v1595 = vpop.f32.mrb[0].mxu0
    %v1596 = vpop.f32.mrb[0].mxu0
    %1597 = vdwg.mxu0
    %v1598 = vadd.f32 %v1546, %v1593
    %v1599 = vxor.u32 %v1598, 2147483648
    %v1600 = vmul.f32 %v1599, 1.442695
    %v1601 = vpow.pop %v1600
    %v1602 = vadd.f32 %v1601, 1.0
    %v1603 = vrcp.pop %v1602
    %v1604 = vmul.f32 1.0, %v1603
    %v1605 = vtanh.pop %v1598
    %v1606 = vmul.f32 %v1604, %v1504
    %1608 = vrot.lane.b32.xlu0 %v1605, 64
    %v1609 = vpop.permute.xlu0 %1608
    %v1611 = vmul.f32 %v1604, %v1609
    %1613 = vrot.lane.b32.xlu0 %v1611, 32
    %v1614 = vpop.permute.xlu0 %1613
    %v1616 = vadd.f32 %v1606, %v1614
    %v1617 = vtanh.pop %v1616
    %1619 = vrot.lane.b32.xlu0 %v1617, 64
    %v1620 = vpop.permute.xlu0 %1619
    %v1622 = vmul.f32 %v1604, %v1620
    %v1623 = vpack.c.bf16 %v815, %v815
    %1625 = vrot.lane.b32.xlu0 %v1623, 32
    %v1626 = vpop.permute.xlu0 %1625
    %v1628 = vsel %vm180, %v1626, 0
    %1630 = vmatprep.subr.bf16.mxu0 0
    %1631 = vmatpush1.bf16.msra.mxu0 %v830
    %1632 = vmatprep.subr.bf16.mxu0 0
    %1633 = vmatpush1.bf16.msra.mxu0 %v831
    %1634 = vmatprep.subr.bf16.mxu0 0
    %1635 = vmatpush1.bf16.msra.mxu0 0
    %1636 = vmatprep.subr.bf16.mxu0 0
    %1637 = vmatpush1.bf16.msra.mxu0 0
    %1638 = vmatprep.subr.bf16.mxu0 0
    %1639 = vmatpush1.bf16.msra.mxu0 0
    %1640 = vmatprep.subr.bf16.mxu0 0
    %1641 = vmatpush1.bf16.msra.mxu0 0
    %1642 = vmatprep.subr.bf16.mxu0 0
    %1643 = vmatpush1.bf16.msra.mxu0 0
    %1644 = vmatprep.subr.bf16.mxu0 0
    %1645 = vmatpush1.bf16.msra.mxu0 0
    %1646 = vmatprep.subr.bf16.mxu0 0
    %1647 = vmatpush1.bf16.msra.mxu0 0
    %1648 = vmatprep.subr.bf16.mxu0 0
    %1649 = vmatpush1.bf16.msra.mxu0 0
    %1650 = vmatprep.subr.bf16.mxu0 0
    %1651 = vmatpush1.bf16.msra.mxu0 0
    %1652 = vmatprep.subr.bf16.mxu0 0
    %1653 = vmatpush1.bf16.msra.mxu0 0
    %1654 = vmatprep.subr.bf16.mxu0 0
    %1655 = vmatpush1.bf16.msra.mxu0 0
    %1656 = vmatprep.subr.bf16.mxu0 0
    %1657 = vmatpush1.bf16.msra.mxu0 0
    %1658 = vmatprep.subr.bf16.mxu0 0
    %1659 = vmatpush1.bf16.msra.mxu0 0
    %1660 = vmatprep.subr.bf16.mxu0 0
    %1661 = vmatpush1.bf16.msra.mxu0 0
    %1662 = vmatprep.mubr.bf16.mxu0 0
    %1663 = vmatmul.mubr.bf16.gmra.mrb[0].mxu0 %v1628
    %v1664 = vpop.f32.mrb[0].mxu0
    %v1665 = vadd.f32 %v820, %v1664
    %v1666 = vpop.f32.mrb[0].mxu0
    %v1667 = vpop.f32.mrb[0].mxu0
    %v1668 = vpop.f32.mrb[0].mxu0
    %1669 = vdwg.mxu0
    %v1670 = vpack.c.bf16 %v1622, %v1622
    %1672 = vrot.lane.b32.xlu0 %v1670, 32
    %v1673 = vpop.permute.xlu0 %1672
    %v1675 = vsel %vm180, %v1673, 0
    %1677 = vmatprep.subr.bf16.mxu0 0
    %1678 = vmatpush1.bf16.msra.mxu0 %v882
    %1679 = vmatprep.subr.bf16.mxu0 0
    %1680 = vmatpush1.bf16.msra.mxu0 %v883
    %1681 = vmatprep.subr.bf16.mxu0 0
    %1682 = vmatpush1.bf16.msra.mxu0 0
    %1683 = vmatprep.subr.bf16.mxu0 0
    %1684 = vmatpush1.bf16.msra.mxu0 0
    %1685 = vmatprep.subr.bf16.mxu0 0
    %1686 = vmatpush1.bf16.msra.mxu0 0
    %1687 = vmatprep.subr.bf16.mxu0 0
    %1688 = vmatpush1.bf16.msra.mxu0 0
    %1689 = vmatprep.subr.bf16.mxu0 0
    %1690 = vmatpush1.bf16.msra.mxu0 0
    %1691 = vmatprep.subr.bf16.mxu0 0
    %1692 = vmatpush1.bf16.msra.mxu0 0
    %1693 = vmatprep.subr.bf16.mxu0 0
    %1694 = vmatpush1.bf16.msra.mxu0 0
    %1695 = vmatprep.subr.bf16.mxu0 0
    %1696 = vmatpush1.bf16.msra.mxu0 0
    %1697 = vmatprep.subr.bf16.mxu0 0
    %1698 = vmatpush1.bf16.msra.mxu0 0
    %1699 = vmatprep.subr.bf16.mxu0 0
    %1700 = vmatpush1.bf16.msra.mxu0 0
    %1701 = vmatprep.subr.bf16.mxu0 0
    %1702 = vmatpush1.bf16.msra.mxu0 0
    %1703 = vmatprep.subr.bf16.mxu0 0
    %1704 = vmatpush1.bf16.msra.mxu0 0
    %1705 = vmatprep.subr.bf16.mxu0 0
    %1706 = vmatpush1.bf16.msra.mxu0 0
    %1707 = vmatprep.subr.bf16.mxu0 0
    %1708 = vmatpush1.bf16.msra.mxu0 0
    %1709 = vmatprep.mubr.bf16.mxu0 0
    %1710 = vmatmul.mubr.bf16.gmra.mrb[0].mxu0 %v1675
    %v1711 = vpop.f32.mrb[0].mxu0
    %v1712 = vadd.f32 0.0, %v1711
    %v1713 = vpop.f32.mrb[0].mxu0
    %v1714 = vpop.f32.mrb[0].mxu0
    %v1715 = vpop.f32.mrb[0].mxu0
    %1716 = vdwg.mxu0
    %v1717 = vadd.f32 %v1665, %v1712
    %v1718 = vxor.u32 %v1717, 2147483648
    %v1719 = vmul.f32 %v1718, 1.442695
    %v1720 = vpow.pop %v1719
    %v1721 = vadd.f32 %v1720, 1.0
    %v1722 = vrcp.pop %v1721
    %v1723 = vmul.f32 1.0, %v1722
    %v1724 = vtanh.pop %v1717
    %v1725 = vmul.f32 %v1723, %v1616
    %1727 = vrot.lane.b32.xlu0 %v1724, 64
    %v1728 = vpop.permute.xlu0 %1727
    %v1730 = vmul.f32 %v1723, %v1728
    %1732 = vrot.lane.b32.xlu0 %v1730, 32
    %v1733 = vpop.permute.xlu0 %1732
    %v1735 = vadd.f32 %v1725, %v1733
    %v1736 = vtanh.pop %v1735
    %1738 = vrot.lane.b32.xlu0 %v1736, 64
    %v1739 = vpop.permute.xlu0 %1738
    %v1741 = vmul.f32 %v1723, %v1739
    %v1743 = vlaneseq
    %v1744 = vshrl.u32 %v1743, 7
    %v1745 = vsub.s32 0, %v1744
    %v1746 = vrot.slane %v147, %v1745
    %v1752 = vunpack.c.l.b16 %v142
    %v1753 = vunpack.c.l.b16 %v143
    %v1754 = vunpack.c.l.b16 %v144
    %v1755 = vunpack.c.l.b16 %v145
    %v1756 = vpack.c.b16 %v1753, %v1752
    %v1757 = vpack.c.b16 %v1755, %v1754
    %1760 = vmatprep.subr.bf16.mxu0 0
    %1761 = vmatpush1.bf16.msra.mxu0 %v1756
    %1762 = vmatprep.subr.bf16.mxu0 0
    %1763 = vmatpush1.bf16.msra.mxu0 %v1757
    %1764 = vmatprep.subr.bf16.mxu0 0
    %1765 = vmatpush1.bf16.msra.mxu0 0
    %1766 = vmatprep.subr.bf16.mxu0 0
    %1767 = vmatpush1.bf16.msra.mxu0 0
    %1768 = vmatprep.subr.bf16.mxu0 0
    %1769 = vmatpush1.bf16.msra.mxu0 0
    %1770 = vmatprep.subr.bf16.mxu0 0
    %1771 = vmatpush1.bf16.msra.mxu0 0
    %1772 = vmatprep.subr.bf16.mxu0 0
    %1773 = vmatpush1.bf16.msra.mxu0 0
    %1774 = vmatprep.subr.bf16.mxu0 0
    %1775 = vmatpush1.bf16.msra.mxu0 0
    %1776 = vmatprep.subr.bf16.mxu0 0
    %1777 = vmatpush1.bf16.msra.mxu0 0
    %1778 = vmatprep.subr.bf16.mxu0 0
    %1779 = vmatpush1.bf16.msra.mxu0 0
    %1780 = vmatprep.subr.bf16.mxu0 0
    %1781 = vmatpush1.bf16.msra.mxu0 0
    %1782 = vmatprep.subr.bf16.mxu0 0
    %1783 = vmatpush1.bf16.msra.mxu0 0
    %1784 = vmatprep.subr.bf16.mxu0 0
    %1785 = vmatpush1.bf16.msra.mxu0 0
    %1786 = vmatprep.subr.bf16.mxu0 0
    %1787 = vmatpush1.bf16.msra.mxu0 0
    %1788 = vmatprep.subr.bf16.mxu0 0
    %1789 = vmatpush1.bf16.msra.mxu0 0
    %1790 = vmatprep.subr.bf16.mxu0 0
    %1791 = vmatpush1.bf16.msra.mxu0 0
    %1792 = vmatprep.mubr.bf16.mxu0 0
    %1793 = vmatmul.mubr.bf16.gmra.mrb[0].mxu0 %v996
    %v1794 = vpop.f32.mrb[0].mxu0
    %v1795 = vadd.f32 %v1746, %v1794
    %v1796 = vpop.f32.mrb[0].mxu0
    %v1797 = vpop.f32.mrb[0].mxu0
    %v1798 = vpop.f32.mrb[0].mxu0
    %1799 = vdwg.mxu0
    %v1804 = vunpack.c.l.b16 %v134
    %v1805 = vunpack.c.l.b16 %v135
    %v1806 = vunpack.c.l.b16 %v136
    %v1807 = vunpack.c.l.b16 %v137
    %v1808 = vpack.c.b16 %v1805, %v1804
    %v1809 = vpack.c.b16 %v1807, %v1806
    %1812 = vmatprep.subr.bf16.mxu0 0
    %1813 = vmatpush1.bf16.msra.mxu0 %v1808
    %1814 = vmatprep.subr.bf16.mxu0 0
    %1815 = vmatpush1.bf16.msra.mxu0 %v1809
    %1816 = vmatprep.subr.bf16.mxu0 0
    %1817 = vmatpush1.bf16.msra.mxu0 0
    %1818 = vmatprep.subr.bf16.mxu0 0
    %1819 = vmatpush1.bf16.msra.mxu0 0
    %1820 = vmatprep.subr.bf16.mxu0 0
    %1821 = vmatpush1.bf16.msra.mxu0 0
    %1822 = vmatprep.subr.bf16.mxu0 0
    %1823 = vmatpush1.bf16.msra.mxu0 0
    %1824 = vmatprep.subr.bf16.mxu0 0
    %1825 = vmatpush1.bf16.msra.mxu0 0
    %1826 = vmatprep.subr.bf16.mxu0 0
    %1827 = vmatpush1.bf16.msra.mxu0 0
    %1828 = vmatprep.subr.bf16.mxu0 0
    %1829 = vmatpush1.bf16.msra.mxu0 0
    %1830 = vmatprep.subr.bf16.mxu0 0
    %1831 = vmatpush1.bf16.msra.mxu0 0
    %1832 = vmatprep.subr.bf16.mxu0 0
    %1833 = vmatpush1.bf16.msra.mxu0 0
    %1834 = vmatprep.subr.bf16.mxu0 0
    %1835 = vmatpush1.bf16.msra.mxu0 0
    %1836 = vmatprep.subr.bf16.mxu0 0
    %1837 = vmatpush1.bf16.msra.mxu0 0
    %1838 = vmatprep.subr.bf16.mxu0 0
    %1839 = vmatpush1.bf16.msra.mxu0 0
    %1840 = vmatprep.subr.bf16.mxu0 0
    %1841 = vmatpush1.bf16.msra.mxu0 0
    %1842 = vmatprep.subr.bf16.mxu0 0
    %1843 = vmatpush1.bf16.msra.mxu0 0
    %1844 = vmatprep.mubr.bf16.mxu0 0
    %1845 = vmatmul.mubr.bf16.gmra.mrb[0].mxu0 %v182
    %v1846 = vpop.f32.mrb[0].mxu0
    %v1847 = vadd.f32 0.0, %v1846
    %v1848 = vpop.f32.mrb[0].mxu0
    %v1849 = vpop.f32.mrb[0].mxu0
    %v1850 = vpop.f32.mrb[0].mxu0
    %1851 = vdwg.mxu0
    %v1852 = vadd.f32 %v1795, %v1847
    %v1853 = vxor.u32 %v1852, 2147483648
    %v1854 = vmul.f32 %v1853, 1.442695
    %v1855 = vpow.pop %v1854
    %v1856 = vadd.f32 %v1855, 1.0
    %v1857 = vrcp.pop %v1856
    %v1858 = vmul.f32 1.0, %v1857
    %v1859 = vtanh.pop %v1852
    %v1860 = vmul.f32 %v1858, 0.0
    %1862 = vrot.lane.b32.xlu0 %v1859, 64
    %v1863 = vpop.permute.xlu0 %1862
    %v1865 = vmul.f32 %v1858, %v1863
    %1867 = vrot.lane.b32.xlu0 %v1865, 32
    %v1868 = vpop.permute.xlu0 %1867
    %v1870 = vadd.f32 %v1860, %v1868
    %v1871 = vtanh.pop %v1870
    %1873 = vrot.lane.b32.xlu0 %v1871, 64
    %v1874 = vpop.permute.xlu0 %1873
    %v1876 = vmul.f32 %v1858, %v1874
    %1877 = vmatprep.subr.bf16.mxu0 0
    %1878 = vmatpush1.bf16.msra.mxu0 %v1756
    %1879 = vmatprep.subr.bf16.mxu0 0
    %1880 = vmatpush1.bf16.msra.mxu0 %v1757
    %1881 = vmatprep.subr.bf16.mxu0 0
    %1882 = vmatpush1.bf16.msra.mxu0 0
    %1883 = vmatprep.subr.bf16.mxu0 0
    %1884 = vmatpush1.bf16.msra.mxu0 0
    %1885 = vmatprep.subr.bf16.mxu0 0
    %1886 = vmatpush1.bf16.msra.mxu0 0
    %1887 = vmatprep.subr.bf16.mxu0 0
    %1888 = vmatpush1.bf16.msra.mxu0 0
    %1889 = vmatprep.subr.bf16.mxu0 0
    %1890 = vmatpush1.bf16.msra.mxu0 0
    %1891 = vmatprep.subr.bf16.mxu0 0
    %1892 = vmatpush1.bf16.msra.mxu0 0
    %1893 = vmatprep.subr.bf16.mxu0 0
    %1894 = vmatpush1.bf16.msra.mxu0 0
    %1895 = vmatprep.subr.bf16.mxu0 0
    %1896 = vmatpush1.bf16.msra.mxu0 0
    %1897 = vmatprep.subr.bf16.mxu0 0
    %1898 = vmatpush1.bf16.msra.mxu0 0
    %1899 = vmatprep.subr.bf16.mxu0 0
    %1900 = vmatpush1.bf16.msra.mxu0 0
    %1901 = vmatprep.subr.bf16.mxu0 0
    %1902 = vmatpush1.bf16.msra.mxu0 0
    %1903 = vmatprep.subr.bf16.mxu0 0
    %1904 = vmatpush1.bf16.msra.mxu0 0
    %1905 = vmatprep.subr.bf16.mxu0 0
    %1906 = vmatpush1.bf16.msra.mxu0 0
    %1907 = vmatprep.subr.bf16.mxu0 0
    %1908 = vmatpush1.bf16.msra.mxu0 0
    %1909 = vmatprep.mubr.bf16.mxu0 0
    %1910 = vmatmul.mubr.bf16.gmra.mrb[0].mxu0 %v1108
    %v1911 = vpop.f32.mrb[0].mxu0
    %v1912 = vadd.f32 %v1746, %v1911
    %v1913 = vpop.f32.mrb[0].mxu0
    %v1914 = vpop.f32.mrb[0].mxu0
    %v1915 = vpop.f32.mrb[0].mxu0
    %1916 = vdwg.mxu0
    %v1917 = vpack.c.bf16 %v1876, %v1876
    %1919 = vrot.lane.b32.xlu0 %v1917, 32
    %v1920 = vpop.permute.xlu0 %1919
    %v1922 = vsel %vm180, %v1920, 0
    %1924 = vmatprep.subr.bf16.mxu0 0
    %1925 = vmatpush1.bf16.msra.mxu0 %v1808
    %1926 = vmatprep.subr.bf16.mxu0 0
    %1927 = vmatpush1.bf16.msra.mxu0 %v1809
    %1928 = vmatprep.subr.bf16.mxu0 0
    %1929 = vmatpush1.bf16.msra.mxu0 0
    %1930 = vmatprep.subr.bf16.mxu0 0
    %1931 = vmatpush1.bf16.msra.mxu0 0
    %1932 = vmatprep.subr.bf16.mxu0 0
    %1933 = vmatpush1.bf16.msra.mxu0 0
    %1934 = vmatprep.subr.bf16.mxu0 0
    %1935 = vmatpush1.bf16.msra.mxu0 0
    %1936 = vmatprep.subr.bf16.mxu0 0
    %1937 = vmatpush1.bf16.msra.mxu0 0
    %1938 = vmatprep.subr.bf16.mxu0 0
    %1939 = vmatpush1.bf16.msra.mxu0 0
    %1940 = vmatprep.subr.bf16.mxu0 0
    %1941 = vmatpush1.bf16.msra.mxu0 0
    %1942 = vmatprep.subr.bf16.mxu0 0
    %1943 = vmatpush1.bf16.msra.mxu0 0
    %1944 = vmatprep.subr.bf16.mxu0 0
    %1945 = vmatpush1.bf16.msra.mxu0 0
    %1946 = vmatprep.subr.bf16.mxu0 0
    %1947 = vmatpush1.bf16.msra.mxu0 0
    %1948 = vmatprep.subr.bf16.mxu0 0
    %1949 = vmatpush1.bf16.msra.mxu0 0
    %1950 = vmatprep.subr.bf16.mxu0 0
    %1951 = vmatpush1.bf16.msra.mxu0 0
    %1952 = vmatprep.subr.bf16.mxu0 0
    %1953 = vmatpush1.bf16.msra.mxu0 0
    %1954 = vmatprep.subr.bf16.mxu0 0
    %1955 = vmatpush1.bf16.msra.mxu0 0
    %1956 = vmatprep.mubr.bf16.mxu0 0
    %1957 = vmatmul.mubr.bf16.gmra.mrb[0].mxu0 %v1922
    %v1958 = vpop.f32.mrb[0].mxu0
    %v1959 = vadd.f32 0.0, %v1958
    %v1960 = vpop.f32.mrb[0].mxu0
    %v1961 = vpop.f32.mrb[0].mxu0
    %v1962 = vpop.f32.mrb[0].mxu0
    %1963 = vdwg.mxu0
    %v1964 = vadd.f32 %v1912, %v1959
    %v1965 = vxor.u32 %v1964, 2147483648
    %v1966 = vmul.f32 %v1965, 1.442695
    %v1967 = vpow.pop %v1966
    %v1968 = vadd.f32 %v1967, 1.0
    %v1969 = vrcp.pop %v1968
    %v1970 = vmul.f32 1.0, %v1969
    %v1971 = vtanh.pop %v1964
    %v1972 = vmul.f32 %v1970, %v1870
    %1974 = vrot.lane.b32.xlu0 %v1971, 64
    %v1975 = vpop.permute.xlu0 %1974
    %v1977 = vmul.f32 %v1970, %v1975
    %1979 = vrot.lane.b32.xlu0 %v1977, 32
    %v1980 = vpop.permute.xlu0 %1979
    %v1982 = vadd.f32 %v1972, %v1980
    %v1983 = vtanh.pop %v1982
    %1985 = vrot.lane.b32.xlu0 %v1983, 64
    %v1986 = vpop.permute.xlu0 %1985
    %v1988 = vmul.f32 %v1970, %v1986
    %1989 = vmatprep.subr.bf16.mxu0 0
    %1990 = vmatpush1.bf16.msra.mxu0 %v1756
    %1991 = vmatprep.subr.bf16.mxu0 0
    %1992 = vmatpush1.bf16.msra.mxu0 %v1757
    %1993 = vmatprep.subr.bf16.mxu0 0
    %1994 = vmatpush1.bf16.msra.mxu0 0
    %1995 = vmatprep.subr.bf16.mxu0 0
    %1996 = vmatpush1.bf16.msra.mxu0 0
    %1997 = vmatprep.subr.bf16.mxu0 0
    %1998 = vmatpush1.bf16.msra.mxu0 0
    %1999 = vmatprep.subr.bf16.mxu0 0
    %2000 = vmatpush1.bf16.msra.mxu0 0
    %2001 = vmatprep.subr.bf16.mxu0 0
    %2002 = vmatpush1.bf16.msra.mxu0 0
    %2003 = vmatprep.subr.bf16.mxu0 0
    %2004 = vmatpush1.bf16.msra.mxu0 0
    %2005 = vmatprep.subr.bf16.mxu0 0
    %2006 = vmatpush1.bf16.msra.mxu0 0
    %2007 = vmatprep.subr.bf16.mxu0 0
    %2008 = vmatpush1.bf16.msra.mxu0 0
    %2009 = vmatprep.subr.bf16.mxu0 0
    %2010 = vmatpush1.bf16.msra.mxu0 0
    %2011 = vmatprep.subr.bf16.mxu0 0
    %2012 = vmatpush1.bf16.msra.mxu0 0
    %2013 = vmatprep.subr.bf16.mxu0 0
    %2014 = vmatpush1.bf16.msra.mxu0 0
    %2015 = vmatprep.subr.bf16.mxu0 0
    %2016 = vmatpush1.bf16.msra.mxu0 0
    %2017 = vmatprep.subr.bf16.mxu0 0
    %2018 = vmatpush1.bf16.msra.mxu0 0
    %2019 = vmatprep.subr.bf16.mxu0 0
    %2020 = vmatpush1.bf16.msra.mxu0 0
    %2021 = vmatprep.mubr.bf16.mxu0 0
    %2022 = vmatmul.mubr.bf16.gmra.mrb[0].mxu0 %v1220
    %v2023 = vpop.f32.mrb[0].mxu0
    %v2024 = vadd.f32 %v1746, %v2023
    %v2025 = vpop.f32.mrb[0].mxu0
    %v2026 = vpop.f32.mrb[0].mxu0
    %v2027 = vpop.f32.mrb[0].mxu0
    %2028 = vdwg.mxu0
    %v2029 = vpack.c.bf16 %v1988, %v1988
    %2031 = vrot.lane.b32.xlu0 %v2029, 32
    %v2032 = vpop.permute.xlu0 %2031
    %v2034 = vsel %vm180, %v2032, 0
    %2036 = vmatprep.subr.bf16.mxu0 0
    %2037 = vmatpush1.bf16.msra.mxu0 %v1808
    %2038 = vmatprep.subr.bf16.mxu0 0
    %2039 = vmatpush1.bf16.msra.mxu0 %v1809
    %2040 = vmatprep.subr.bf16.mxu0 0
    %2041 = vmatpush1.bf16.msra.mxu0 0
    %2042 = vmatprep.subr.bf16.mxu0 0
    %2043 = vmatpush1.bf16.msra.mxu0 0
    %2044 = vmatprep.subr.bf16.mxu0 0
    %2045 = vmatpush1.bf16.msra.mxu0 0
    %2046 = vmatprep.subr.bf16.mxu0 0
    %2047 = vmatpush1.bf16.msra.mxu0 0
    %2048 = vmatprep.subr.bf16.mxu0 0
    %2049 = vmatpush1.bf16.msra.mxu0 0
    %2050 = vmatprep.subr.bf16.mxu0 0
    %2051 = vmatpush1.bf16.msra.mxu0 0
    %2052 = vmatprep.subr.bf16.mxu0 0
    %2053 = vmatpush1.bf16.msra.mxu0 0
    %2054 = vmatprep.subr.bf16.mxu0 0
    %2055 = vmatpush1.bf16.msra.mxu0 0
    %2056 = vmatprep.subr.bf16.mxu0 0
    %2057 = vmatpush1.bf16.msra.mxu0 0
    %2058 = vmatprep.subr.bf16.mxu0 0
    %2059 = vmatpush1.bf16.msra.mxu0 0
    %2060 = vmatprep.subr.bf16.mxu0 0
    %2061 = vmatpush1.bf16.msra.mxu0 0
    %2062 = vmatprep.subr.bf16.mxu0 0
    %2063 = vmatpush1.bf16.msra.mxu0 0
    %2064 = vmatprep.subr.bf16.mxu0 0
    %2065 = vmatpush1.bf16.msra.mxu0 0
    %2066 = vmatprep.subr.bf16.mxu0 0
    %2067 = vmatpush1.bf16.msra.mxu0 0
    %2068 = vmatprep.mubr.bf16.mxu0 0
    %2069 = vmatmul.mubr.bf16.gmra.mrb[0].mxu0 %v2034
    %v2070 = vpop.f32.mrb[0].mxu0
    %v2071 = vadd.f32 0.0, %v2070
    %v2072 = vpop.f32.mrb[0].mxu0
    %v2073 = vpop.f32.mrb[0].mxu0
    %v2074 = vpop.f32.mrb[0].mxu0
    %2075 = vdwg.mxu0
    %v2076 = vadd.f32 %v2024, %v2071
    %v2077 = vxor.u32 %v2076, 2147483648
    %v2078 = vmul.f32 %v2077, 1.442695
    %v2079 = vpow.pop %v2078
    %v2080 = vadd.f32 %v2079, 1.0
    %v2081 = vrcp.pop %v2080
    %v2082 = vmul.f32 1.0, %v2081
    %v2083 = vtanh.pop %v2076
    %v2084 = vmul.f32 %v2082, %v1982
    %2086 = vrot.lane.b32.xlu0 %v2083, 64
    %v2087 = vpop.permute.xlu0 %2086
    %v2089 = vmul.f32 %v2082, %v2087
    %2091 = vrot.lane.b32.xlu0 %v2089, 32
    %v2092 = vpop.permute.xlu0 %2091
    %v2094 = vadd.f32 %v2084, %v2092
    %v2095 = vtanh.pop %v2094
    %2097 = vrot.lane.b32.xlu0 %v2095, 64
    %v2098 = vpop.permute.xlu0 %2097
    %v2100 = vmul.f32 %v2082, %v2098
    %2101 = vmatprep.subr.bf16.mxu0 0
    %2102 = vmatpush1.bf16.msra.mxu0 %v1756
    %2103 = vmatprep.subr.bf16.mxu0 0
    %2104 = vmatpush1.bf16.msra.mxu0 %v1757
    %2105 = vmatprep.subr.bf16.mxu0 0
    %2106 = vmatpush1.bf16.msra.mxu0 0
    %2107 = vmatprep.subr.bf16.mxu0 0
    %2108 = vmatpush1.bf16.msra.mxu0 0
    %2109 = vmatprep.subr.bf16.mxu0 0
    %2110 = vmatpush1.bf16.msra.mxu0 0
    %2111 = vmatprep.subr.bf16.mxu0 0
    %2112 = vmatpush1.bf16.msra.mxu0 0
    %2113 = vmatprep.subr.bf16.mxu0 0
    %2114 = vmatpush1.bf16.msra.mxu0 0
    %2115 = vmatprep.subr.bf16.mxu0 0
    %2116 = vmatpush1.bf16.msra.mxu0 0
    %2117 = vmatprep.subr.bf16.mxu0 0
    %2118 = vmatpush1.bf16.msra.mxu0 0
    %2119 = vmatprep.subr.bf16.mxu0 0
    %2120 = vmatpush1.bf16.msra.mxu0 0
    %2121 = vmatprep.subr.bf16.mxu0 0
    %2122 = vmatpush1.bf16.msra.mxu0 0
    %2123 = vmatprep.subr.bf16.mxu0 0
    %2124 = vmatpush1.bf16.msra.mxu0 0
    %2125 = vmatprep.subr.bf16.mxu0 0
    %2126 = vmatpush1.bf16.msra.mxu0 0
    %2127 = vmatprep.subr.bf16.mxu0 0
    %2128 = vmatpush1.bf16.msra.mxu0 0
    %2129 = vmatprep.subr.bf16.mxu0 0
    %2130 = vmatpush1.bf16.msra.mxu0 0
    %2131 = vmatprep.subr.bf16.mxu0 0
    %2132 = vmatpush1.bf16.msra.mxu0 0
    %2133 = vmatprep.mubr.bf16.mxu0 0
    %2134 = vmatmul.mubr.bf16.gmra.mrb[0].mxu0 %v1332
    %v2135 = vpop.f32.mrb[0].mxu0
    %v2136 = vadd.f32 %v1746, %v2135
    %v2137 = vpop.f32.mrb[0].mxu0
    %v2138 = vpop.f32.mrb[0].mxu0
    %v2139 = vpop.f32.mrb[0].mxu0
    %2140 = vdwg.mxu0
    %v2141 = vpack.c.bf16 %v2100, %v2100
    %2143 = vrot.lane.b32.xlu0 %v2141, 32
    %v2144 = vpop.permute.xlu0 %2143
    %v2146 = vsel %vm180, %v2144, 0
    %2148 = vmatprep.subr.bf16.mxu0 0
    %2149 = vmatpush1.bf16.msra.mxu0 %v1808
    %2150 = vmatprep.subr.bf16.mxu0 0
    %2151 = vmatpush1.bf16.msra.mxu0 %v1809
    %2152 = vmatprep.subr.bf16.mxu0 0
    %2153 = vmatpush1.bf16.msra.mxu0 0
    %2154 = vmatprep.subr.bf16.mxu0 0
    %2155 = vmatpush1.bf16.msra.mxu0 0
    %2156 = vmatprep.subr.bf16.mxu0 0
    %2157 = vmatpush1.bf16.msra.mxu0 0
    %2158 = vmatprep.subr.bf16.mxu0 0
    %2159 = vmatpush1.bf16.msra.mxu0 0
    %2160 = vmatprep.subr.bf16.mxu0 0
    %2161 = vmatpush1.bf16.msra.mxu0 0
    %2162 = vmatprep.subr.bf16.mxu0 0
    %2163 = vmatpush1.bf16.msra.mxu0 0
    %2164 = vmatprep.subr.bf16.mxu0 0
    %2165 = vmatpush1.bf16.msra.mxu0 0
    %2166 = vmatprep.subr.bf16.mxu0 0
    %2167 = vmatpush1.bf16.msra.mxu0 0
    %2168 = vmatprep.subr.bf16.mxu0 0
    %2169 = vmatpush1.bf16.msra.mxu0 0
    %2170 = vmatprep.subr.bf16.mxu0 0
    %2171 = vmatpush1.bf16.msra.mxu0 0
    %2172 = vmatprep.subr.bf16.mxu0 0
    %2173 = vmatpush1.bf16.msra.mxu0 0
    %2174 = vmatprep.subr.bf16.mxu0 0
    %2175 = vmatpush1.bf16.msra.mxu0 0
    %2176 = vmatprep.subr.bf16.mxu0 0
    %2177 = vmatpush1.bf16.msra.mxu0 0
    %2178 = vmatprep.subr.bf16.mxu0 0
    %2179 = vmatpush1.bf16.msra.mxu0 0
    %2180 = vmatprep.mubr.bf16.mxu0 0
    %2181 = vmatmul.mubr.bf16.gmra.mrb[0].mxu0 %v2146
    %v2182 = vpop.f32.mrb[0].mxu0
    %v2183 = vadd.f32 0.0, %v2182
    %v2184 = vpop.f32.mrb[0].mxu0
    %v2185 = vpop.f32.mrb[0].mxu0
    %v2186 = vpop.f32.mrb[0].mxu0
    %2187 = vdwg.mxu0
    %v2188 = vadd.f32 %v2136, %v2183
    %v2189 = vxor.u32 %v2188, 2147483648
    %v2190 = vmul.f32 %v2189, 1.442695
    %v2191 = vpow.pop %v2190
    %v2192 = vadd.f32 %v2191, 1.0
    %v2193 = vrcp.pop %v2192
    %v2194 = vmul.f32 1.0, %v2193
    %v2195 = vtanh.pop %v2188
    %v2196 = vmul.f32 %v2194, %v2094
    %2198 = vrot.lane.b32.xlu0 %v2195, 64
    %v2199 = vpop.permute.xlu0 %2198
    %v2201 = vmul.f32 %v2194, %v2199
    %2203 = vrot.lane.b32.xlu0 %v2201, 32
    %v2204 = vpop.permute.xlu0 %2203
    %v2206 = vadd.f32 %v2196, %v2204
    %v2207 = vtanh.pop %v2206
    %2209 = vrot.lane.b32.xlu0 %v2207, 64
    %v2210 = vpop.permute.xlu0 %2209
    %v2212 = vmul.f32 %v2194, %v2210
    %2213 = vmatprep.subr.bf16.mxu0 0
    %2214 = vmatpush1.bf16.msra.mxu0 %v1756
    %2215 = vmatprep.subr.bf16.mxu0 0
    %2216 = vmatpush1.bf16.msra.mxu0 %v1757
    %2217 = vmatprep.subr.bf16.mxu0 0
    %2218 = vmatpush1.bf16.msra.mxu0 0
    %2219 = vmatprep.subr.bf16.mxu0 0
    %2220 = vmatpush1.bf16.msra.mxu0 0
    %2221 = vmatprep.subr.bf16.mxu0 0
    %2222 = vmatpush1.bf16.msra.mxu0 0
    %2223 = vmatprep.subr.bf16.mxu0 0
    %2224 = vmatpush1.bf16.msra.mxu0 0
    %2225 = vmatprep.subr.bf16.mxu0 0
    %2226 = vmatpush1.bf16.msra.mxu0 0
    %2227 = vmatprep.subr.bf16.mxu0 0
    %2228 = vmatpush1.bf16.msra.mxu0 0
    %2229 = vmatprep.subr.bf16.mxu0 0
    %2230 = vmatpush1.bf16.msra.mxu0 0
    %2231 = vmatprep.subr.bf16.mxu0 0
    %2232 = vmatpush1.bf16.msra.mxu0 0
    %2233 = vmatprep.subr.bf16.mxu0 0
    %2234 = vmatpush1.bf16.msra.mxu0 0
    %2235 = vmatprep.subr.bf16.mxu0 0
    %2236 = vmatpush1.bf16.msra.mxu0 0
    %2237 = vmatprep.subr.bf16.mxu0 0
    %2238 = vmatpush1.bf16.msra.mxu0 0
    %2239 = vmatprep.subr.bf16.mxu0 0
    %2240 = vmatpush1.bf16.msra.mxu0 0
    %2241 = vmatprep.subr.bf16.mxu0 0
    %2242 = vmatpush1.bf16.msra.mxu0 0
    %2243 = vmatprep.subr.bf16.mxu0 0
    %2244 = vmatpush1.bf16.msra.mxu0 0
    %2245 = vmatprep.mubr.bf16.mxu0 0
    %2246 = vmatmul.mubr.bf16.gmra.mrb[0].mxu0 %v1444
    %v2247 = vpop.f32.mrb[0].mxu0
    %v2248 = vadd.f32 %v1746, %v2247
    %v2249 = vpop.f32.mrb[0].mxu0
    %v2250 = vpop.f32.mrb[0].mxu0
    %v2251 = vpop.f32.mrb[0].mxu0
    %2252 = vdwg.mxu0
    %v2253 = vpack.c.bf16 %v2212, %v2212
    %2255 = vrot.lane.b32.xlu0 %v2253, 32
    %v2256 = vpop.permute.xlu0 %2255
    %v2258 = vsel %vm180, %v2256, 0
    %2260 = vmatprep.subr.bf16.mxu0 0
    %2261 = vmatpush1.bf16.msra.mxu0 %v1808
    %2262 = vmatprep.subr.bf16.mxu0 0
    %2263 = vmatpush1.bf16.msra.mxu0 %v1809
    %2264 = vmatprep.subr.bf16.mxu0 0
    %2265 = vmatpush1.bf16.msra.mxu0 0
    %2266 = vmatprep.subr.bf16.mxu0 0
    %2267 = vmatpush1.bf16.msra.mxu0 0
    %2268 = vmatprep.subr.bf16.mxu0 0
    %2269 = vmatpush1.bf16.msra.mxu0 0
    %2270 = vmatprep.subr.bf16.mxu0 0
    %2271 = vmatpush1.bf16.msra.mxu0 0
    %2272 = vmatprep.subr.bf16.mxu0 0
    %2273 = vmatpush1.bf16.msra.mxu0 0
    %2274 = vmatprep.subr.bf16.mxu0 0
    %2275 = vmatpush1.bf16.msra.mxu0 0
    %2276 = vmatprep.subr.bf16.mxu0 0
    %2277 = vmatpush1.bf16.msra.mxu0 0
    %2278 = vmatprep.subr.bf16.mxu0 0
    %2279 = vmatpush1.bf16.msra.mxu0 0
    %2280 = vmatprep.subr.bf16.mxu0 0
    %2281 = vmatpush1.bf16.msra.mxu0 0
    %2282 = vmatprep.subr.bf16.mxu0 0
    %2283 = vmatpush1.bf16.msra.mxu0 0
    %2284 = vmatprep.subr.bf16.mxu0 0
    %2285 = vmatpush1.bf16.msra.mxu0 0
    %2286 = vmatprep.subr.bf16.mxu0 0
    %2287 = vmatpush1.bf16.msra.mxu0 0
    %2288 = vmatprep.subr.bf16.mxu0 0
    %2289 = vmatpush1.bf16.msra.mxu0 0
    %2290 = vmatprep.subr.bf16.mxu0 0
    %2291 = vmatpush1.bf16.msra.mxu0 0
    %2292 = vmatprep.mubr.bf16.mxu0 0
    %2293 = vmatmul.mubr.bf16.gmra.mrb[0].mxu0 %v2258
    %v2294 = vpop.f32.mrb[0].mxu0
    %v2295 = vadd.f32 0.0, %v2294
    %v2296 = vpop.f32.mrb[0].mxu0
    %v2297 = vpop.f32.mrb[0].mxu0
    %v2298 = vpop.f32.mrb[0].mxu0
    %2299 = vdwg.mxu0
    %v2300 = vadd.f32 %v2248, %v2295
    %v2301 = vxor.u32 %v2300, 2147483648
    %v2302 = vmul.f32 %v2301, 1.442695
    %v2303 = vpow.pop %v2302
    %v2304 = vadd.f32 %v2303, 1.0
    %v2305 = vrcp.pop %v2304
    %v2306 = vmul.f32 1.0, %v2305
    %v2307 = vtanh.pop %v2300
    %v2308 = vmul.f32 %v2306, %v2206
    %2310 = vrot.lane.b32.xlu0 %v2307, 64
    %v2311 = vpop.permute.xlu0 %2310
    %v2313 = vmul.f32 %v2306, %v2311
    %2315 = vrot.lane.b32.xlu0 %v2313, 32
    %v2316 = vpop.permute.xlu0 %2315
    %v2318 = vadd.f32 %v2308, %v2316
    %v2319 = vtanh.pop %v2318
    %2321 = vrot.lane.b32.xlu0 %v2319, 64
    %v2322 = vpop.permute.xlu0 %2321
    %v2324 = vmul.f32 %v2306, %v2322
    %2325 = vmatprep.subr.bf16.mxu0 0
    %2326 = vmatpush1.bf16.msra.mxu0 %v1756
    %2327 = vmatprep.subr.bf16.mxu0 0
    %2328 = vmatpush1.bf16.msra.mxu0 %v1757
    %2329 = vmatprep.subr.bf16.mxu0 0
    %2330 = vmatpush1.bf16.msra.mxu0 0
    %2331 = vmatprep.subr.bf16.mxu0 0
    %2332 = vmatpush1.bf16.msra.mxu0 0
    %2333 = vmatprep.subr.bf16.mxu0 0
    %2334 = vmatpush1.bf16.msra.mxu0 0
    %2335 = vmatprep.subr.bf16.mxu0 0
    %2336 = vmatpush1.bf16.msra.mxu0 0
    %2337 = vmatprep.subr.bf16.mxu0 0
    %2338 = vmatpush1.bf16.msra.mxu0 0
    %2339 = vmatprep.subr.bf16.mxu0 0
    %2340 = vmatpush1.bf16.msra.mxu0 0
    %2341 = vmatprep.subr.bf16.mxu0 0
    %2342 = vmatpush1.bf16.msra.mxu0 0
    %2343 = vmatprep.subr.bf16.mxu0 0
    %2344 = vmatpush1.bf16.msra.mxu0 0
    %2345 = vmatprep.subr.bf16.mxu0 0
    %2346 = vmatpush1.bf16.msra.mxu0 0
    %2347 = vmatprep.subr.bf16.mxu0 0
    %2348 = vmatpush1.bf16.msra.mxu0 0
    %2349 = vmatprep.subr.bf16.mxu0 0
    %2350 = vmatpush1.bf16.msra.mxu0 0
    %2351 = vmatprep.subr.bf16.mxu0 0
    %2352 = vmatpush1.bf16.msra.mxu0 0
    %2353 = vmatprep.subr.bf16.mxu0 0
    %2354 = vmatpush1.bf16.msra.mxu0 0
    %2355 = vmatprep.subr.bf16.mxu0 0
    %2356 = vmatpush1.bf16.msra.mxu0 0
    %2357 = vmatprep.mubr.bf16.mxu0 0
    %2358 = vmatmul.mubr.bf16.gmra.mrb[0].mxu0 %v1556
    %v2359 = vpop.f32.mrb[0].mxu0
    %v2360 = vadd.f32 %v1746, %v2359
    %v2361 = vpop.f32.mrb[0].mxu0
    %v2362 = vpop.f32.mrb[0].mxu0
    %v2363 = vpop.f32.mrb[0].mxu0
    %2364 = vdwg.mxu0
    %v2365 = vpack.c.bf16 %v2324, %v2324
    %2367 = vrot.lane.b32.xlu0 %v2365, 32
    %v2368 = vpop.permute.xlu0 %2367
    %v2370 = vsel %vm180, %v2368, 0
    %2372 = vmatprep.subr.bf16.mxu0 0
    %2373 = vmatpush1.bf16.msra.mxu0 %v1808
    %2374 = vmatprep.subr.bf16.mxu0 0
    %2375 = vmatpush1.bf16.msra.mxu0 %v1809
    %2376 = vmatprep.subr.bf16.mxu0 0
    %2377 = vmatpush1.bf16.msra.mxu0 0
    %2378 = vmatprep.subr.bf16.mxu0 0
    %2379 = vmatpush1.bf16.msra.mxu0 0
    %2380 = vmatprep.subr.bf16.mxu0 0
    %2381 = vmatpush1.bf16.msra.mxu0 0
    %2382 = vmatprep.subr.bf16.mxu0 0
    %2383 = vmatpush1.bf16.msra.mxu0 0
    %2384 = vmatprep.subr.bf16.mxu0 0
    %2385 = vmatpush1.bf16.msra.mxu0 0
    %2386 = vmatprep.subr.bf16.mxu0 0
    %2387 = vmatpush1.bf16.msra.mxu0 0
    %2388 = vmatprep.subr.bf16.mxu0 0
    %2389 = vmatpush1.bf16.msra.mxu0 0
    %2390 = vmatprep.subr.bf16.mxu0 0
    %2391 = vmatpush1.bf16.msra.mxu0 0
    %2392 = vmatprep.subr.bf16.mxu0 0
    %2393 = vmatpush1.bf16.msra.mxu0 0
    %2394 = vmatprep.subr.bf16.mxu0 0
    %2395 = vmatpush1.bf16.msra.mxu0 0
    %2396 = vmatprep.subr.bf16.mxu0 0
    %2397 = vmatpush1.bf16.msra.mxu0 0
    %2398 = vmatprep.subr.bf16.mxu0 0
    %2399 = vmatpush1.bf16.msra.mxu0 0
    %2400 = vmatprep.subr.bf16.mxu0 0
    %2401 = vmatpush1.bf16.msra.mxu0 0
    %2402 = vmatprep.subr.bf16.mxu0 0
    %2403 = vmatpush1.bf16.msra.mxu0 0
    %2404 = vmatprep.mubr.bf16.mxu0 0
    %2405 = vmatmul.mubr.bf16.gmra.mrb[0].mxu0 %v2370
    %v2406 = vpop.f32.mrb[0].mxu0
    %v2407 = vadd.f32 0.0, %v2406
    %v2408 = vpop.f32.mrb[0].mxu0
    %v2409 = vpop.f32.mrb[0].mxu0
    %v2410 = vpop.f32.mrb[0].mxu0
    %2411 = vdwg.mxu0
    %v2412 = vadd.f32 %v2360, %v2407
    %v2413 = vxor.u32 %v2412, 2147483648
    %v2414 = vmul.f32 %v2413, 1.442695
    %v2415 = vpow.pop %v2414
    %v2416 = vadd.f32 %v2415, 1.0
    %v2417 = vrcp.pop %v2416
    %v2418 = vmul.f32 1.0, %v2417
    %v2419 = vtanh.pop %v2412
    %v2420 = vmul.f32 %v2418, %v2318
    %2422 = vrot.lane.b32.xlu0 %v2419, 64
    %v2423 = vpop.permute.xlu0 %2422
    %v2425 = vmul.f32 %v2418, %v2423
    %2427 = vrot.lane.b32.xlu0 %v2425, 32
    %v2428 = vpop.permute.xlu0 %2427
    %v2430 = vadd.f32 %v2420, %v2428
    %v2431 = vtanh.pop %v2430
    %2433 = vrot.lane.b32.xlu0 %v2431, 64
    %v2434 = vpop.permute.xlu0 %2433
    %v2436 = vmul.f32 %v2418, %v2434
    %2437 = vmatprep.subr.bf16.mxu0 0
    %2438 = vmatpush1.bf16.msra.mxu0 %v1756
    %2439 = vmatprep.subr.bf16.mxu0 0
    %2440 = vmatpush1.bf16.msra.mxu0 %v1757
    %2441 = vmatprep.subr.bf16.mxu0 0
    %2442 = vmatpush1.bf16.msra.mxu0 0
    %2443 = vmatprep.subr.bf16.mxu0 0
    %2444 = vmatpush1.bf16.msra.mxu0 0
    %2445 = vmatprep.subr.bf16.mxu0 0
    %2446 = vmatpush1.bf16.msra.mxu0 0
    %2447 = vmatprep.subr.bf16.mxu0 0
    %2448 = vmatpush1.bf16.msra.mxu0 0
    %2449 = vmatprep.subr.bf16.mxu0 0
    %2450 = vmatpush1.bf16.msra.mxu0 0
    %2451 = vmatprep.subr.bf16.mxu0 0
    %2452 = vmatpush1.bf16.msra.mxu0 0
    %2453 = vmatprep.subr.bf16.mxu0 0
    %2454 = vmatpush1.bf16.msra.mxu0 0
    %2455 = vmatprep.subr.bf16.mxu0 0
    %2456 = vmatpush1.bf16.msra.mxu0 0
    %2457 = vmatprep.subr.bf16.mxu0 0
    %2458 = vmatpush1.bf16.msra.mxu0 0
    %2459 = vmatprep.subr.bf16.mxu0 0
    %2460 = vmatpush1.bf16.msra.mxu0 0
    %2461 = vmatprep.subr.bf16.mxu0 0
    %2462 = vmatpush1.bf16.msra.mxu0 0
    %2463 = vmatprep.subr.bf16.mxu0 0
    %2464 = vmatpush1.bf16.msra.mxu0 0
    %2465 = vmatprep.subr.bf16.mxu0 0
    %2466 = vmatpush1.bf16.msra.mxu0 0
    %2467 = vmatprep.subr.bf16.mxu0 0
    %2468 = vmatpush1.bf16.msra.mxu0 0
    %2469 = vmatprep.mubr.bf16.mxu0 0
    %2470 = vmatmul.mubr.bf16.gmra.mrb[0].mxu0 %v1675
    %v2471 = vpop.f32.mrb[0].mxu0
    %v2472 = vadd.f32 %v1746, %v2471
    %v2473 = vpop.f32.mrb[0].mxu0
    %v2474 = vpop.f32.mrb[0].mxu0
    %v2475 = vpop.f32.mrb[0].mxu0
    %2476 = vdwg.mxu0
    %v2477 = vpack.c.bf16 %v2436, %v2436
    %2479 = vrot.lane.b32.xlu0 %v2477, 32
    %v2480 = vpop.permute.xlu0 %2479
    %v2482 = vsel %vm180, %v2480, 0
    %2484 = vmatprep.subr.bf16.mxu0 0
    %2485 = vmatpush1.bf16.msra.mxu0 %v1808
    %2486 = vmatprep.subr.bf16.mxu0 0
    %2487 = vmatpush1.bf16.msra.mxu0 %v1809
    %2488 = vmatprep.subr.bf16.mxu0 0
    %2489 = vmatpush1.bf16.msra.mxu0 0
    %2490 = vmatprep.subr.bf16.mxu0 0
    %2491 = vmatpush1.bf16.msra.mxu0 0
    %2492 = vmatprep.subr.bf16.mxu0 0
    %2493 = vmatpush1.bf16.msra.mxu0 0
    %2494 = vmatprep.subr.bf16.mxu0 0
    %2495 = vmatpush1.bf16.msra.mxu0 0
    %2496 = vmatprep.subr.bf16.mxu0 0
    %2497 = vmatpush1.bf16.msra.mxu0 0
    %2498 = vmatprep.subr.bf16.mxu0 0
    %2499 = vmatpush1.bf16.msra.mxu0 0
    %2500 = vmatprep.subr.bf16.mxu0 0
    %2501 = vmatpush1.bf16.msra.mxu0 0
    %2502 = vmatprep.subr.bf16.mxu0 0
    %2503 = vmatpush1.bf16.msra.mxu0 0
    %2504 = vmatprep.subr.bf16.mxu0 0
    %2505 = vmatpush1.bf16.msra.mxu0 0
    %2506 = vmatprep.subr.bf16.mxu0 0
    %2507 = vmatpush1.bf16.msra.mxu0 0
    %2508 = vmatprep.subr.bf16.mxu0 0
    %2509 = vmatpush1.bf16.msra.mxu0 0
    %2510 = vmatprep.subr.bf16.mxu0 0
    %2511 = vmatpush1.bf16.msra.mxu0 0
    %2512 = vmatprep.subr.bf16.mxu0 0
    %2513 = vmatpush1.bf16.msra.mxu0 0
    %2514 = vmatprep.subr.bf16.mxu0 0
    %2515 = vmatpush1.bf16.msra.mxu0 0
    %2516 = vmatprep.mubr.bf16.mxu0 0
    %2517 = vmatmul.mubr.bf16.gmra.mrb[0].mxu0 %v2482
    %v2518 = vpop.f32.mrb[0].mxu0
    %v2519 = vadd.f32 0.0, %v2518
    %v2520 = vpop.f32.mrb[0].mxu0
    %v2521 = vpop.f32.mrb[0].mxu0
    %v2522 = vpop.f32.mrb[0].mxu0
    %2523 = vdwg.mxu0
    %v2524 = vadd.f32 %v2472, %v2519
    %v2525 = vxor.u32 %v2524, 2147483648
    %v2526 = vmul.f32 %v2525, 1.442695
    %v2527 = vpow.pop %v2526
    %v2528 = vadd.f32 %v2527, 1.0
    %v2529 = vrcp.pop %v2528
    %v2530 = vmul.f32 1.0, %v2529
    %v2531 = vtanh.pop %v2524
    %v2532 = vmul.f32 %v2530, %v2430
    %2534 = vrot.lane.b32.xlu0 %v2531, 64
    %v2535 = vpop.permute.xlu0 %2534
    %v2537 = vmul.f32 %v2530, %v2535
    %2539 = vrot.lane.b32.xlu0 %v2537, 32
    %v2540 = vpop.permute.xlu0 %2539
    %v2542 = vadd.f32 %v2532, %v2540
    %v2543 = vtanh.pop %v2542
    %2545 = vrot.lane.b32.xlu0 %v2543, 64
    %v2546 = vpop.permute.xlu0 %2545
    %v2548 = vmul.f32 %v2530, %v2546
    %v2549 = vpack.c.bf16 %v1741, %v1741
    %2551 = vrot.lane.b32.xlu0 %v2549, 32
    %v2552 = vpop.permute.xlu0 %2551
    %v2554 = vsel %vm180, %v2552, 0
    %2556 = vmatprep.subr.bf16.mxu0 0
    %2557 = vmatpush1.bf16.msra.mxu0 %v1756
    %2558 = vmatprep.subr.bf16.mxu0 0
    %2559 = vmatpush1.bf16.msra.mxu0 %v1757
    %2560 = vmatprep.subr.bf16.mxu0 0
    %2561 = vmatpush1.bf16.msra.mxu0 0
    %2562 = vmatprep.subr.bf16.mxu0 0
    %2563 = vmatpush1.bf16.msra.mxu0 0
    %2564 = vmatprep.subr.bf16.mxu0 0
    %2565 = vmatpush1.bf16.msra.mxu0 0
    %2566 = vmatprep.subr.bf16.mxu0 0
    %2567 = vmatpush1.bf16.msra.mxu0 0
    %2568 = vmatprep.subr.bf16.mxu0 0
    %2569 = vmatpush1.bf16.msra.mxu0 0
    %2570 = vmatprep.subr.bf16.mxu0 0
    %2571 = vmatpush1.bf16.msra.mxu0 0
    %2572 = vmatprep.subr.bf16.mxu0 0
    %2573 = vmatpush1.bf16.msra.mxu0 0
    %2574 = vmatprep.subr.bf16.mxu0 0
    %2575 = vmatpush1.bf16.msra.mxu0 0
    %2576 = vmatprep.subr.bf16.mxu0 0
    %2577 = vmatpush1.bf16.msra.mxu0 0
    %2578 = vmatprep.subr.bf16.mxu0 0
    %2579 = vmatpush1.bf16.msra.mxu0 0
    %2580 = vmatprep.subr.bf16.mxu0 0
    %2581 = vmatpush1.bf16.msra.mxu0 0
    %2582 = vmatprep.subr.bf16.mxu0 0
    %2583 = vmatpush1.bf16.msra.mxu0 0
    %2584 = vmatprep.subr.bf16.mxu0 0
    %2585 = vmatpush1.bf16.msra.mxu0 0
    %2586 = vmatprep.subr.bf16.mxu0 0
    %2587 = vmatpush1.bf16.msra.mxu0 0
    %2588 = vmatprep.mubr.bf16.mxu0 0
    %2589 = vmatmul.mubr.bf16.gmra.mrb[0].mxu0 %v2554
    %v2590 = vpop.f32.mrb[0].mxu0
    %v2591 = vadd.f32 %v1746, %v2590
    %v2592 = vpop.f32.mrb[0].mxu0
    %v2593 = vpop.f32.mrb[0].mxu0
    %v2594 = vpop.f32.mrb[0].mxu0
    %2595 = vdwg.mxu0
    %v2596 = vpack.c.bf16 %v2548, %v2548
    %2598 = vrot.lane.b32.xlu0 %v2596, 32
    %v2599 = vpop.permute.xlu0 %2598
    %v2601 = vsel %vm180, %v2599, 0
    %2603 = vmatprep.subr.bf16.mxu0 0
    %2604 = vmatpush1.bf16.msra.mxu0 %v1808
    %2605 = vmatprep.subr.bf16.mxu0 0
    %2606 = vmatpush1.bf16.msra.mxu0 %v1809
    %2607 = vmatprep.subr.bf16.mxu0 0
    %2608 = vmatpush1.bf16.msra.mxu0 0
    %2609 = vmatprep.subr.bf16.mxu0 0
    %2610 = vmatpush1.bf16.msra.mxu0 0
    %2611 = vmatprep.subr.bf16.mxu0 0
    %2612 = vmatpush1.bf16.msra.mxu0 0
    %2613 = vmatprep.subr.bf16.mxu0 0
    %2614 = vmatpush1.bf16.msra.mxu0 0
    %2615 = vmatprep.subr.bf16.mxu0 0
    %2616 = vmatpush1.bf16.msra.mxu0 0
    %2617 = vmatprep.subr.bf16.mxu0 0
    %2618 = vmatpush1.bf16.msra.mxu0 0
    %2619 = vmatprep.subr.bf16.mxu0 0
    %2620 = vmatpush1.bf16.msra.mxu0 0
    %2621 = vmatprep.subr.bf16.mxu0 0
    %2622 = vmatpush1.bf16.msra.mxu0 0
    %2623 = vmatprep.subr.bf16.mxu0 0
    %2624 = vmatpush1.bf16.msra.mxu0 0
    %2625 = vmatprep.subr.bf16.mxu0 0
    %2626 = vmatpush1.bf16.msra.mxu0 0
    %2627 = vmatprep.subr.bf16.mxu0 0
    %2628 = vmatpush1.bf16.msra.mxu0 0
    %2629 = vmatprep.subr.bf16.mxu0 0
    %2630 = vmatpush1.bf16.msra.mxu0 0
    %2631 = vmatprep.subr.bf16.mxu0 0
    %2632 = vmatpush1.bf16.msra.mxu0 0
    %2633 = vmatprep.subr.bf16.mxu0 0
    %2634 = vmatpush1.bf16.msra.mxu0 0
    %2635 = vmatprep.mubr.bf16.mxu0 0
    %2636 = vmatmul.mubr.bf16.gmra.mrb[0].mxu0 %v2601
    %v2637 = vpop.f32.mrb[0].mxu0
    %v2638 = vadd.f32 0.0, %v2637
    %v2639 = vpop.f32.mrb[0].mxu0
    %v2640 = vpop.f32.mrb[0].mxu0
    %v2641 = vpop.f32.mrb[0].mxu0
    %2642 = vdwg.mxu0
    %v2643 = vadd.f32 %v2591, %v2638
    %v2644 = vxor.u32 %v2643, 2147483648
    %v2645 = vmul.f32 %v2644, 1.442695
    %v2646 = vpow.pop %v2645
    %v2647 = vadd.f32 %v2646, 1.0
    %v2648 = vrcp.pop %v2647
    %v2649 = vmul.f32 1.0, %v2648
    %v2650 = vtanh.pop %v2643
    %v2651 = vmul.f32 %v2649, %v2542
    %2653 = vrot.lane.b32.xlu0 %v2650, 64
    %v2654 = vpop.permute.xlu0 %2653
    %v2656 = vmul.f32 %v2649, %v2654
    %2658 = vrot.lane.b32.xlu0 %v2656, 32
    %v2659 = vpop.permute.xlu0 %2658
    %v2661 = vadd.f32 %v2651, %v2659
    %v2662 = vtanh.pop %v2661
    %2664 = vrot.lane.b32.xlu0 %v2662, 64
    %v2665 = vpop.permute.xlu0 %2664
    %v2667 = vmul.f32 %v2649, %v2665
    %v2668 = vpack.c.bf16 %v1988, %v1876
    %v2669 = vpack.c.bf16 %v2212, %v2100
    %v2670 = vpack.c.bf16 %v2436, %v2324
    %v2671 = vpack.c.bf16 %v2667, %v2548
    %v2672 = vld [vmem:[%s10] sm:$0xf]
    %v2673 = vld [vmem:[%s10 + $0x4] sm:$0xf]
    %v2674 = vld [vmem:[%s10 + $0x8] sm:$0xf]
    %v2675 = vld [vmem:[%s10 + $0xc] sm:$0xf]
    %v2676 = vld [vmem:[#allocation7] sm:$0x1]
    %v2678 = vlaneseq
    %v2679 = vshrl.u32 %v2678, 7
    %v2680 = vsub.s32 0, %v2679
    %v2681 = vrot.slane %v2676, %v2680
    %2687 = vrot.lane.b32.xlu0 %v2668, 32
    %v2688 = vpop.permute.xlu0 %2687
    %2689 = vrot.lane.b32.xlu0 %v2669, 32
    %v2690 = vpop.permute.xlu0 %2689
    %2691 = vrot.lane.b32.xlu0 %v2670, 32
    %v2692 = vpop.permute.xlu0 %2691
    %2693 = vrot.lane.b32.xlu0 %v2671, 32
    %v2694 = vpop.permute.xlu0 %2693
    %v2699 = vunpack.c.l.b16 %v2672
    %v2700 = vunpack.c.l.b16 %v2673
    %v2701 = vunpack.c.l.b16 %v2674
    %v2702 = vunpack.c.l.b16 %v2675
    %v2703 = vpack.c.b16 %v2700, %v2699
    %v2704 = vpack.c.b16 %v2702, %v2701
    %v2708 = vsel %vm180, %v2688, 0
    %v2711 = vsel %vm180, %v2690, 0
    %v2714 = vsel %vm180, %v2692, 0
    %v2717 = vsel %vm180, %v2694, 0
    %2719 = vmatprep.subr.bf16.mxu0 0
    %2720 = vmatpush1.bf16.msra.mxu0 %v2703
    %2721 = vmatprep.subr.bf16.mxu0 0
    %2722 = vmatpush1.bf16.msra.mxu0 %v2704
    %2723 = vmatprep.subr.bf16.mxu0 0
    %2724 = vmatpush1.bf16.msra.mxu0 0
    %2725 = vmatprep.subr.bf16.mxu0 0
    %2726 = vmatpush1.bf16.msra.mxu0 0
    %2727 = vmatprep.subr.bf16.mxu0 0
    %2728 = vmatpush1.bf16.msra.mxu0 0
    %2729 = vmatprep.subr.bf16.mxu0 0
    %2730 = vmatpush1.bf16.msra.mxu0 0
    %2731 = vmatprep.subr.bf16.mxu0 0
    %2732 = vmatpush1.bf16.msra.mxu0 0
    %2733 = vmatprep.subr.bf16.mxu0 0
    %2734 = vmatpush1.bf16.msra.mxu0 0
    %2735 = vmatprep.subr.bf16.mxu0 0
    %2736 = vmatpush1.bf16.msra.mxu0 0
    %2737 = vmatprep.subr.bf16.mxu0 0
    %2738 = vmatpush1.bf16.msra.mxu0 0
    %2739 = vmatprep.subr.bf16.mxu0 0
    %2740 = vmatpush1.bf16.msra.mxu0 0
    %2741 = vmatprep.subr.bf16.mxu0 0
    %2742 = vmatpush1.bf16.msra.mxu0 0
    %2743 = vmatprep.subr.bf16.mxu0 0
    %2744 = vmatpush1.bf16.msra.mxu0 0
    %2745 = vmatprep.subr.bf16.mxu0 0
    %2746 = vmatpush1.bf16.msra.mxu0 0
    %2747 = vmatprep.subr.bf16.mxu0 0
    %2748 = vmatpush1.bf16.msra.mxu0 0
    %2749 = vmatprep.subr.bf16.mxu0 0
    %2750 = vmatpush1.bf16.msra.mxu0 0
    %2751 = vmatprep.mubr.bf16.mxu0 0
    %2752 = vmatmul.mubr.bf16.gmra.mrb[0].mxu0 %v2708
    %v2753 = vpop.f32.mrb[0].mxu0
    %v2754 = vadd.f32 %v2681, %v2753
    %v2755 = vpop.f32.mrb[0].mxu0
    %v2756 = vpop.f32.mrb[0].mxu0
    %v2757 = vadd.f32 %v2681, %v2756
    %v2758 = vpop.f32.mrb[0].mxu0
    %2759 = vmatprep.mubr.bf16.mxu0 0
    %2760 = vmatmul.mubr.bf16.gmra.mrb[0].mxu0 %v2711
    %v2761 = vpop.f32.mrb[0].mxu0
    %v2762 = vadd.f32 %v2681, %v2761
    %v2763 = vpop.f32.mrb[0].mxu0
    %v2764 = vpop.f32.mrb[0].mxu0
    %v2765 = vadd.f32 %v2681, %v2764
    %v2766 = vpop.f32.mrb[0].mxu0
    %2767 = vmatprep.mubr.bf16.mxu0 0
    %2768 = vmatmul.mubr.bf16.gmra.mrb[0].mxu0 %v2714
    %v2769 = vpop.f32.mrb[0].mxu0
    %v2770 = vadd.f32 %v2681, %v2769
    %v2771 = vpop.f32.mrb[0].mxu0
    %v2772 = vpop.f32.mrb[0].mxu0
    %v2773 = vadd.f32 %v2681, %v2772
    %v2774 = vpop.f32.mrb[0].mxu0
    %2775 = vmatprep.mubr.bf16.mxu0 0
    %2776 = vmatmul.mubr.bf16.gmra.mrb[0].mxu0 %v2717
    %v2777 = vpop.f32.mrb[0].mxu0
    %v2778 = vadd.f32 %v2681, %v2777
    %v2779 = vpop.f32.mrb[0].mxu0
    %v2780 = vpop.f32.mrb[0].mxu0
    %v2781 = vadd.f32 %v2681, %v2780
    %v2782 = vpop.f32.mrb[0].mxu0
    %2783 = vdwg.mxu0
    %v2784 = vxor.u32 %v2754, 2147483648
    %v2785 = vxor.u32 %v2757, 2147483648
    %v2786 = vxor.u32 %v2762, 2147483648
    %v2787 = vxor.u32 %v2765, 2147483648
    %v2788 = vxor.u32 %v2770, 2147483648
    %v2789 = vxor.u32 %v2773, 2147483648
    %v2790 = vxor.u32 %v2778, 2147483648
    %v2791 = vxor.u32 %v2781, 2147483648
    %v2792 = vmul.f32 %v2784, 1.442695
    %v2793 = vpow.pop %v2792
    %v2794 = vmul.f32 %v2785, 1.442695
    %v2795 = vpow.pop %v2794
    %v2796 = vmul.f32 %v2786, 1.442695
    %v2797 = vpow.pop %v2796
    %v2798 = vmul.f32 %v2787, 1.442695
    %v2799 = vpow.pop %v2798
    %v2800 = vmul.f32 %v2788, 1.442695
    %v2801 = vpow.pop %v2800
    %v2802 = vmul.f32 %v2789, 1.442695
    %v2803 = vpow.pop %v2802
    %v2804 = vmul.f32 %v2790, 1.442695
    %v2805 = vpow.pop %v2804
    %v2806 = vmul.f32 %v2791, 1.442695
    %v2807 = vpow.pop %v2806
    %v2808 = vadd.f32 %v2793, 1.0
    %v2809 = vadd.f32 %v2795, 1.0
    %v2810 = vadd.f32 %v2797, 1.0
    %v2811 = vadd.f32 %v2799, 1.0
    %v2812 = vadd.f32 %v2801, 1.0
    %v2813 = vadd.f32 %v2803, 1.0
    %v2814 = vadd.f32 %v2805, 1.0
    %v2815 = vadd.f32 %v2807, 1.0
    %v2816 = vrcp.pop %v2808
    %v2817 = vmul.f32 1.0, %v2816
    %v2818 = vrcp.pop %v2809
    %v2819 = vmul.f32 1.0, %v2818
    %v2820 = vrcp.pop %v2810
    %v2821 = vmul.f32 1.0, %v2820
    %v2822 = vrcp.pop %v2811
    %v2823 = vmul.f32 1.0, %v2822
    %v2824 = vrcp.pop %v2812
    %v2825 = vmul.f32 1.0, %v2824
    %v2826 = vrcp.pop %v2813
    %v2827 = vmul.f32 1.0, %v2826
    %v2828 = vrcp.pop %v2814
    %v2829 = vmul.f32 1.0, %v2828
    %v2830 = vrcp.pop %v2815
    %v2831 = vmul.f32 1.0, %v2830
    %v2832 = vmul.f32 %v2754, %v2817
    %v2833 = vmul.f32 %v2757, %v2819
    %v2834 = vmul.f32 %v2762, %v2821
    %v2835 = vmul.f32 %v2765, %v2823
    %v2836 = vmul.f32 %v2770, %v2825
    %v2837 = vmul.f32 %v2773, %v2827
    %v2838 = vmul.f32 %v2778, %v2829
    %v2839 = vmul.f32 %v2781, %v2831
    %v2840 = vpack.c.bf16 %v2833, %v2832
    %v2841 = vpack.c.bf16 %v2835, %v2834
    %v2842 = vpack.c.bf16 %v2837, %v2836
    %v2843 = vpack.c.bf16 %v2839, %v2838
    %v2844 = vld [vmem:[%s12] sm:$0xf]
    %v2845 = vld [vmem:[%s12 + $0x4] sm:$0xf]
    %v2846 = vld [vmem:[%s12 + $0x8] sm:$0xf]
    %v2847 = vld [vmem:[%s12 + $0xc] sm:$0xf]
    %v2848 = vld [vmem:[#allocation9] sm:$0x1]
    %v2850 = vlaneseq
    %v2851 = vshrl.u32 %v2850, 7
    %v2852 = vsub.s32 0, %v2851
    %v2853 = vrot.slane %v2848, %v2852
    %v2859 = vunpack.c.l.b16 %v2844
    %v2860 = vunpack.c.l.b16 %v2845
    %v2861 = vunpack.c.l.b16 %v2846
    %v2862 = vunpack.c.l.b16 %v2847
    %v2863 = vpack.c.b16 %v2860, %v2859
    %v2864 = vpack.c.b16 %v2862, %v2861
    %v2868 = vsel %vm180, %v2840, 0
    %v2871 = vsel %vm180, %v2841, 0
    %v2874 = vsel %vm180, %v2842, 0
    %v2877 = vsel %vm180, %v2843, 0
    %2879 = vmatprep.subr.bf16.mxu0 0
    %2880 = vmatpush1.bf16.msra.mxu0 %v2863
    %2881 = vmatprep.subr.bf16.mxu0 0
    %2882 = vmatpush1.bf16.msra.mxu0 %v2864
    %2883 = vmatprep.subr.bf16.mxu0 0
    %2884 = vmatpush1.bf16.msra.mxu0 0
    %2885 = vmatprep.subr.bf16.mxu0 0
    %2886 = vmatpush1.bf16.msra.mxu0 0
    %2887 = vmatprep.subr.bf16.mxu0 0
    %2888 = vmatpush1.bf16.msra.mxu0 0
    %2889 = vmatprep.subr.bf16.mxu0 0
    %2890 = vmatpush1.bf16.msra.mxu0 0
    %2891 = vmatprep.subr.bf16.mxu0 0
    %2892 = vmatpush1.bf16.msra.mxu0 0
    %2893 = vmatprep.subr.bf16.mxu0 0
    %2894 = vmatpush1.bf16.msra.mxu0 0
    %2895 = vmatprep.subr.bf16.mxu0 0
    %2896 = vmatpush1.bf16.msra.mxu0 0
    %2897 = vmatprep.subr.bf16.mxu0 0
    %2898 = vmatpush1.bf16.msra.mxu0 0
    %2899 = vmatprep.subr.bf16.mxu0 0
    %2900 = vmatpush1.bf16.msra.mxu0 0
    %2901 = vmatprep.subr.bf16.mxu0 0
    %2902 = vmatpush1.bf16.msra.mxu0 0
    %2903 = vmatprep.subr.bf16.mxu0 0
    %2904 = vmatpush1.bf16.msra.mxu0 0
    %2905 = vmatprep.subr.bf16.mxu0 0
    %2906 = vmatpush1.bf16.msra.mxu0 0
    %2907 = vmatprep.subr.bf16.mxu0 0
    %2908 = vmatpush1.bf16.msra.mxu0 0
    %2909 = vmatprep.subr.bf16.mxu0 0
    %2910 = vmatpush1.bf16.msra.mxu0 0
    %2911 = vmatprep.mubr.bf16.mxu0 0
    %2912 = vmatmul.mubr.bf16.gmra.mrb[0].mxu0 %v2868
    %v2913 = vpop.f32.mrb[0].mxu0
    %v2914 = vadd.f32 %v2853, %v2913
    %v2915 = vpop.f32.mrb[0].mxu0
    %v2916 = vpop.f32.mrb[0].mxu0
    %v2917 = vadd.f32 %v2853, %v2916
    %v2918 = vpop.f32.mrb[0].mxu0
    %2919 = vmatprep.mubr.bf16.mxu0 0
    %2920 = vmatmul.mubr.bf16.gmra.mrb[0].mxu0 %v2871
    %v2921 = vpop.f32.mrb[0].mxu0
    %v2922 = vadd.f32 %v2853, %v2921
    %v2923 = vpop.f32.mrb[0].mxu0
    %v2924 = vpop.f32.mrb[0].mxu0
    %v2925 = vadd.f32 %v2853, %v2924
    %v2926 = vpop.f32.mrb[0].mxu0
    %2927 = vmatprep.mubr.bf16.mxu0 0
    %2928 = vmatmul.mubr.bf16.gmra.mrb[0].mxu0 %v2874
    %v2929 = vpop.f32.mrb[0].mxu0
    %v2930 = vadd.f32 %v2853, %v2929
    %v2931 = vpop.f32.mrb[0].mxu0
    %v2932 = vpop.f32.mrb[0].mxu0
    %v2933 = vadd.f32 %v2853, %v2932
    %v2934 = vpop.f32.mrb[0].mxu0
    %2935 = vmatprep.mubr.bf16.mxu0 0
    %2936 = vmatmul.mubr.bf16.gmra.mrb[0].mxu0 %v2877
    %v2937 = vpop.f32.mrb[0].mxu0
    %v2938 = vadd.f32 %v2853, %v2937
    %v2939 = vpop.f32.mrb[0].mxu0
    %v2940 = vpop.f32.mrb[0].mxu0
    %v2941 = vadd.f32 %v2853, %v2940
    %v2942 = vpop.f32.mrb[0].mxu0
    %2943 = vdwg.mxu0
    %v2944 = vxor.u32 %v2914, 2147483648
    %v2945 = vxor.u32 %v2917, 2147483648
    %v2946 = vxor.u32 %v2922, 2147483648
    %v2947 = vxor.u32 %v2925, 2147483648
    %v2948 = vxor.u32 %v2930, 2147483648
    %v2949 = vxor.u32 %v2933, 2147483648
    %v2950 = vxor.u32 %v2938, 2147483648
    %v2951 = vxor.u32 %v2941, 2147483648
    %v2952 = vmul.f32 %v2944, 1.442695
    %v2953 = vpow.pop %v2952
    %v2954 = vmul.f32 %v2945, 1.442695
    %v2955 = vpow.pop %v2954
    %v2956 = vmul.f32 %v2946, 1.442695
    %v2957 = vpow.pop %v2956
    %v2958 = vmul.f32 %v2947, 1.442695
    %v2959 = vpow.pop %v2958
    %v2960 = vmul.f32 %v2948, 1.442695
    %v2961 = vpow.pop %v2960
    %v2962 = vmul.f32 %v2949, 1.442695
    %v2963 = vpow.pop %v2962
    %v2964 = vmul.f32 %v2950, 1.442695
    %v2965 = vpow.pop %v2964
    %v2966 = vmul.f32 %v2951, 1.442695
    %v2967 = vpow.pop %v2966
    %v2968 = vadd.f32 %v2953, 1.0
    %v2969 = vadd.f32 %v2955, 1.0
    %v2970 = vadd.f32 %v2957, 1.0
    %v2971 = vadd.f32 %v2959, 1.0
    %v2972 = vadd.f32 %v2961, 1.0
    %v2973 = vadd.f32 %v2963, 1.0
    %v2974 = vadd.f32 %v2965, 1.0
    %v2975 = vadd.f32 %v2967, 1.0
    %v2976 = vrcp.pop %v2968
    %v2977 = vmul.f32 1.0, %v2976
    %v2978 = vrcp.pop %v2969
    %v2979 = vmul.f32 1.0, %v2978
    %v2980 = vrcp.pop %v2970
    %v2981 = vmul.f32 1.0, %v2980
    %v2982 = vrcp.pop %v2971
    %v2983 = vmul.f32 1.0, %v2982
    %v2984 = vrcp.pop %v2972
    %v2985 = vmul.f32 1.0, %v2984
    %v2986 = vrcp.pop %v2973
    %v2987 = vmul.f32 1.0, %v2986
    %v2988 = vrcp.pop %v2974
    %v2989 = vmul.f32 1.0, %v2988
    %v2990 = vrcp.pop %v2975
    %v2991 = vmul.f32 1.0, %v2990
    %v2992 = vmul.f32 %v2914, %v2977
    %v2993 = vmul.f32 %v2917, %v2979
    %v2994 = vmul.f32 %v2922, %v2981
    %v2995 = vmul.f32 %v2925, %v2983
    %v2996 = vmul.f32 %v2930, %v2985
    %v2997 = vmul.f32 %v2933, %v2987
    %v2998 = vmul.f32 %v2938, %v2989
    %v2999 = vmul.f32 %v2941, %v2991
    %v3000 = vpack.c.bf16 %v2993, %v2992
    %v3001 = vpack.c.bf16 %v2995, %v2994
    %v3002 = vpack.c.bf16 %v2997, %v2996
    %v3003 = vpack.c.bf16 %v2999, %v2998
    %v3004 = vld [vmem:[%s14] sm:$0xf]
    %v3005 = vld [vmem:[%s14 + $0x4] sm:$0xf]
    %v3006 = vld [vmem:[%s14 + $0x8] sm:$0xf]
    %v3007 = vld [vmem:[%s14 + $0xc] sm:$0xf]
    %v3008 = vld [vmem:[#allocation10] sm:$0x1]
    %v3010 = vlaneseq
    %v3011 = vshrl.u32 %v3010, 7
    %v3012 = vsub.s32 0, %v3011
    %v3013 = vrot.slane %v3008, %v3012
    %v3019 = vunpack.c.l.b16 %v3004
    %v3020 = vunpack.c.l.b16 %v3005
    %v3021 = vunpack.c.l.b16 %v3006
    %v3022 = vunpack.c.l.b16 %v3007
    %v3023 = vpack.c.b16 %v3020, %v3019
    %v3024 = vpack.c.b16 %v3022, %v3021
    %v3028 = vsel %vm180, %v3000, 0
    %v3031 = vsel %vm180, %v3001, 0
    %v3034 = vsel %vm180, %v3002, 0
    %v3037 = vsel %vm180, %v3003, 0
    %3039 = vmatprep.subr.bf16.mxu0 0
    %3040 = vmatpush1.bf16.msra.mxu0 %v3023
    %3041 = vmatprep.subr.bf16.mxu0 0
    %3042 = vmatpush1.bf16.msra.mxu0 %v3024
    %3043 = vmatprep.subr.bf16.mxu0 0
    %3044 = vmatpush1.bf16.msra.mxu0 0
    %3045 = vmatprep.subr.bf16.mxu0 0
    %3046 = vmatpush1.bf16.msra.mxu0 0
    %3047 = vmatprep.subr.bf16.mxu0 0
    %3048 = vmatpush1.bf16.msra.mxu0 0
    %3049 = vmatprep.subr.bf16.mxu0 0
    %3050 = vmatpush1.bf16.msra.mxu0 0
    %3051 = vmatprep.subr.bf16.mxu0 0
    %3052 = vmatpush1.bf16.msra.mxu0 0
    %3053 = vmatprep.subr.bf16.mxu0 0
    %3054 = vmatpush1.bf16.msra.mxu0 0
    %3055 = vmatprep.subr.bf16.mxu0 0
    %3056 = vmatpush1.bf16.msra.mxu0 0
    %3057 = vmatprep.subr.bf16.mxu0 0
    %3058 = vmatpush1.bf16.msra.mxu0 0
    %3059 = vmatprep.subr.bf16.mxu0 0
    %3060 = vmatpush1.bf16.msra.mxu0 0
    %3061 = vmatprep.subr.bf16.mxu0 0
    %3062 = vmatpush1.bf16.msra.mxu0 0
    %3063 = vmatprep.subr.bf16.mxu0 0
    %3064 = vmatpush1.bf16.msra.mxu0 0
    %3065 = vmatprep.subr.bf16.mxu0 0
    %3066 = vmatpush1.bf16.msra.mxu0 0
    %3067 = vmatprep.subr.bf16.mxu0 0
    %3068 = vmatpush1.bf16.msra.mxu0 0
    %3069 = vmatprep.subr.bf16.mxu0 0
    %3070 = vmatpush1.bf16.msra.mxu0 0
    %3071 = vmatprep.mubr.bf16.mxu0 0
    %3072 = vmatmul.mubr.bf16.gmra.mrb[0].mxu0 %v3028
    %v3073 = vpop.f32.mrb[0].mxu0
    %v3074 = vadd.f32 %v3013, %v3073
    %v3075 = vpop.f32.mrb[0].mxu0
    %v3076 = vpop.f32.mrb[0].mxu0
    %v3077 = vadd.f32 %v3013, %v3076
    %v3078 = vpop.f32.mrb[0].mxu0
    %3079 = vmatprep.mubr.bf16.mxu0 0
    %3080 = vmatmul.mubr.bf16.gmra.mrb[0].mxu0 %v3031
    %v3081 = vpop.f32.mrb[0].mxu0
    %v3082 = vadd.f32 %v3013, %v3081
    %v3083 = vpop.f32.mrb[0].mxu0
    %v3084 = vpop.f32.mrb[0].mxu0
    %v3085 = vadd.f32 %v3013, %v3084
    %v3086 = vpop.f32.mrb[0].mxu0
    %3087 = vmatprep.mubr.bf16.mxu0 0
    %3088 = vmatmul.mubr.bf16.gmra.mrb[0].mxu0 %v3034
    %v3089 = vpop.f32.mrb[0].mxu0
    %v3090 = vadd.f32 %v3013, %v3089
    %v3091 = vpop.f32.mrb[0].mxu0
    %v3092 = vpop.f32.mrb[0].mxu0
    %v3093 = vadd.f32 %v3013, %v3092
    %v3094 = vpop.f32.mrb[0].mxu0
    %3095 = vmatprep.mubr.bf16.mxu0 0
    %3096 = vmatmul.mubr.bf16.gmra.mrb[0].mxu0 %v3037
    %v3097 = vpop.f32.mrb[0].mxu0
    %v3098 = vadd.f32 %v3013, %v3097
    %v3099 = vpop.f32.mrb[0].mxu0
    %v3100 = vpop.f32.mrb[0].mxu0
    %v3101 = vadd.f32 %v3013, %v3100
    %v3102 = vpop.f32.mrb[0].mxu0
    %3103 = vdwg.mxu0
    %v3104 = vlaneseq
    %v3105 = vand.u32 %v3104, 127
    %vm3106 = vcmp.lt.s32.totalorder %v3105, 64
    %v3107 = vsel %vm3106, %v3074, -1e+30
    %v3108 = vsel %vm3106, %v3077, -1e+30
    %v3109 = vsel %vm3106, %v3082, -1e+30
    %v3110 = vsel %vm3106, %v3085, -1e+30
    %v3111 = vsel %vm3106, %v3090, -1e+30
    %v3112 = vsel %vm3106, %v3093, -1e+30
    %v3113 = vsel %vm3106, %v3098, -1e+30
    %v3114 = vsel %vm3106, %v3101, -1e+30
    %3115 = vmax.xlane.f32.xlu0 %v3107
    %v3116 = vpop.xlane.xlu0 %3115
    %3117 = vmax.xlane.f32.xlu0 %v3108
    %v3118 = vpop.xlane.xlu0 %3117
    %3119 = vmax.xlane.f32.xlu0 %v3109
    %v3120 = vpop.xlane.xlu0 %3119
    %3121 = vmax.xlane.f32.xlu0 %v3110
    %v3122 = vpop.xlane.xlu0 %3121
    %3123 = vmax.xlane.f32.xlu0 %v3111
    %v3124 = vpop.xlane.xlu0 %3123
    %3125 = vmax.xlane.f32.xlu0 %v3112
    %v3126 = vpop.xlane.xlu0 %3125
    %3127 = vmax.xlane.f32.xlu0 %v3113
    %v3128 = vpop.xlane.xlu0 %3127
    %3129 = vmax.xlane.f32.xlu0 %v3114
    %v3130 = vpop.xlane.xlu0 %3129
    %v3131 = vsub.f32 %v3107, %v3116
    %v3132 = vsub.f32 %v3108, %v3118
    %v3133 = vsub.f32 %v3109, %v3120
    %v3134 = vsub.f32 %v3110, %v3122
    %v3135 = vsub.f32 %v3111, %v3124
    %v3136 = vsub.f32 %v3112, %v3126
    %v3137 = vsub.f32 %v3113, %v3128
    %v3138 = vsub.f32 %v3114, %v3130
    %v3139 = vmul.f32 %v3131, 1.442695
    %v3140 = vpow.pop %v3139
    %v3141 = vmul.f32 %v3132, 1.442695
    %v3142 = vpow.pop %v3141
    %v3143 = vmul.f32 %v3133, 1.442695
    %v3144 = vpow.pop %v3143
    %v3145 = vmul.f32 %v3134, 1.442695
    %v3146 = vpow.pop %v3145
    %v3147 = vmul.f32 %v3135, 1.442695
    %v3148 = vpow.pop %v3147
    %v3149 = vmul.f32 %v3136, 1.442695
    %v3150 = vpow.pop %v3149
    %v3151 = vmul.f32 %v3137, 1.442695
    %v3152 = vpow.pop %v3151
    %v3153 = vmul.f32 %v3138, 1.442695
    %v3154 = vpow.pop %v3153
    %3155 = vadd.xlane.f32.xlu0 %v3140
    %v3156 = vpop.xlane.xlu0 %3155
    %3157 = vadd.xlane.f32.xlu0 %v3142
    %v3158 = vpop.xlane.xlu0 %3157
    %3159 = vadd.xlane.f32.xlu0 %v3144
    %v3160 = vpop.xlane.xlu0 %3159
    %3161 = vadd.xlane.f32.xlu0 %v3146
    %v3162 = vpop.xlane.xlu0 %3161
    %3163 = vadd.xlane.f32.xlu0 %v3148
    %v3164 = vpop.xlane.xlu0 %3163
    %3165 = vadd.xlane.f32.xlu0 %v3150
    %v3166 = vpop.xlane.xlu0 %3165
    %3167 = vadd.xlane.f32.xlu0 %v3152
    %v3168 = vpop.xlane.xlu0 %3167
    %3169 = vadd.xlane.f32.xlu0 %v3154
    %v3170 = vpop.xlane.xlu0 %3169
    %v3171 = vrcp.pop %v3156
    %v3172 = vmul.f32 %v3140, %v3171
    %v3173 = vrcp.pop %v3158
    %v3174 = vmul.f32 %v3142, %v3173
    %v3175 = vrcp.pop %v3160
    %v3176 = vmul.f32 %v3144, %v3175
    %v3177 = vrcp.pop %v3162
    %v3178 = vmul.f32 %v3146, %v3177
    %v3179 = vrcp.pop %v3164
    %v3180 = vmul.f32 %v3148, %v3179
    %v3181 = vrcp.pop %v3166
    %v3182 = vmul.f32 %v3150, %v3181
    %v3183 = vrcp.pop %v3168
    %v3184 = vmul.f32 %v3152, %v3183
    %v3185 = vrcp.pop %v3170
    %v3186 = vmul.f32 %v3154, %v3185
    %3187 = vst [vmem:[%s16] sm:$0xff] %v3172
    %3188 = vst [vmem:[%s16 + $0x8] sm:$0xff] %v3174
    %3189 = vst [vmem:[%s16 + $0x10] sm:$0xff] %v3176
    %3190 = vst [vmem:[%s16 + $0x18] sm:$0xff] %v3178
    %3191 = vst [vmem:[%s16 + $0x20] sm:$0xff] %v3180
    %3192 = vst [vmem:[%s16 + $0x28] sm:$0xff] %v3182
    %3193 = vst [vmem:[%s16 + $0x30] sm:$0xff] %v3184
    %3194 = vst [vmem:[%s16 + $0x38] sm:$0xff] %v3186
    // Predicated region
    $region90: #{rnn_forward.1} parent=1 // pred_check
      _
    $region91: #{rnn_forward.1} parent=1 // pred_check_branch
      %3196 = sbr.rel (0) target = $region93
    $region92: #{rnn_forward.1} parent=1 // pred_region
      _
    $region93: #{rnn_forward.1} parent=1 // pred_fallthru
      _
    // Predicated region
    $region94: #{rnn_forward.1} parent=1 // pred_check
      _
    $region95: #{rnn_forward.1} parent=1 // pred_check_branch
      %3198 = sbr.rel (0) target = $region97
    $region96: #{rnn_forward.1} parent=1 // pred_region
      _
    $region97: #{rnn_forward.1} parent=1 // pred_fallthru
      _
    %3199 = vsyncpa [#allocation3], 1
    %3200 = vsyncpa [#allocation5], 1
    %3201 = vsyncpa [#allocation8], 1
    %3202 = vsyncpa [#allocation11], 1

</llo_original>
